<compile_context>
chip_gen: v5e
topology: v5e:2x2
jax: 0.10.0
libtpu: 0.0.40
codegen_flags: <defaults>
</compile_context>

<pallas_src>
import jax
import jax.numpy as jnp
from jax.experimental import pallas as pl
from jax.experimental.pallas import tpu as pltpu

# Problem sizes (from the PyTorch module).
IN_FEATURES = 28 * 28          # 784
HIDDEN = 512
OUT_FEATURES = 10

# TPU-friendly padded / tiling constants.
OUT_PAD = 128                  # lane-dense final layer / unmasked lane stores
TB_MAX = 512                   # max batch-tile rows (amortizes per-step overhead)


def mlp_kernel(x_ref, w1_ref, b1_ref, w2_ref, b2_ref, w3_ref, b3_ref, o_ref):
    """One (tb, 784) raw-f32 batch tile through the full 3-layer MLP.

    Weights/biases have constant index maps so they stay resident in VMEM
    across grid steps; only the x tile and output tile stream.
    bf16 matmul inputs (cast on the VPU, hidden under the MXU), f32 accumulation.
    """
    x = x_ref[...].astype(jnp.bfloat16)                     # fused input cast
    # Layer 1: (tb, 784) @ (784, 512) + b1, ReLU
    h1 = jnp.dot(x, w1_ref[...], preferred_element_type=jnp.float32)
    h1 = jnp.maximum(h1 + b1_ref[...], 0.0)
    # Layer 2: (tb, 512) @ (512, 512) + b2, ReLU
    h2 = jnp.dot(h1.astype(jnp.bfloat16), w2_ref[...],
                 preferred_element_type=jnp.float32)
    h2 = jnp.maximum(h2 + b2_ref[...], 0.0)
    # Layer 3: (tb, 512) @ (512, 128) + b3 -> padded, lane-dense logits (bf16 store)
    logits = jnp.dot(h2.astype(jnp.bfloat16), w3_ref[...],
                     preferred_element_type=jnp.float32)
    o_ref[...] = (logits + b3_ref[...]).astype(o_ref.dtype)


def prepare_params(params):
    """One-time (model-load) weight padding + bf16 cast.  Call OUTSIDE the jitted forward."""
    w1, b1, w2, b2, w3, b3 = params
    # Zero-pad final layer N (10 -> 128); zero columns are inert and sliced off later.
    w3p = jnp.zeros((HIDDEN, OUT_PAD), jnp.float32).at[:, :OUT_FEATURES].set(w3)
    b3p = jnp.zeros((1, OUT_PAD), jnp.float32).at[:, :OUT_FEATURES].set(b3)
    # bf16 matmul operands; biases stay f32 (added after the f32-accumulated dot).
    return (w1.astype(jnp.bfloat16), b1,
            w2.astype(jnp.bfloat16), b2,
            w3p.astype(jnp.bfloat16), b3p)


def _pick_batch_tile(batch):
    """Adaptive batch tile (static, derived from the traced shape).

    * rounded up to 128 rows (MXU-friendly, satisfies the sublane rule),
    * >= 2 grid steps whenever the batch allows it (lets v7x's two TCs split),
    * capped at TB_MAX so VMEM stays bounded on every chip.
    """
    half = -(-batch // 2)              # cdiv(batch, 2)
    tb = -(-half // 128) * 128         # round up to a multiple of 128
    return max(128, min(TB_MAX, tb))


@jax.jit
def mlp_forward(x_nchw, prepared_params):
    """x_nchw: (B, 1, 28, 28) float32 -> logits (B, 10) float32."""
    w1, b1, w2, b2, w3, b3 = prepared_params

    batch = x_nchw.shape[0]
    x_flat = x_nchw.reshape(batch, IN_FEATURES)      # nn.Flatten(); raw f32, unpadded

    tb = _pick_batch_tile(batch)
    grid = (pl.cdiv(batch, tb),)                     # ragged last tile is fine:
                                                     # no batch reduction, extra rows masked/sliced

    resident = lambda shape: pl.BlockSpec(shape, lambda i: (0, 0))  # stays in VMEM

    out_pad = pl.pallas_call(
        mlp_kernel,
        out_shape=jax.ShapeDtypeStruct((batch, OUT_PAD), jnp.bfloat16),
        grid=grid,
        in_specs=[
            # Full 784-wide last dim => exempt from the 128-lane divisibility rule.
            pl.BlockSpec((tb, IN_FEATURES), lambda i: (i, 0)),   # batch tile streams
            resident(w1.shape),
            resident(b1.shape),
            resident(w2.shape),
            resident(b2.shape),
            resident(w3.shape),
            resident(b3.shape),
        ],
        out_specs=pl.BlockSpec((tb, OUT_PAD), lambda i: (i, 0)),
        compiler_params=pltpu.CompilerParams(
            # Batch tiles are independent: shard across both TensorCores on v7x.
            dimension_semantics=("parallel",),
        ),
    )(x_flat, w1, b1, w2, b2, w3, b3)

    return out_pad[:, :OUT_FEATURES].astype(jnp.float32)


def init_params(key):
    """Deterministic init mimicking nn.Linear's uniform(-1/sqrt(fan_in), +1/sqrt(fan_in))."""
    def linear(key, fan_in, fan_out):
        kw, kb = jax.random.split(key)
        bound = 1.0 / jnp.sqrt(fan_in)
        w = jax.random.uniform(kw, (fan_in, fan_out), jnp.float32, -bound, bound)
        b = jax.random.uniform(kb, (1, fan_out), jnp.float32, -bound, bound)
        return w, b

    k1, k2, k3 = jax.random.split(key, 3)
    w1, b1 = linear(k1, IN_FEATURES, HIDDEN)
    w2, b2 = linear(k2, HIDDEN, HIDDEN)
    w3, b3 = linear(k3, HIDDEN, OUT_FEATURES)
    return (w1, b1, w2, b2, w3, b3)


def reference_forward(x_nchw, params):
    """Pure-JAX f32 reference for sanity checking."""
    w1, b1, w2, b2, w3, b3 = params
    x = x_nchw.reshape(x_nchw.shape[0], -1)
    h1 = jnp.maximum(x @ w1 + b1, 0.0)
    h2 = jnp.maximum(h1 @ w2 + b2, 0.0)
    return h2 @ w3 + b3


if __name__ == "__main__":
    key = jax.random.PRNGKey(0)
    kx, kp = jax.random.split(key)

    B = 2
    x = jax.random.normal(kx, (B, 1, 28, 28), jnp.float32)  # NCHW, like MNIST
    params = init_params(kp)

    # Weight padding/cast happens ONCE here (model load), not per forward call.
    prepared = prepare_params(params)
    prepared = jax.tree_util.tree_map(jax.block_until_ready, prepared)

    logits = mlp_forward(x, prepared)
    jax.block_until_ready(logits)

    ref = reference_forward(x, params)
    assert logits.shape == (B, OUT_FEATURES), logits.shape
    # bf16 matmul inputs / bf16 logit store (f32 accumulate) -> loose tolerance
    # vs the f32 reference; intentional divergence from f32-exact PyTorch logits.
    assert jnp.allclose(logits, ref, atol=5e-2, rtol=5e-2), "mismatch vs reference"

    print("KERNEL_OK")
</pallas_src>

<mosaic_0001>
module attributes {stable_mosaic.version = 11 : i64} {
  func.func @mlp_kernel(%arg0: i32, %arg1: memref<128x784xf32, #tpu.memory_space<vmem>>, %arg2: memref<784x512xbf16, #tpu.memory_space<vmem>>, %arg3: memref<1x512xf32, #tpu.memory_space<vmem>>, %arg4: memref<512x512xbf16, #tpu.memory_space<vmem>>, %arg5: memref<1x512xf32, #tpu.memory_space<vmem>>, %arg6: memref<512x128xbf16, #tpu.memory_space<vmem>>, %arg7: memref<1x128xf32, #tpu.memory_space<vmem>>, %arg8: memref<128x128xbf16, #tpu.memory_space<vmem>>) attributes {dimension_semantics = [#tpu.dimension_semantics<parallel>], iteration_bounds = array<i64: 1>, scalar_prefetch = 0 : i64, scratch_operands = 0 : i64, tpu.core_type = #tpu.core_type<tc>, window_params = [{transform_indices = @transform_0, window_bounds = array<i64: 128, 784>}, {pipeline_mode = #tpu.pipeline_mode<synchronous>, transform_indices = @transform_1, window_bounds = array<i64: 784, 512>}, {pipeline_mode = #tpu.pipeline_mode<synchronous>, transform_indices = @transform_2, window_bounds = array<i64: 1, 512>}, {pipeline_mode = #tpu.pipeline_mode<synchronous>, transform_indices = @transform_3, window_bounds = array<i64: 512, 512>}, {pipeline_mode = #tpu.pipeline_mode<synchronous>, transform_indices = @transform_4, window_bounds = array<i64: 1, 512>}, {pipeline_mode = #tpu.pipeline_mode<synchronous>, transform_indices = @transform_5, window_bounds = array<i64: 512, 128>}, {pipeline_mode = #tpu.pipeline_mode<synchronous>, transform_indices = @transform_6, window_bounds = array<i64: 1, 128>}, {transform_indices = @transform_7, window_bounds = array<i64: 128, 128>}]} {
    %c0 = arith.constant 0 : index
    %c0_0 = arith.constant 0 : index
    %0 = vector.load %arg1[%c0, %c0_0] : memref<128x784xf32, #tpu.memory_space<vmem>>, vector<128x784xf32>
    %1 = arith.truncf %0 : vector<128x784xf32> to vector<128x784xbf16>
    %c0_1 = arith.constant 0 : index
    %c0_2 = arith.constant 0 : index
    %2 = vector.load %arg2[%c0_1, %c0_2] : memref<784x512xbf16, #tpu.memory_space<vmem>>, vector<784x512xbf16>
    %cst = arith.constant dense<0.000000e+00> : vector<128x512xf32>
    %3 = tpu.matmul %1, %2, %cst {dimension_numbers = #tpu.dot_dimension_numbers<[1], [0], [0], [1], [0, 0, 1, 1], [], []>} : vector<128x784xbf16>, vector<784x512xbf16>, vector<128x512xf32> -> vector<128x512xf32>
    %c0_3 = arith.constant 0 : index
    %c0_4 = arith.constant 0 : index
    %4 = vector.load %arg3[%c0_3, %c0_4] : memref<1x512xf32, #tpu.memory_space<vmem>>, vector<1x512xf32>
    %5 = vector.broadcast %4 : vector<1x512xf32> to vector<128x512xf32>
    %6 = arith.addf %3, %5 : vector<128x512xf32>
    %cst_5 = arith.constant 0.000000e+00 : f32
    %7 = vector.broadcast %cst_5 : f32 to vector<128x512xf32>
    %8 = arith.maximumf %6, %7 : vector<128x512xf32>
    %9 = arith.truncf %8 : vector<128x512xf32> to vector<128x512xbf16>
    %c0_6 = arith.constant 0 : index
    %c0_7 = arith.constant 0 : index
    %10 = vector.load %arg4[%c0_6, %c0_7] : memref<512x512xbf16, #tpu.memory_space<vmem>>, vector<512x512xbf16>
    %cst_8 = arith.constant dense<0.000000e+00> : vector<128x512xf32>
    %11 = tpu.matmul %9, %10, %cst_8 {dimension_numbers = #tpu.dot_dimension_numbers<[1], [0], [0], [1], [0, 0, 1, 1], [], []>} : vector<128x512xbf16>, vector<512x512xbf16>, vector<128x512xf32> -> vector<128x512xf32>
    %c0_9 = arith.constant 0 : index
    %c0_10 = arith.constant 0 : index
    %12 = vector.load %arg5[%c0_9, %c0_10] : memref<1x512xf32, #tpu.memory_space<vmem>>, vector<1x512xf32>
    %13 = vector.broadcast %12 : vector<1x512xf32> to vector<128x512xf32>
    %14 = arith.addf %11, %13 : vector<128x512xf32>
    %cst_11 = arith.constant 0.000000e+00 : f32
    %15 = vector.broadcast %cst_11 : f32 to vector<128x512xf32>
    %16 = arith.maximumf %14, %15 : vector<128x512xf32>
    %17 = arith.truncf %16 : vector<128x512xf32> to vector<128x512xbf16>
    %c0_12 = arith.constant 0 : index
    %c0_13 = arith.constant 0 : index
    %18 = vector.load %arg6[%c0_12, %c0_13] : memref<512x128xbf16, #tpu.memory_space<vmem>>, vector<512x128xbf16>
    %cst_14 = arith.constant dense<0.000000e+00> : vector<128x128xf32>
    %19 = tpu.matmul %17, %18, %cst_14 {dimension_numbers = #tpu.dot_dimension_numbers<[1], [0], [0], [1], [0, 0, 1, 1], [], []>} : vector<128x512xbf16>, vector<512x128xbf16>, vector<128x128xf32> -> vector<128x128xf32>
    %c0_15 = arith.constant 0 : index
    %c0_16 = arith.constant 0 : index
    %20 = vector.load %arg7[%c0_15, %c0_16] : memref<1x128xf32, #tpu.memory_space<vmem>>, vector<1x128xf32>
    %21 = vector.broadcast %20 : vector<1x128xf32> to vector<128x128xf32>
    %22 = arith.addf %19, %21 : vector<128x128xf32>
    %23 = arith.truncf %22 : vector<128x128xf32> to vector<128x128xbf16>
    %c0_17 = arith.constant 0 : index
    %c0_18 = arith.constant 0 : index
    %24 = vector.load %arg8[%c0_17, %c0_18] : memref<128x128xbf16, #tpu.memory_space<vmem>>, vector<128x128xbf16>
    tpu.vector_store %arg8[%c0_17, %c0_18], %23 {strides = array<i32>} : memref<128x128xbf16, #tpu.memory_space<vmem>>, vector<128x128xbf16>,
    return
  }
  func.func @transform_0(%arg0: i32) -> (i32, i32) {
    %c0_i32 = arith.constant 0 : i32
    %c0_i32_0 = arith.constant 0 : i32
    return %arg0, %c0_i32 : i32, i32
  }
  func.func @transform_1(%arg0: i32) -> (i32, i32) {
    %c0_i32 = arith.constant 0 : i32
    %c0_i32_0 = arith.constant 0 : i32
    %c0_i32_1 = arith.constant 0 : i32
    return %c0_i32, %c0_i32_0 : i32, i32
  }
  func.func @transform_2(%arg0: i32) -> (i32, i32) {
    %c0_i32 = arith.constant 0 : i32
    %c0_i32_0 = arith.constant 0 : i32
    %c0_i32_1 = arith.constant 0 : i32
    return %c0_i32, %c0_i32_0 : i32, i32
  }
  func.func @transform_3(%arg0: i32) -> (i32, i32) {
    %c0_i32 = arith.constant 0 : i32
    %c0_i32_0 = arith.constant 0 : i32
    %c0_i32_1 = arith.constant 0 : i32
    return %c0_i32, %c0_i32_0 : i32, i32
  }
  func.func @transform_4(%arg0: i32) -> (i32, i32) {
    %c0_i32 = arith.constant 0 : i32
    %c0_i32_0 = arith.constant 0 : i32
    %c0_i32_1 = arith.constant 0 : i32
    return %c0_i32, %c0_i32_0 : i32, i32
  }
  func.func @transform_5(%arg0: i32) -> (i32, i32) {
    %c0_i32 = arith.constant 0 : i32
    %c0_i32_0 = arith.constant 0 : i32
    %c0_i32_1 = arith.constant 0 : i32
    return %c0_i32, %c0_i32_0 : i32, i32
  }
  func.func @transform_6(%arg0: i32) -> (i32, i32) {
    %c0_i32 = arith.constant 0 : i32
    %c0_i32_0 = arith.constant 0 : i32
    %c0_i32_1 = arith.constant 0 : i32
    return %c0_i32, %c0_i32_0 : i32, i32
  }
  func.func @transform_7(%arg0: i32) -> (i32, i32) {
    %c0_i32 = arith.constant 0 : i32
    %c0_i32_0 = arith.constant 0 : i32
    return %arg0, %c0_i32 : i32, i32
  }
}

</mosaic_0001>

<llo_original>
// kernel: mlp_forward.1
$region0: #{mlp_forward.1}
  #allocation0 [shape = 'u32[]', space=smem, size = 0x4, offset = 0x4, fixed_abs, tag = 'smem constant byte address 0x4 - core index']
  #allocation1 [shape = 'u32[72,128]{1,0:T(1,128)}', space=vmem, size = 0x9000, scoped, tag = 'internal scratch']
  %s0 = inlined_call_operand.vmem [shape: f32[2,784], index: 0, kind: input, shape index: {}]
  %s1 = inlined_call_operand.hbm [shape: bf16[784,512], index: 1, kind: input, shape index: {}]
  %s2 = inlined_call_operand.vmem [shape: f32[1,512], index: 2, kind: input, shape index: {}]
  %s3 = inlined_call_operand.hbm [shape: bf16[512,512], index: 3, kind: input, shape index: {}]
  %s4 = inlined_call_operand.vmem [shape: f32[1,512], index: 4, kind: input, shape index: {}]
  %s5 = inlined_call_operand.hbm [shape: bf16[512,128], index: 5, kind: input, shape index: {}]
  %s6 = inlined_call_operand.vmem [shape: f32[1,128], index: 6, kind: input, shape index: {}]
  %s7 = inlined_call_operand.vmem [shape: bf16[2,128], index: 7, kind: output, shape index: {}]
  %s8 = sld [smem:[#allocation0]]
  $region80: #{mlp_forward.1} parent=0
    _
  %s10 = ssub.s32 1, %s8
  %s11 = scalar_select 0, %s10, %s8
  $region1: #{mlp_forward.1} parent=0
    #allocation2 [shape = 'u8[802816]{0}', space=vmem, size = 0xc4000, scoped, tag = 'input window, operand 1, single buffered']
    #allocation3 [shape = 's32[1]{0}', space=sflag, size = 0x4, scoped, tag = 'scoped memory for mlp_forward.1']
    #allocation4 [shape = 'u8[524288]{0}', space=vmem, size = 0x80000, scoped, tag = 'input window, operand 3, single buffered']
    #allocation5 [shape = 's32[1]{0}', space=sflag, size = 0x4, scoped, tag = 'scoped memory for mlp_forward.1']
    #allocation6 [shape = 'u8[131072]{0}', space=vmem, size = 0x20000, scoped, tag = 'input window, operand 5, single buffered']
    #allocation7 [shape = 'u8[32768]{0}', space=vmem, size = 0x8000, scoped, tag = 'output window, operand 0, single buffered']
    %12 = vsyncpa [#allocation3], 0
    %13 = vsyncpa [#allocation5], 0
    // Predicated region
    $region2: #{mlp_forward.1} parent=1 // pred_check
      _
    $region3: #{mlp_forward.1} parent=1 // pred_check_branch
      %15 = sbr.rel (0) target = $region5
    $region4: #{mlp_forward.1} parent=1 // pred_region
      _
    $region5: #{mlp_forward.1} parent=1 // pred_fallthru
      _
    // Predicated region
    $region6: #{mlp_forward.1} parent=1 // pred_check
      _
    $region7: #{mlp_forward.1} parent=1 // pred_check_branch
      %17 = sbr.rel (0) target = $region9
    $region8: #{mlp_forward.1} parent=1 // pred_region
      %19 = vsyncadd [#allocation3], 0
      %s20 = sshll.u32 %s1, 4
      %s21 = int_to_ptr.hbm [resolvable:$true] %s20
      %s22 = sshll.u32 [#allocation2], 4
      %s23 = int_to_ptr.vmem [resolvable:$true] %s22
      %28 = dma.hbm_to_vmem [thread:$0]  %s21, 25088, %s23, [#allocation3], 256, 256, 16
    $region9: #{mlp_forward.1} parent=1 // pred_fallthru
      _
    // Predicated region
    $region10: #{mlp_forward.1} parent=1 // pred_check
      _
    $region11: #{mlp_forward.1} parent=1 // pred_check_branch
      %30 = sbr.rel (0) target = $region13
    $region12: #{mlp_forward.1} parent=1 // pred_region
      _
    $region13: #{mlp_forward.1} parent=1 // pred_fallthru
      _
    // Predicated region
    $region14: #{mlp_forward.1} parent=1 // pred_check
      _
    $region15: #{mlp_forward.1} parent=1 // pred_check_branch
      %32 = sbr.rel (0) target = $region17
    $region16: #{mlp_forward.1} parent=1 // pred_region
      %34 = vsyncadd [#allocation5], 0
      %s35 = sshll.u32 %s3, 4
      %s36 = int_to_ptr.hbm [resolvable:$true] %s35
      %s37 = sshll.u32 [#allocation4], 4
      %s38 = int_to_ptr.vmem [resolvable:$true] %s37
      %43 = dma.hbm_to_vmem [thread:$0]  %s36, 16384, %s38, [#allocation5], 256, 256, 16
    $region17: #{mlp_forward.1} parent=1 // pred_fallthru
      _
    // Predicated region
    $region18: #{mlp_forward.1} parent=1 // pred_check
      _
    $region19: #{mlp_forward.1} parent=1 // pred_check_branch
      %45 = sbr.rel (0) target = $region21
    $region20: #{mlp_forward.1} parent=1 // pred_region
      _
    $region21: #{mlp_forward.1} parent=1 // pred_fallthru
      _
    // Predicated region
    $region22: #{mlp_forward.1} parent=1 // pred_check
      _
    $region23: #{mlp_forward.1} parent=1 // pred_check_branch
      %47 = sbr.rel (0) target = $region25
    $region24: #{mlp_forward.1} parent=1 // pred_region
      %49 = vsyncadd [#allocation5], 0
      %s50 = sshll.u32 %s5, 4
      %s51 = int_to_ptr.hbm [resolvable:$true] %s50
      %s52 = sshll.u32 [#allocation6], 4
      %s53 = int_to_ptr.vmem [resolvable:$true] %s52
      %58 = dma.hbm_to_vmem [thread:$0]  %s51, 4096, %s53, [#allocation5], 64, 64, 4
    $region25: #{mlp_forward.1} parent=1 // pred_fallthru
      _
    // Predicated region
    $region26: #{mlp_forward.1} parent=1 // pred_check
      _
    $region27: #{mlp_forward.1} parent=1 // pred_check_branch
      %60 = sbr.rel (0) target = $region29
    $region28: #{mlp_forward.1} parent=1 // pred_region
      _
    $region29: #{mlp_forward.1} parent=1 // pred_fallthru
      _
    // Predicated region
    $region30: #{mlp_forward.1} parent=1 // pred_check
      _
    $region31: #{mlp_forward.1} parent=1 // pred_check_branch
      %62 = sbr.rel (0) target = $region33
    $region32: #{mlp_forward.1} parent=1 // pred_region
      %64 = dma.done [#allocation3], 25088
    $region33: #{mlp_forward.1} parent=1 // pred_fallthru
      _
    // Predicated region
    $region34: #{mlp_forward.1} parent=1 // pred_check
      _
    $region35: #{mlp_forward.1} parent=1 // pred_check_branch
      %66 = sbr.rel (0) target = $region37
    $region36: #{mlp_forward.1} parent=1 // pred_region
      %68 = dma.done [#allocation5], 16384
    $region37: #{mlp_forward.1} parent=1 // pred_fallthru
      _
    // Predicated region
    $region38: #{mlp_forward.1} parent=1 // pred_check
      _
    $region39: #{mlp_forward.1} parent=1 // pred_check_branch
      %70 = sbr.rel (0) target = $region41
    $region40: #{mlp_forward.1} parent=1 // pred_region
      %72 = dma.done [#allocation5], 4096
    $region41: #{mlp_forward.1} parent=1 // pred_fallthru
      _
    %v74 = vld [vmem:[%s0] sm:$0xff]
    %v75 = vld [vmem:[%s0 + $0x8] sm:$0x3f]
    %v76 = vld [vmem:[%s0 + $0xe] sm:$0xff]
    %v77 = vld [vmem:[%s0 + $0x16] sm:$0x3f]
    %v78 = vld [vmem:[%s0 + $0x1c] sm:$0xff]
    %v79 = vld [vmem:[%s0 + $0x24] sm:$0x3f]
    %v80 = vld [vmem:[%s0 + $0x2a] sm:$0xff]
    %v81 = vld [vmem:[%s0 + $0x32] sm:$0x3f]
    %v82 = vld [vmem:[%s0 + $0x38] sm:$0xff]
    %v83 = vld [vmem:[%s0 + $0x40] sm:$0x3f]
    %v84 = vld [vmem:[%s0 + $0x46] sm:$0xff]
    %v85 = vld [vmem:[%s0 + $0x4e] sm:$0x3f]
    %v86 = vld [vmem:[%s0 + $0x54] sm:$0xff]
    %v87 = vld [vmem:[%s0 + $0x5c] sm:$0x3f]
    %v88 = vld [vmem:[%s0 + $0x62] sm:$0xff]
    %v89 = vld [vmem:[%s0 + $0x6a] sm:$0x3f]
    %v90 = vld [vmem:[%s0 + $0x70] sm:$0xff]
    %v91 = vld [vmem:[%s0 + $0x78] sm:$0x3f]
    %v92 = vld [vmem:[%s0 + $0x7e] sm:$0xff]
    %v93 = vld [vmem:[%s0 + $0x86] sm:$0x3f]
    %v94 = vld [vmem:[%s0 + $0x8c] sm:$0xff]
    %v95 = vld [vmem:[%s0 + $0x94] sm:$0x3f]
    %v96 = vld [vmem:[%s0 + $0x9a] sm:$0xff]
    %v97 = vld [vmem:[%s0 + $0xa2] sm:$0x3f]
    %v98 = vld [vmem:[%s0 + $0xa8] sm:$0xff]
    %v99 = vld [vmem:[%s0 + $0xb0] sm:$0x3f]
    %v100 = vld [vmem:[%s0 + $0xb6] sm:$0xff]
    %v101 = vld [vmem:[%s0 + $0xbe] sm:$0x3f]
    %v102 = vld [vmem:[%s0 + $0xc4] sm:$0xff]
    %v103 = vld [vmem:[%s0 + $0xcc] sm:$0x3f]
    %v104 = vld [vmem:[%s0 + $0xd2] sm:$0xff]
    %v105 = vld [vmem:[%s0 + $0xda] sm:$0x3f]
    %v106 = vld [vmem:[%s0 + $0xe0] sm:$0xff]
    %v107 = vld [vmem:[%s0 + $0xe8] sm:$0x3f]
    %v108 = vld [vmem:[%s0 + $0xee] sm:$0xff]
    %v109 = vld [vmem:[%s0 + $0xf6] sm:$0x3f]
    %v110 = vld [vmem:[%s0 + $0xfc] sm:$0xff]
    %v111 = vld [vmem:[%s0 + $0x104] sm:$0x3f]
    %v112 = vld [vmem:[%s0 + $0x10a] sm:$0xff]
    %v113 = vld [vmem:[%s0 + $0x112] sm:$0x3f]
    %v114 = vld [vmem:[%s0 + $0x118] sm:$0xff]
    %v115 = vld [vmem:[%s0 + $0x120] sm:$0x3f]
    %v116 = vld [vmem:[%s0 + $0x126] sm:$0xff]
    %v117 = vld [vmem:[%s0 + $0x12e] sm:$0x3f]
    %v118 = vld [vmem:[%s0 + $0x134] sm:$0xff]
    %v119 = vld [vmem:[%s0 + $0x13c] sm:$0x3f]
    %v120 = vld [vmem:[%s0 + $0x142] sm:$0xff]
    %v121 = vld [vmem:[%s0 + $0x14a] sm:$0x3f]
    %v122 = vld [vmem:[%s0 + $0x150] sm:$0xff]
    %v123 = vld [vmem:[%s0 + $0x158] sm:$0x3f]
    %v124 = vld [vmem:[%s0 + $0x15e] sm:$0xff]
    %v125 = vld [vmem:[%s0 + $0x166] sm:$0x3f]
    %v126 = vld [vmem:[%s0 + $0x16c] sm:$0xff]
    %v127 = vld [vmem:[%s0 + $0x174] sm:$0x3f]
    %v128 = vld [vmem:[%s0 + $0x17a] sm:$0xff]
    %v129 = vld [vmem:[%s0 + $0x182] sm:$0x3f]
    %v130 = vld [vmem:[%s0 + $0x188] sm:$0xff]
    %v131 = vld [vmem:[%s0 + $0x190] sm:$0x3f]
    %v132 = vld [vmem:[%s0 + $0x196] sm:$0xff]
    %v133 = vld [vmem:[%s0 + $0x19e] sm:$0x3f]
    %v134 = vld [vmem:[%s0 + $0x1a4] sm:$0xff]
    %v135 = vld [vmem:[%s0 + $0x1ac] sm:$0x3f]
    %v136 = vld [vmem:[%s0 + $0x1b2] sm:$0xff]
    %v137 = vld [vmem:[%s0 + $0x1ba] sm:$0x3f]
    %v138 = vld [vmem:[%s0 + $0x1c0] sm:$0xff]
    %v139 = vld [vmem:[%s0 + $0x1c8] sm:$0x3f]
    %v140 = vld [vmem:[%s0 + $0x1ce] sm:$0xff]
    %v141 = vld [vmem:[%s0 + $0x1d6] sm:$0x3f]
    %v142 = vld [vmem:[%s0 + $0x1dc] sm:$0xff]
    %v143 = vld [vmem:[%s0 + $0x1e4] sm:$0x3f]
    %v144 = vld [vmem:[%s0 + $0x1ea] sm:$0xff]
    %v145 = vld [vmem:[%s0 + $0x1f2] sm:$0x3f]
    %v146 = vld [vmem:[%s0 + $0x1f8] sm:$0xff]
    %v147 = vld [vmem:[%s0 + $0x200] sm:$0x3f]
    %v148 = vld [vmem:[%s0 + $0x206] sm:$0xff]
    %v149 = vld [vmem:[%s0 + $0x20e] sm:$0x3f]
    %v150 = vld [vmem:[%s0 + $0x214] sm:$0xff]
    %v151 = vld [vmem:[%s0 + $0x21c] sm:$0x3f]
    %v152 = vld [vmem:[%s0 + $0x222] sm:$0xff]
    %v153 = vld [vmem:[%s0 + $0x22a] sm:$0x3f]
    %v154 = vld [vmem:[%s0 + $0x230] sm:$0xff]
    %v155 = vld [vmem:[%s0 + $0x238] sm:$0x3f]
    %v156 = vld [vmem:[%s0 + $0x23e] sm:$0xff]
    %v157 = vld [vmem:[%s0 + $0x246] sm:$0x3f]
    %v158 = vld [vmem:[%s0 + $0x24c] sm:$0xff]
    %v159 = vld [vmem:[%s0 + $0x254] sm:$0x3f]
    %v160 = vld [vmem:[%s0 + $0x25a] sm:$0xff]
    %v161 = vld [vmem:[%s0 + $0x262] sm:$0x3f]
    %v162 = vld [vmem:[%s0 + $0x268] sm:$0xff]
    %v163 = vld [vmem:[%s0 + $0x270] sm:$0x3f]
    %v164 = vld [vmem:[%s0 + $0x276] sm:$0xff]
    %v165 = vld [vmem:[%s0 + $0x27e] sm:$0x3f]
    %v166 = vld [vmem:[%s0 + $0x284] sm:$0xff]
    %v167 = vld [vmem:[%s0 + $0x28c] sm:$0x3f]
    %v168 = vld [vmem:[%s0 + $0x292] sm:$0xff]
    %v169 = vld [vmem:[%s0 + $0x29a] sm:$0x3f]
    %v170 = vld [vmem:[%s0 + $0x2a0] sm:$0xff]
    %v171 = vld [vmem:[%s0 + $0x2a8] sm:$0x3f]
    %v172 = vld [vmem:[%s0 + $0x2ae] sm:$0xff]
    %v173 = vld [vmem:[%s0 + $0x2b6] sm:$0x3f]
    %v174 = vld [vmem:[%s0 + $0x2bc] sm:$0xff]
    %v175 = vld [vmem:[%s0 + $0x2c4] sm:$0x3f]
    %v176 = vld [vmem:[%s0 + $0x2ca] sm:$0xff]
    %v177 = vld [vmem:[%s0 + $0x2d2] sm:$0x3f]
    %v178 = vld [vmem:[%s0 + $0x2d8] sm:$0xff]
    %v179 = vld [vmem:[%s0 + $0x2e0] sm:$0x3f]
    %v180 = vld [vmem:[%s0 + $0x2e6] sm:$0xff]
    %v181 = vld [vmem:[%s0 + $0x2ee] sm:$0x3f]
    %v182 = vld [vmem:[%s0 + $0x2f4] sm:$0xff]
    %v183 = vld [vmem:[%s0 + $0x2fc] sm:$0x3f]
    %v184 = vld [vmem:[%s0 + $0x302] sm:$0xff]
    %v185 = vld [vmem:[%s0 + $0x30a] sm:$0x3f]
    %v186 = vld [vmem:[%s0 + $0x310] sm:$0xff]
    %v187 = vld [vmem:[%s0 + $0x318] sm:$0x3f]
    %v188 = vld [vmem:[%s0 + $0x31e] sm:$0xff]
    %v189 = vld [vmem:[%s0 + $0x326] sm:$0x3f]
    %v190 = vld [vmem:[%s0 + $0x32c] sm:$0xff]
    %v191 = vld [vmem:[%s0 + $0x334] sm:$0x3f]
    %v192 = vld [vmem:[%s0 + $0x33a] sm:$0xff]
    %v193 = vld [vmem:[%s0 + $0x342] sm:$0x3f]
    %v194 = vld [vmem:[%s0 + $0x348] sm:$0xff]
    %v195 = vld [vmem:[%s0 + $0x350] sm:$0x3f]
    %v196 = vld [vmem:[%s0 + $0x356] sm:$0xff]
    %v197 = vld [vmem:[%s0 + $0x35e] sm:$0x3f]
    %v198 = vld [vmem:[%s0 + $0x364] sm:$0xff]
    %v199 = vld [vmem:[%s0 + $0x36c] sm:$0x3f]
    %v200 = vld [vmem:[%s0 + $0x372] sm:$0xff]
    %v201 = vld [vmem:[%s0 + $0x37a] sm:$0x3f]
    %330 = vst [vmem:[#allocation1] ss:$4 sm:$0xff] %v74
    %s331 = scalar_lea.vmem [#allocation1], 1
    %332 = vst [vmem:[%s331] ss:$4 sm:$0xff] %v76
    %s333 = scalar_lea.vmem [#allocation1], 2
    %334 = vst [vmem:[%s333] ss:$4 sm:$0xff] %v78
    %s335 = scalar_lea.vmem [#allocation1], 3
    %336 = vst [vmem:[%s335] ss:$4 sm:$0xff] %v80
    %s337 = scalar_lea.vmem [#allocation1], 32
    %338 = vst [vmem:[%s337] ss:$4 sm:$0xff] %v75
    %s339 = scalar_lea.vmem [#allocation1], 33
    %340 = vst [vmem:[%s339] ss:$4 sm:$0xff] %v77
    %s341 = scalar_lea.vmem [#allocation1], 34
    %342 = vst [vmem:[%s341] ss:$4 sm:$0xff] %v79
    %s343 = scalar_lea.vmem [#allocation1], 35
    %344 = vst [vmem:[%s343] ss:$4 sm:$0xff] %v81
    %v345 = vld.sshfl [vmem:[#allocation1] sm:$0xff pattern:$0x73625140]
    %v346 = vld.sshfl [vmem:[#allocation1 + $0x8] sm:$0xff pattern:$0x73625140]
    %v347 = vld.sshfl [vmem:[#allocation1 + $0x10] sm:$0xff pattern:$0x73625140]
    %v348 = vld.sshfl [vmem:[#allocation1 + $0x18] sm:$0xff pattern:$0x73625140]
    %v349 = vld.sshfl [vmem:[#allocation1 + $0x20] sm:$0xff pattern:$0x73625140]
    %v350 = vld.sshfl [vmem:[#allocation1 + $0x28] sm:$0xff pattern:$0x73625140]
    %v351 = vld.sshfl [vmem:[#allocation1 + $0x30] sm:$0xff pattern:$0x73625140]
    %352 = vst [vmem:[#allocation1] ss:$4 sm:$0xff] %v82
    %353 = vst [vmem:[%s331] ss:$4 sm:$0xff] %v84
    %354 = vst [vmem:[%s333] ss:$4 sm:$0xff] %v86
    %355 = vst [vmem:[%s335] ss:$4 sm:$0xff] %v88
    %356 = vst [vmem:[%s337] ss:$4 sm:$0xff] %v83
    %357 = vst [vmem:[%s339] ss:$4 sm:$0xff] %v85
    %358 = vst [vmem:[%s341] ss:$4 sm:$0xff] %v87
    %359 = vst [vmem:[%s343] ss:$4 sm:$0xff] %v89
    %v360 = vld.sshfl [vmem:[#allocation1] sm:$0xff pattern:$0x73625140]
    %v361 = vld.sshfl [vmem:[#allocation1 + $0x8] sm:$0xff pattern:$0x73625140]
    %v362 = vld.sshfl [vmem:[#allocation1 + $0x10] sm:$0xff pattern:$0x73625140]
    %v363 = vld.sshfl [vmem:[#allocation1 + $0x18] sm:$0xff pattern:$0x73625140]
    %v364 = vld.sshfl [vmem:[#allocation1 + $0x20] sm:$0xff pattern:$0x73625140]
    %v365 = vld.sshfl [vmem:[#allocation1 + $0x28] sm:$0xff pattern:$0x73625140]
    %v366 = vld.sshfl [vmem:[#allocation1 + $0x30] sm:$0xff pattern:$0x73625140]
    %367 = vst [vmem:[#allocation1] ss:$4 sm:$0xff] %v90
    %368 = vst [vmem:[%s331] ss:$4 sm:$0xff] %v92
    %369 = vst [vmem:[%s333] ss:$4 sm:$0xff] %v94
    %370 = vst [vmem:[%s335] ss:$4 sm:$0xff] %v96
    %371 = vst [vmem:[%s337] ss:$4 sm:$0xff] %v91
    %372 = vst [vmem:[%s339] ss:$4 sm:$0xff] %v93
    %373 = vst [vmem:[%s341] ss:$4 sm:$0xff] %v95
    %374 = vst [vmem:[%s343] ss:$4 sm:$0xff] %v97
    %v375 = vld.sshfl [vmem:[#allocation1] sm:$0xff pattern:$0x73625140]
    %v376 = vld.sshfl [vmem:[#allocation1 + $0x8] sm:$0xff pattern:$0x73625140]
    %v377 = vld.sshfl [vmem:[#allocation1 + $0x10] sm:$0xff pattern:$0x73625140]
    %v378 = vld.sshfl [vmem:[#allocation1 + $0x18] sm:$0xff pattern:$0x73625140]
    %v379 = vld.sshfl [vmem:[#allocation1 + $0x20] sm:$0xff pattern:$0x73625140]
    %v380 = vld.sshfl [vmem:[#allocation1 + $0x28] sm:$0xff pattern:$0x73625140]
    %v381 = vld.sshfl [vmem:[#allocation1 + $0x30] sm:$0xff pattern:$0x73625140]
    %382 = vst [vmem:[#allocation1] ss:$4 sm:$0xff] %v98
    %383 = vst [vmem:[%s331] ss:$4 sm:$0xff] %v100
    %384 = vst [vmem:[%s333] ss:$4 sm:$0xff] %v102
    %385 = vst [vmem:[%s335] ss:$4 sm:$0xff] %v104
    %386 = vst [vmem:[%s337] ss:$4 sm:$0xff] %v99
    %387 = vst [vmem:[%s339] ss:$4 sm:$0xff] %v101
    %388 = vst [vmem:[%s341] ss:$4 sm:$0xff] %v103
    %389 = vst [vmem:[%s343] ss:$4 sm:$0xff] %v105
    %v390 = vld.sshfl [vmem:[#allocation1] sm:$0xff pattern:$0x73625140]
    %v391 = vld.sshfl [vmem:[#allocation1 + $0x8] sm:$0xff pattern:$0x73625140]
    %v392 = vld.sshfl [vmem:[#allocation1 + $0x10] sm:$0xff pattern:$0x73625140]
    %v393 = vld.sshfl [vmem:[#allocation1 + $0x18] sm:$0xff pattern:$0x73625140]
    %v394 = vld.sshfl [vmem:[#allocation1 + $0x20] sm:$0xff pattern:$0x73625140]
    %v395 = vld.sshfl [vmem:[#allocation1 + $0x28] sm:$0xff pattern:$0x73625140]
    %v396 = vld.sshfl [vmem:[#allocation1 + $0x30] sm:$0xff pattern:$0x73625140]
    %397 = vst [vmem:[#allocation1] ss:$4 sm:$0xff] %v106
    %398 = vst [vmem:[%s331] ss:$4 sm:$0xff] %v108
    %399 = vst [vmem:[%s333] ss:$4 sm:$0xff] %v110
    %400 = vst [vmem:[%s335] ss:$4 sm:$0xff] %v112
    %401 = vst [vmem:[%s337] ss:$4 sm:$0xff] %v107
    %402 = vst [vmem:[%s339] ss:$4 sm:$0xff] %v109
    %403 = vst [vmem:[%s341] ss:$4 sm:$0xff] %v111
    %404 = vst [vmem:[%s343] ss:$4 sm:$0xff] %v113
    %v405 = vld.sshfl [vmem:[#allocation1] sm:$0xff pattern:$0x73625140]
    %v406 = vld.sshfl [vmem:[#allocation1 + $0x8] sm:$0xff pattern:$0x73625140]
    %v407 = vld.sshfl [vmem:[#allocation1 + $0x10] sm:$0xff pattern:$0x73625140]
    %v408 = vld.sshfl [vmem:[#allocation1 + $0x18] sm:$0xff pattern:$0x73625140]
    %v409 = vld.sshfl [vmem:[#allocation1 + $0x20] sm:$0xff pattern:$0x73625140]
    %v410 = vld.sshfl [vmem:[#allocation1 + $0x28] sm:$0xff pattern:$0x73625140]
    %v411 = vld.sshfl [vmem:[#allocation1 + $0x30] sm:$0xff pattern:$0x73625140]
    %412 = vst [vmem:[#allocation1] ss:$4 sm:$0xff] %v114
    %413 = vst [vmem:[%s331] ss:$4 sm:$0xff] %v116
    %414 = vst [vmem:[%s333] ss:$4 sm:$0xff] %v118
    %415 = vst [vmem:[%s335] ss:$4 sm:$0xff] %v120
    %416 = vst [vmem:[%s337] ss:$4 sm:$0xff] %v115
    %417 = vst [vmem:[%s339] ss:$4 sm:$0xff] %v117
    %418 = vst [vmem:[%s341] ss:$4 sm:$0xff] %v119
    %419 = vst [vmem:[%s343] ss:$4 sm:$0xff] %v121
    %v420 = vld.sshfl [vmem:[#allocation1] sm:$0xff pattern:$0x73625140]
    %v421 = vld.sshfl [vmem:[#allocation1 + $0x8] sm:$0xff pattern:$0x73625140]
    %v422 = vld.sshfl [vmem:[#allocation1 + $0x10] sm:$0xff pattern:$0x73625140]
    %v423 = vld.sshfl [vmem:[#allocation1 + $0x18] sm:$0xff pattern:$0x73625140]
    %v424 = vld.sshfl [vmem:[#allocation1 + $0x20] sm:$0xff pattern:$0x73625140]
    %v425 = vld.sshfl [vmem:[#allocation1 + $0x28] sm:$0xff pattern:$0x73625140]
    %v426 = vld.sshfl [vmem:[#allocation1 + $0x30] sm:$0xff pattern:$0x73625140]
    %427 = vst [vmem:[#allocation1] ss:$4 sm:$0xff] %v122
    %428 = vst [vmem:[%s331] ss:$4 sm:$0xff] %v124
    %429 = vst [vmem:[%s333] ss:$4 sm:$0xff] %v126
    %430 = vst [vmem:[%s335] ss:$4 sm:$0xff] %v128
    %431 = vst [vmem:[%s337] ss:$4 sm:$0xff] %v123
    %432 = vst [vmem:[%s339] ss:$4 sm:$0xff] %v125
    %433 = vst [vmem:[%s341] ss:$4 sm:$0xff] %v127
    %434 = vst [vmem:[%s343] ss:$4 sm:$0xff] %v129
    %v435 = vld.sshfl [vmem:[#allocation1] sm:$0xff pattern:$0x73625140]
    %v436 = vld.sshfl [vmem:[#allocation1 + $0x8] sm:$0xff pattern:$0x73625140]
    %v437 = vld.sshfl [vmem:[#allocation1 + $0x10] sm:$0xff pattern:$0x73625140]
    %v438 = vld.sshfl [vmem:[#allocation1 + $0x18] sm:$0xff pattern:$0x73625140]
    %v439 = vld.sshfl [vmem:[#allocation1 + $0x20] sm:$0xff pattern:$0x73625140]
    %v440 = vld.sshfl [vmem:[#allocation1 + $0x28] sm:$0xff pattern:$0x73625140]
    %v441 = vld.sshfl [vmem:[#allocation1 + $0x30] sm:$0xff pattern:$0x73625140]
    %442 = vst [vmem:[#allocation1] ss:$4 sm:$0xff] %v130
    %443 = vst [vmem:[%s331] ss:$4 sm:$0xff] %v132
    %444 = vst [vmem:[%s333] ss:$4 sm:$0xff] %v134
    %445 = vst [vmem:[%s335] ss:$4 sm:$0xff] %v136
    %446 = vst [vmem:[%s337] ss:$4 sm:$0xff] %v131
    %447 = vst [vmem:[%s339] ss:$4 sm:$0xff] %v133
    %448 = vst [vmem:[%s341] ss:$4 sm:$0xff] %v135
    %449 = vst [vmem:[%s343] ss:$4 sm:$0xff] %v137
    %v450 = vld.sshfl [vmem:[#allocation1] sm:$0xff pattern:$0x73625140]
    %v451 = vld.sshfl [vmem:[#allocation1 + $0x8] sm:$0xff pattern:$0x73625140]
    %v452 = vld.sshfl [vmem:[#allocation1 + $0x10] sm:$0xff pattern:$0x73625140]
    %v453 = vld.sshfl [vmem:[#allocation1 + $0x18] sm:$0xff pattern:$0x73625140]
    %v454 = vld.sshfl [vmem:[#allocation1 + $0x20] sm:$0xff pattern:$0x73625140]
    %v455 = vld.sshfl [vmem:[#allocation1 + $0x28] sm:$0xff pattern:$0x73625140]
    %v456 = vld.sshfl [vmem:[#allocation1 + $0x30] sm:$0xff pattern:$0x73625140]
    %457 = vst [vmem:[#allocation1] ss:$4 sm:$0xff] %v138
    %458 = vst [vmem:[%s331] ss:$4 sm:$0xff] %v140
    %459 = vst [vmem:[%s333] ss:$4 sm:$0xff] %v142
    %460 = vst [vmem:[%s335] ss:$4 sm:$0xff] %v144
    %461 = vst [vmem:[%s337] ss:$4 sm:$0xff] %v139
    %462 = vst [vmem:[%s339] ss:$4 sm:$0xff] %v141
    %463 = vst [vmem:[%s341] ss:$4 sm:$0xff] %v143
    %464 = vst [vmem:[%s343] ss:$4 sm:$0xff] %v145
    %v465 = vld.sshfl [vmem:[#allocation1] sm:$0xff pattern:$0x73625140]
    %v466 = vld.sshfl [vmem:[#allocation1 + $0x8] sm:$0xff pattern:$0x73625140]
    %v467 = vld.sshfl [vmem:[#allocation1 + $0x10] sm:$0xff pattern:$0x73625140]
    %v468 = vld.sshfl [vmem:[#allocation1 + $0x18] sm:$0xff pattern:$0x73625140]
    %v469 = vld.sshfl [vmem:[#allocation1 + $0x20] sm:$0xff pattern:$0x73625140]
    %v470 = vld.sshfl [vmem:[#allocation1 + $0x28] sm:$0xff pattern:$0x73625140]
    %v471 = vld.sshfl [vmem:[#allocation1 + $0x30] sm:$0xff pattern:$0x73625140]
    %472 = vst [vmem:[#allocation1] ss:$4 sm:$0xff] %v146
    %473 = vst [vmem:[%s331] ss:$4 sm:$0xff] %v148
    %474 = vst [vmem:[%s333] ss:$4 sm:$0xff] %v150
    %475 = vst [vmem:[%s335] ss:$4 sm:$0xff] %v152
    %476 = vst [vmem:[%s337] ss:$4 sm:$0xff] %v147
    %477 = vst [vmem:[%s339] ss:$4 sm:$0xff] %v149
    %478 = vst [vmem:[%s341] ss:$4 sm:$0xff] %v151
    %479 = vst [vmem:[%s343] ss:$4 sm:$0xff] %v153
    %v480 = vld.sshfl [vmem:[#allocation1] sm:$0xff pattern:$0x73625140]
    %v481 = vld.sshfl [vmem:[#allocation1 + $0x8] sm:$0xff pattern:$0x73625140]
    %v482 = vld.sshfl [vmem:[#allocation1 + $0x10] sm:$0xff pattern:$0x73625140]
    %v483 = vld.sshfl [vmem:[#allocation1 + $0x18] sm:$0xff pattern:$0x73625140]
    %v484 = vld.sshfl [vmem:[#allocation1 + $0x20] sm:$0xff pattern:$0x73625140]
    %v485 = vld.sshfl [vmem:[#allocation1 + $0x28] sm:$0xff pattern:$0x73625140]
    %v486 = vld.sshfl [vmem:[#allocation1 + $0x30] sm:$0xff pattern:$0x73625140]
    %487 = vst [vmem:[#allocation1] ss:$4 sm:$0xff] %v154
    %488 = vst [vmem:[%s331] ss:$4 sm:$0xff] %v156
    %489 = vst [vmem:[%s333] ss:$4 sm:$0xff] %v158
    %490 = vst [vmem:[%s335] ss:$4 sm:$0xff] %v160
    %491 = vst [vmem:[%s337] ss:$4 sm:$0xff] %v155
    %492 = vst [vmem:[%s339] ss:$4 sm:$0xff] %v157
    %493 = vst [vmem:[%s341] ss:$4 sm:$0xff] %v159
    %494 = vst [vmem:[%s343] ss:$4 sm:$0xff] %v161
    %v495 = vld.sshfl [vmem:[#allocation1] sm:$0xff pattern:$0x73625140]
    %v496 = vld.sshfl [vmem:[#allocation1 + $0x8] sm:$0xff pattern:$0x73625140]
    %v497 = vld.sshfl [vmem:[#allocation1 + $0x10] sm:$0xff pattern:$0x73625140]
    %v498 = vld.sshfl [vmem:[#allocation1 + $0x18] sm:$0xff pattern:$0x73625140]
    %v499 = vld.sshfl [vmem:[#allocation1 + $0x20] sm:$0xff pattern:$0x73625140]
    %v500 = vld.sshfl [vmem:[#allocation1 + $0x28] sm:$0xff pattern:$0x73625140]
    %v501 = vld.sshfl [vmem:[#allocation1 + $0x30] sm:$0xff pattern:$0x73625140]
    %502 = vst [vmem:[#allocation1] ss:$4 sm:$0xff] %v162
    %503 = vst [vmem:[%s331] ss:$4 sm:$0xff] %v164
    %504 = vst [vmem:[%s333] ss:$4 sm:$0xff] %v166
    %505 = vst [vmem:[%s335] ss:$4 sm:$0xff] %v168
    %506 = vst [vmem:[%s337] ss:$4 sm:$0xff] %v163
    %507 = vst [vmem:[%s339] ss:$4 sm:$0xff] %v165
    %508 = vst [vmem:[%s341] ss:$4 sm:$0xff] %v167
    %509 = vst [vmem:[%s343] ss:$4 sm:$0xff] %v169
    %v510 = vld.sshfl [vmem:[#allocation1] sm:$0xff pattern:$0x73625140]
    %v511 = vld.sshfl [vmem:[#allocation1 + $0x8] sm:$0xff pattern:$0x73625140]
    %v512 = vld.sshfl [vmem:[#allocation1 + $0x10] sm:$0xff pattern:$0x73625140]
    %v513 = vld.sshfl [vmem:[#allocation1 + $0x18] sm:$0xff pattern:$0x73625140]
    %v514 = vld.sshfl [vmem:[#allocation1 + $0x20] sm:$0xff pattern:$0x73625140]
    %v515 = vld.sshfl [vmem:[#allocation1 + $0x28] sm:$0xff pattern:$0x73625140]
    %v516 = vld.sshfl [vmem:[#allocation1 + $0x30] sm:$0xff pattern:$0x73625140]
    %517 = vst [vmem:[#allocation1] ss:$4 sm:$0xff] %v170
    %518 = vst [vmem:[%s331] ss:$4 sm:$0xff] %v172
    %519 = vst [vmem:[%s333] ss:$4 sm:$0xff] %v174
    %520 = vst [vmem:[%s335] ss:$4 sm:$0xff] %v176
    %521 = vst [vmem:[%s337] ss:$4 sm:$0xff] %v171
    %522 = vst [vmem:[%s339] ss:$4 sm:$0xff] %v173
    %523 = vst [vmem:[%s341] ss:$4 sm:$0xff] %v175
    %524 = vst [vmem:[%s343] ss:$4 sm:$0xff] %v177
    %v525 = vld.sshfl [vmem:[#allocation1] sm:$0xff pattern:$0x73625140]
    %v526 = vld.sshfl [vmem:[#allocation1 + $0x8] sm:$0xff pattern:$0x73625140]
    %v527 = vld.sshfl [vmem:[#allocation1 + $0x10] sm:$0xff pattern:$0x73625140]
    %v528 = vld.sshfl [vmem:[#allocation1 + $0x18] sm:$0xff pattern:$0x73625140]
    %v529 = vld.sshfl [vmem:[#allocation1 + $0x20] sm:$0xff pattern:$0x73625140]
    %v530 = vld.sshfl [vmem:[#allocation1 + $0x28] sm:$0xff pattern:$0x73625140]
    %v531 = vld.sshfl [vmem:[#allocation1 + $0x30] sm:$0xff pattern:$0x73625140]
    %532 = vst [vmem:[#allocation1] ss:$4 sm:$0xff] %v178
    %533 = vst [vmem:[%s331] ss:$4 sm:$0xff] %v180
    %534 = vst [vmem:[%s333] ss:$4 sm:$0xff] %v182
    %535 = vst [vmem:[%s335] ss:$4 sm:$0xff] %v184
    %536 = vst [vmem:[%s337] ss:$4 sm:$0xff] %v179
    %537 = vst [vmem:[%s339] ss:$4 sm:$0xff] %v181
    %538 = vst [vmem:[%s341] ss:$4 sm:$0xff] %v183
    %539 = vst [vmem:[%s343] ss:$4 sm:$0xff] %v185
    %v540 = vld.sshfl [vmem:[#allocation1] sm:$0xff pattern:$0x73625140]
    %v541 = vld.sshfl [vmem:[#allocation1 + $0x8] sm:$0xff pattern:$0x73625140]
    %v542 = vld.sshfl [vmem:[#allocation1 + $0x10] sm:$0xff pattern:$0x73625140]
    %v543 = vld.sshfl [vmem:[#allocation1 + $0x18] sm:$0xff pattern:$0x73625140]
    %v544 = vld.sshfl [vmem:[#allocation1 + $0x20] sm:$0xff pattern:$0x73625140]
    %v545 = vld.sshfl [vmem:[#allocation1 + $0x28] sm:$0xff pattern:$0x73625140]
    %v546 = vld.sshfl [vmem:[#allocation1 + $0x30] sm:$0xff pattern:$0x73625140]
    %547 = vst [vmem:[#allocation1] ss:$4 sm:$0xff] %v186
    %548 = vst [vmem:[%s331] ss:$4 sm:$0xff] %v188
    %549 = vst [vmem:[%s333] ss:$4 sm:$0xff] %v190
    %550 = vst [vmem:[%s335] ss:$4 sm:$0xff] %v192
    %551 = vst [vmem:[%s337] ss:$4 sm:$0xff] %v187
    %552 = vst [vmem:[%s339] ss:$4 sm:$0xff] %v189
    %553 = vst [vmem:[%s341] ss:$4 sm:$0xff] %v191
    %554 = vst [vmem:[%s343] ss:$4 sm:$0xff] %v193
    %v555 = vld.sshfl [vmem:[#allocation1] sm:$0xff pattern:$0x73625140]
    %v556 = vld.sshfl [vmem:[#allocation1 + $0x8] sm:$0xff pattern:$0x73625140]
    %v557 = vld.sshfl [vmem:[#allocation1 + $0x10] sm:$0xff pattern:$0x73625140]
    %v558 = vld.sshfl [vmem:[#allocation1 + $0x18] sm:$0xff pattern:$0x73625140]
    %v559 = vld.sshfl [vmem:[#allocation1 + $0x20] sm:$0xff pattern:$0x73625140]
    %v560 = vld.sshfl [vmem:[#allocation1 + $0x28] sm:$0xff pattern:$0x73625140]
    %v561 = vld.sshfl [vmem:[#allocation1 + $0x30] sm:$0xff pattern:$0x73625140]
    %562 = vst [vmem:[#allocation1] ss:$4 sm:$0xff] %v194
    %563 = vst [vmem:[%s331] ss:$4 sm:$0xff] %v196
    %564 = vst [vmem:[%s333] ss:$4 sm:$0xff] %v198
    %565 = vst [vmem:[%s335] ss:$4 sm:$0xff] %v200
    %566 = vst [vmem:[%s337] ss:$4 sm:$0xff] %v195
    %567 = vst [vmem:[%s339] ss:$4 sm:$0xff] %v197
    %568 = vst [vmem:[%s341] ss:$4 sm:$0xff] %v199
    %569 = vst [vmem:[%s343] ss:$4 sm:$0xff] %v201
    %v570 = vld.sshfl [vmem:[#allocation1] sm:$0xff pattern:$0x73625140]
    %v571 = vld.sshfl [vmem:[#allocation1 + $0x8] sm:$0xff pattern:$0x73625140]
    %v572 = vld.sshfl [vmem:[#allocation1 + $0x10] sm:$0xff pattern:$0x73625140]
    %v573 = vld.sshfl [vmem:[#allocation1 + $0x18] sm:$0xff pattern:$0x73625140]
    %v574 = vld.sshfl [vmem:[#allocation1 + $0x20] sm:$0xff pattern:$0x73625140]
    %v575 = vld.sshfl [vmem:[#allocation1 + $0x28] sm:$0xff pattern:$0x73625140]
    %v576 = vld.sshfl [vmem:[#allocation1 + $0x30] sm:$0xff pattern:$0x73625140]
    %v689 = vpack.c.bf16 %v360, %v345
    %v690 = vpack.c.bf16 %v361, %v346
    %v691 = vpack.c.bf16 %v362, %v347
    %v692 = vpack.c.bf16 %v363, %v348
    %v693 = vpack.c.bf16 %v364, %v349
    %v694 = vpack.c.bf16 %v365, %v350
    %v695 = vpack.c.bf16 %v366, %v351
    %v696 = vpack.c.bf16 %v390, %v375
    %v697 = vpack.c.bf16 %v391, %v376
    %v698 = vpack.c.bf16 %v392, %v377
    %v699 = vpack.c.bf16 %v393, %v378
    %v700 = vpack.c.bf16 %v394, %v379
    %v701 = vpack.c.bf16 %v395, %v380
    %v702 = vpack.c.bf16 %v396, %v381
    %v703 = vpack.c.bf16 %v420, %v405
    %v704 = vpack.c.bf16 %v421, %v406
    %v705 = vpack.c.bf16 %v422, %v407
    %v706 = vpack.c.bf16 %v423, %v408
    %v707 = vpack.c.bf16 %v424, %v409
    %v708 = vpack.c.bf16 %v425, %v410
    %v709 = vpack.c.bf16 %v426, %v411
    %v710 = vpack.c.bf16 %v450, %v435
    %v711 = vpack.c.bf16 %v451, %v436
    %v712 = vpack.c.bf16 %v452, %v437
    %v713 = vpack.c.bf16 %v453, %v438
    %v714 = vpack.c.bf16 %v454, %v439
    %v715 = vpack.c.bf16 %v455, %v440
    %v716 = vpack.c.bf16 %v456, %v441
    %v717 = vpack.c.bf16 %v480, %v465
    %v718 = vpack.c.bf16 %v481, %v466
    %v719 = vpack.c.bf16 %v482, %v467
    %v720 = vpack.c.bf16 %v483, %v468
    %v721 = vpack.c.bf16 %v484, %v469
    %v722 = vpack.c.bf16 %v485, %v470
    %v723 = vpack.c.bf16 %v486, %v471
    %v724 = vpack.c.bf16 %v510, %v495
    %v725 = vpack.c.bf16 %v511, %v496
    %v726 = vpack.c.bf16 %v512, %v497
    %v727 = vpack.c.bf16 %v513, %v498
    %v728 = vpack.c.bf16 %v514, %v499
    %v729 = vpack.c.bf16 %v515, %v500
    %v730 = vpack.c.bf16 %v516, %v501
    %v731 = vpack.c.bf16 %v540, %v525
    %v732 = vpack.c.bf16 %v541, %v526
    %v733 = vpack.c.bf16 %v542, %v527
    %v734 = vpack.c.bf16 %v543, %v528
    %v735 = vpack.c.bf16 %v544, %v529
    %v736 = vpack.c.bf16 %v545, %v530
    %v737 = vpack.c.bf16 %v546, %v531
    %v738 = vpack.c.bf16 %v570, %v555
    %v739 = vpack.c.bf16 %v571, %v556
    %v740 = vpack.c.bf16 %v572, %v557
    %v741 = vpack.c.bf16 %v573, %v558
    %v742 = vpack.c.bf16 %v574, %v559
    %v743 = vpack.c.bf16 %v575, %v560
    %v744 = vpack.c.bf16 %v576, %v561
    %v745 = vld [vmem:[#allocation2] sm:$0xff]
    %v746 = vld [vmem:[#allocation2 + $0x8] sm:$0xff]
    %v747 = vld [vmem:[#allocation2 + $0x10] sm:$0xff]
    %v748 = vld [vmem:[#allocation2 + $0x18] sm:$0xff]
    %v749 = vld [vmem:[#allocation2 + $0x20] sm:$0xff]
    %v750 = vld [vmem:[#allocation2 + $0x28] sm:$0xff]
    %v751 = vld [vmem:[#allocation2 + $0x30] sm:$0xff]
    %v752 = vld [vmem:[#allocation2 + $0x38] sm:$0xff]
    %v753 = vld [vmem:[#allocation2 + $0x40] sm:$0xff]
    %v754 = vld [vmem:[#allocation2 + $0x48] sm:$0xff]
    %v755 = vld [vmem:[#allocation2 + $0x50] sm:$0xff]
    %v756 = vld [vmem:[#allocation2 + $0x58] sm:$0xff]
    %v757 = vld [vmem:[#allocation2 + $0x60] sm:$0xff]
    %v758 = vld [vmem:[#allocation2 + $0x68] sm:$0xff]
    %v759 = vld [vmem:[#allocation2 + $0x70] sm:$0xff]
    %v760 = vld [vmem:[#allocation2 + $0x78] sm:$0xff]
    %v761 = vld [vmem:[#allocation2 + $0x80] sm:$0xff]
    %v762 = vld [vmem:[#allocation2 + $0x88] sm:$0xff]
    %v763 = vld [vmem:[#allocation2 + $0x90] sm:$0xff]
    %v764 = vld [vmem:[#allocation2 + $0x98] sm:$0xff]
    %v765 = vld [vmem:[#allocation2 + $0xa0] sm:$0xff]
    %v766 = vld [vmem:[#allocation2 + $0xa8] sm:$0xff]
    %v767 = vld [vmem:[#allocation2 + $0xb0] sm:$0xff]
    %v768 = vld [vmem:[#allocation2 + $0xb8] sm:$0xff]
    %v769 = vld [vmem:[#allocation2 + $0xc0] sm:$0xff]
    %v770 = vld [vmem:[#allocation2 + $0xc8] sm:$0xff]
    %v771 = vld [vmem:[#allocation2 + $0xd0] sm:$0xff]
    %v772 = vld [vmem:[#allocation2 + $0xd8] sm:$0xff]
    %v773 = vld [vmem:[#allocation2 + $0xe0] sm:$0xff]
    %v774 = vld [vmem:[#allocation2 + $0xe8] sm:$0xff]
    %v775 = vld [vmem:[#allocation2 + $0xf0] sm:$0xff]
    %v776 = vld [vmem:[#allocation2 + $0xf8] sm:$0xff]
    %v777 = vld [vmem:[#allocation2 + $0x100] sm:$0xff]
    %v778 = vld [vmem:[#allocation2 + $0x108] sm:$0xff]
    %v779 = vld [vmem:[#allocation2 + $0x110] sm:$0xff]
    %v780 = vld [vmem:[#allocation2 + $0x118] sm:$0xff]
    %v781 = vld [vmem:[#allocation2 + $0x120] sm:$0xff]
    %v782 = vld [vmem:[#allocation2 + $0x128] sm:$0xff]
    %v783 = vld [vmem:[#allocation2 + $0x130] sm:$0xff]
    %v784 = vld [vmem:[#allocation2 + $0x138] sm:$0xff]
    %v785 = vld [vmem:[#allocation2 + $0x140] sm:$0xff]
    %v786 = vld [vmem:[#allocation2 + $0x148] sm:$0xff]
    %v787 = vld [vmem:[#allocation2 + $0x150] sm:$0xff]
    %v788 = vld [vmem:[#allocation2 + $0x158] sm:$0xff]
    %v789 = vld [vmem:[#allocation2 + $0x160] sm:$0xff]
    %v790 = vld [vmem:[#allocation2 + $0x168] sm:$0xff]
    %v791 = vld [vmem:[#allocation2 + $0x170] sm:$0xff]
    %v792 = vld [vmem:[#allocation2 + $0x178] sm:$0xff]
    %v793 = vld [vmem:[#allocation2 + $0x180] sm:$0xff]
    %v794 = vld [vmem:[#allocation2 + $0x188] sm:$0xff]
    %v795 = vld [vmem:[#allocation2 + $0x190] sm:$0xff]
    %v796 = vld [vmem:[#allocation2 + $0x198] sm:$0xff]
    %v797 = vld [vmem:[#allocation2 + $0x1a0] sm:$0xff]
    %v798 = vld [vmem:[#allocation2 + $0x1a8] sm:$0xff]
    %v799 = vld [vmem:[#allocation2 + $0x1b0] sm:$0xff]
    %v800 = vld [vmem:[#allocation2 + $0x1b8] sm:$0xff]
    %v801 = vld [vmem:[#allocation2 + $0x1c0] sm:$0xff]
    %v802 = vld [vmem:[#allocation2 + $0x1c8] sm:$0xff]
    %v803 = vld [vmem:[#allocation2 + $0x1d0] sm:$0xff]
    %v804 = vld [vmem:[#allocation2 + $0x1d8] sm:$0xff]
    %v805 = vld [vmem:[#allocation2 + $0x1e0] sm:$0xff]
    %v806 = vld [vmem:[#allocation2 + $0x1e8] sm:$0xff]
    %v807 = vld [vmem:[#allocation2 + $0x1f0] sm:$0xff]
    %v808 = vld [vmem:[#allocation2 + $0x1f8] sm:$0xff]
    %v809 = vld [vmem:[#allocation2 + $0x200] sm:$0xff]
    %v810 = vld [vmem:[#allocation2 + $0x208] sm:$0xff]
    %v811 = vld [vmem:[#allocation2 + $0x210] sm:$0xff]
    %v812 = vld [vmem:[#allocation2 + $0x218] sm:$0xff]
    %v813 = vld [vmem:[#allocation2 + $0x220] sm:$0xff]
    %v814 = vld [vmem:[#allocation2 + $0x228] sm:$0xff]
    %v815 = vld [vmem:[#allocation2 + $0x230] sm:$0xff]
    %v816 = vld [vmem:[#allocation2 + $0x238] sm:$0xff]
    %v817 = vld [vmem:[#allocation2 + $0x240] sm:$0xff]
    %v818 = vld [vmem:[#allocation2 + $0x248] sm:$0xff]
    %v819 = vld [vmem:[#allocation2 + $0x250] sm:$0xff]
    %v820 = vld [vmem:[#allocation2 + $0x258] sm:$0xff]
    %v821 = vld [vmem:[#allocation2 + $0x260] sm:$0xff]
    %v822 = vld [vmem:[#allocation2 + $0x268] sm:$0xff]
    %v823 = vld [vmem:[#allocation2 + $0x270] sm:$0xff]
    %v824 = vld [vmem:[#allocation2 + $0x278] sm:$0xff]
    %v825 = vld [vmem:[#allocation2 + $0x280] sm:$0xff]
    %v826 = vld [vmem:[#allocation2 + $0x288] sm:$0xff]
    %v827 = vld [vmem:[#allocation2 + $0x290] sm:$0xff]
    %v828 = vld [vmem:[#allocation2 + $0x298] sm:$0xff]
    %v829 = vld [vmem:[#allocation2 + $0x2a0] sm:$0xff]
    %v830 = vld [vmem:[#allocation2 + $0x2a8] sm:$0xff]
    %v831 = vld [vmem:[#allocation2 + $0x2b0] sm:$0xff]
    %v832 = vld [vmem:[#allocation2 + $0x2b8] sm:$0xff]
    %v833 = vld [vmem:[#allocation2 + $0x2c0] sm:$0xff]
    %v834 = vld [vmem:[#allocation2 + $0x2c8] sm:$0xff]
    %v835 = vld [vmem:[#allocation2 + $0x2d0] sm:$0xff]
    %v836 = vld [vmem:[#allocation2 + $0x2d8] sm:$0xff]
    %v837 = vld [vmem:[#allocation2 + $0x2e0] sm:$0xff]
    %v838 = vld [vmem:[#allocation2 + $0x2e8] sm:$0xff]
    %v839 = vld [vmem:[#allocation2 + $0x2f0] sm:$0xff]
    %v840 = vld [vmem:[#allocation2 + $0x2f8] sm:$0xff]
    %v841 = vld [vmem:[#allocation2 + $0x300] sm:$0xff]
    %v842 = vld [vmem:[#allocation2 + $0x308] sm:$0xff]
    %v843 = vld [vmem:[#allocation2 + $0x310] sm:$0xff]
    %v844 = vld [vmem:[#allocation2 + $0x318] sm:$0xff]
    %v845 = vld [vmem:[#allocation2 + $0x320] sm:$0xff]
    %v846 = vld [vmem:[#allocation2 + $0x328] sm:$0xff]
    %v847 = vld [vmem:[#allocation2 + $0x330] sm:$0xff]
    %v848 = vld [vmem:[#allocation2 + $0x338] sm:$0xff]
    %v849 = vld [vmem:[#allocation2 + $0x340] sm:$0xff]
    %v850 = vld [vmem:[#allocation2 + $0x348] sm:$0xff]
    %v851 = vld [vmem:[#allocation2 + $0x350] sm:$0xff]
    %v852 = vld [vmem:[#allocation2 + $0x358] sm:$0xff]
    %v853 = vld [vmem:[#allocation2 + $0x360] sm:$0xff]
    %v854 = vld [vmem:[#allocation2 + $0x368] sm:$0xff]
    %v855 = vld [vmem:[#allocation2 + $0x370] sm:$0xff]
    %v856 = vld [vmem:[#allocation2 + $0x378] sm:$0xff]
    %v857 = vld [vmem:[#allocation2 + $0x380] sm:$0xff]
    %v858 = vld [vmem:[#allocation2 + $0x388] sm:$0xff]
    %v859 = vld [vmem:[#allocation2 + $0x390] sm:$0xff]
    %v860 = vld [vmem:[#allocation2 + $0x398] sm:$0xff]
    %v861 = vld [vmem:[#allocation2 + $0x3a0] sm:$0xff]
    %v862 = vld [vmem:[#allocation2 + $0x3a8] sm:$0xff]
    %v863 = vld [vmem:[#allocation2 + $0x3b0] sm:$0xff]
    %v864 = vld [vmem:[#allocation2 + $0x3b8] sm:$0xff]
    %v865 = vld [vmem:[#allocation2 + $0x3c0] sm:$0xff]
    %v866 = vld [vmem:[#allocation2 + $0x3c8] sm:$0xff]
    %v867 = vld [vmem:[#allocation2 + $0x3d0] sm:$0xff]
    %v868 = vld [vmem:[#allocation2 + $0x3d8] sm:$0xff]
    %v869 = vld [vmem:[#allocation2 + $0x3e0] sm:$0xff]
    %v870 = vld [vmem:[#allocation2 + $0x3e8] sm:$0xff]
    %v871 = vld [vmem:[#allocation2 + $0x3f0] sm:$0xff]
    %v872 = vld [vmem:[#allocation2 + $0x3f8] sm:$0xff]
    %v873 = vld [vmem:[#allocation2 + $0x400] sm:$0xff]
    %v874 = vld [vmem:[#allocation2 + $0x408] sm:$0xff]
    %v875 = vld [vmem:[#allocation2 + $0x410] sm:$0xff]
    %v876 = vld [vmem:[#allocation2 + $0x418] sm:$0xff]
    %v877 = vld [vmem:[#allocation2 + $0x420] sm:$0xff]
    %v878 = vld [vmem:[#allocation2 + $0x428] sm:$0xff]
    %v879 = vld [vmem:[#allocation2 + $0x430] sm:$0xff]
    %v880 = vld [vmem:[#allocation2 + $0x438] sm:$0xff]
    %v881 = vld [vmem:[#allocation2 + $0x440] sm:$0xff]
    %v882 = vld [vmem:[#allocation2 + $0x448] sm:$0xff]
    %v883 = vld [vmem:[#allocation2 + $0x450] sm:$0xff]
    %v884 = vld [vmem:[#allocation2 + $0x458] sm:$0xff]
    %v885 = vld [vmem:[#allocation2 + $0x460] sm:$0xff]
    %v886 = vld [vmem:[#allocation2 + $0x468] sm:$0xff]
    %v887 = vld [vmem:[#allocation2 + $0x470] sm:$0xff]
    %v888 = vld [vmem:[#allocation2 + $0x478] sm:$0xff]
    %v889 = vld [vmem:[#allocation2 + $0x480] sm:$0xff]
    %v890 = vld [vmem:[#allocation2 + $0x488] sm:$0xff]
    %v891 = vld [vmem:[#allocation2 + $0x490] sm:$0xff]
    %v892 = vld [vmem:[#allocation2 + $0x498] sm:$0xff]
    %v893 = vld [vmem:[#allocation2 + $0x4a0] sm:$0xff]
    %v894 = vld [vmem:[#allocation2 + $0x4a8] sm:$0xff]
    %v895 = vld [vmem:[#allocation2 + $0x4b0] sm:$0xff]
    %v896 = vld [vmem:[#allocation2 + $0x4b8] sm:$0xff]
    %v897 = vld [vmem:[#allocation2 + $0x4c0] sm:$0xff]
    %v898 = vld [vmem:[#allocation2 + $0x4c8] sm:$0xff]
    %v899 = vld [vmem:[#allocation2 + $0x4d0] sm:$0xff]
    %v900 = vld [vmem:[#allocation2 + $0x4d8] sm:$0xff]
    %v901 = vld [vmem:[#allocation2 + $0x4e0] sm:$0xff]
    %v902 = vld [vmem:[#allocation2 + $0x4e8] sm:$0xff]
    %v903 = vld [vmem:[#allocation2 + $0x4f0] sm:$0xff]
    %v904 = vld [vmem:[#allocation2 + $0x4f8] sm:$0xff]
    %v905 = vld [vmem:[#allocation2 + $0x500] sm:$0xff]
    %v906 = vld [vmem:[#allocation2 + $0x508] sm:$0xff]
    %v907 = vld [vmem:[#allocation2 + $0x510] sm:$0xff]
    %v908 = vld [vmem:[#allocation2 + $0x518] sm:$0xff]
    %v909 = vld [vmem:[#allocation2 + $0x520] sm:$0xff]
    %v910 = vld [vmem:[#allocation2 + $0x528] sm:$0xff]
    %v911 = vld [vmem:[#allocation2 + $0x530] sm:$0xff]
    %v912 = vld [vmem:[#allocation2 + $0x538] sm:$0xff]
    %v913 = vld [vmem:[#allocation2 + $0x540] sm:$0xff]
    %v914 = vld [vmem:[#allocation2 + $0x548] sm:$0xff]
    %v915 = vld [vmem:[#allocation2 + $0x550] sm:$0xff]
    %v916 = vld [vmem:[#allocation2 + $0x558] sm:$0xff]
    %v917 = vld [vmem:[#allocation2 + $0x560] sm:$0xff]
    %v918 = vld [vmem:[#allocation2 + $0x568] sm:$0xff]
    %v919 = vld [vmem:[#allocation2 + $0x570] sm:$0xff]
    %v920 = vld [vmem:[#allocation2 + $0x578] sm:$0xff]
    %v921 = vld [vmem:[#allocation2 + $0x580] sm:$0xff]
    %v922 = vld [vmem:[#allocation2 + $0x588] sm:$0xff]
    %v923 = vld [vmem:[#allocation2 + $0x590] sm:$0xff]
    %v924 = vld [vmem:[#allocation2 + $0x598] sm:$0xff]
    %v925 = vld [vmem:[#allocation2 + $0x5a0] sm:$0xff]
    %v926 = vld [vmem:[#allocation2 + $0x5a8] sm:$0xff]
    %v927 = vld [vmem:[#allocation2 + $0x5b0] sm:$0xff]
    %v928 = vld [vmem:[#allocation2 + $0x5b8] sm:$0xff]
    %v929 = vld [vmem:[#allocation2 + $0x5c0] sm:$0xff]
    %v930 = vld [vmem:[#allocation2 + $0x5c8] sm:$0xff]
    %v931 = vld [vmem:[#allocation2 + $0x5d0] sm:$0xff]
    %v932 = vld [vmem:[#allocation2 + $0x5d8] sm:$0xff]
    %v933 = vld [vmem:[#allocation2 + $0x5e0] sm:$0xff]
    %v934 = vld [vmem:[#allocation2 + $0x5e8] sm:$0xff]
    %v935 = vld [vmem:[#allocation2 + $0x5f0] sm:$0xff]
    %v936 = vld [vmem:[#allocation2 + $0x5f8] sm:$0xff]
    %v937 = vld [vmem:[#allocation2 + $0x600] sm:$0xff]
    %v938 = vld [vmem:[#allocation2 + $0x608] sm:$0xff]
    %v939 = vld [vmem:[#allocation2 + $0x610] sm:$0xff]
    %v940 = vld [vmem:[#allocation2 + $0x618] sm:$0xff]
    %v941 = vld [vmem:[%s2] sm:$0xf]
    %v943 = vperm.slane %v941, 0
    %v944 = vperm.slane %v941, 1
    %v945 = vperm.slane %v941, 2
    %v946 = vperm.slane %v941, 3
    %v1147 = vunpack.c.l.b16 %v745
    %v1148 = vunpack.c.h.b16 %v745
    %v1149 = vunpack.c.l.b16 %v746
    %v1150 = vunpack.c.h.b16 %v746
    %v1151 = vunpack.c.l.b16 %v747
    %v1152 = vunpack.c.h.b16 %v747
    %v1153 = vunpack.c.l.b16 %v748
    %v1154 = vunpack.c.h.b16 %v748
    %v1155 = vunpack.c.l.b16 %v749
    %v1156 = vunpack.c.h.b16 %v749
    %v1157 = vunpack.c.l.b16 %v750
    %v1158 = vunpack.c.h.b16 %v750
    %v1159 = vunpack.c.l.b16 %v751
    %v1160 = vunpack.c.h.b16 %v751
    %v1161 = vunpack.c.l.b16 %v752
    %v1162 = vunpack.c.h.b16 %v752
    %v1163 = vunpack.c.l.b16 %v753
    %v1164 = vunpack.c.h.b16 %v753
    %v1165 = vunpack.c.l.b16 %v754
    %v1166 = vunpack.c.h.b16 %v754
    %v1167 = vunpack.c.l.b16 %v755
    %v1168 = vunpack.c.h.b16 %v755
    %v1169 = vunpack.c.l.b16 %v756
    %v1170 = vunpack.c.h.b16 %v756
    %v1171 = vunpack.c.l.b16 %v757
    %v1172 = vunpack.c.h.b16 %v757
    %v1173 = vunpack.c.l.b16 %v758
    %v1174 = vunpack.c.h.b16 %v758
    %v1175 = vunpack.c.l.b16 %v759
    %v1176 = vunpack.c.h.b16 %v759
    %v1177 = vunpack.c.l.b16 %v760
    %v1178 = vunpack.c.h.b16 %v760
    %v1179 = vunpack.c.l.b16 %v761
    %v1180 = vunpack.c.h.b16 %v761
    %v1181 = vunpack.c.l.b16 %v762
    %v1182 = vunpack.c.h.b16 %v762
    %v1183 = vunpack.c.l.b16 %v763
    %v1184 = vunpack.c.h.b16 %v763
    %v1185 = vunpack.c.l.b16 %v764
    %v1186 = vunpack.c.h.b16 %v764
    %v1187 = vunpack.c.l.b16 %v765
    %v1188 = vunpack.c.h.b16 %v765
    %v1189 = vunpack.c.l.b16 %v766
    %v1190 = vunpack.c.h.b16 %v766
    %v1191 = vunpack.c.l.b16 %v767
    %v1192 = vunpack.c.h.b16 %v767
    %v1193 = vunpack.c.l.b16 %v768
    %v1194 = vunpack.c.h.b16 %v768
    %v1195 = vunpack.c.l.b16 %v769
    %v1196 = vunpack.c.h.b16 %v769
    %v1197 = vunpack.c.l.b16 %v770
    %v1198 = vunpack.c.h.b16 %v770
    %v1199 = vunpack.c.l.b16 %v771
    %v1200 = vunpack.c.h.b16 %v771
    %v1201 = vunpack.c.l.b16 %v772
    %v1202 = vunpack.c.h.b16 %v772
    %v1203 = vunpack.c.l.b16 %v773
    %v1204 = vunpack.c.h.b16 %v773
    %v1205 = vunpack.c.l.b16 %v774
    %v1206 = vunpack.c.h.b16 %v774
    %v1207 = vunpack.c.l.b16 %v775
    %v1208 = vunpack.c.h.b16 %v775
    %v1209 = vunpack.c.l.b16 %v776
    %v1210 = vunpack.c.h.b16 %v776
    %v1211 = vunpack.c.l.b16 %v777
    %v1212 = vunpack.c.h.b16 %v777
    %v1213 = vunpack.c.l.b16 %v778
    %v1214 = vunpack.c.h.b16 %v778
    %v1215 = vunpack.c.l.b16 %v779
    %v1216 = vunpack.c.h.b16 %v779
    %v1217 = vunpack.c.l.b16 %v780
    %v1218 = vunpack.c.h.b16 %v780
    %v1219 = vunpack.c.l.b16 %v781
    %v1220 = vunpack.c.h.b16 %v781
    %v1221 = vunpack.c.l.b16 %v782
    %v1222 = vunpack.c.h.b16 %v782
    %v1223 = vunpack.c.l.b16 %v783
    %v1224 = vunpack.c.h.b16 %v783
    %v1225 = vunpack.c.l.b16 %v784
    %v1226 = vunpack.c.h.b16 %v784
    %v1227 = vunpack.c.l.b16 %v785
    %v1228 = vunpack.c.h.b16 %v785
    %v1229 = vunpack.c.l.b16 %v786
    %v1230 = vunpack.c.h.b16 %v786
    %v1231 = vunpack.c.l.b16 %v787
    %v1232 = vunpack.c.h.b16 %v787
    %v1233 = vunpack.c.l.b16 %v788
    %v1234 = vunpack.c.h.b16 %v788
    %v1235 = vunpack.c.l.b16 %v789
    %v1236 = vunpack.c.h.b16 %v789
    %v1237 = vunpack.c.l.b16 %v790
    %v1238 = vunpack.c.h.b16 %v790
    %v1239 = vunpack.c.l.b16 %v791
    %v1240 = vunpack.c.h.b16 %v791
    %v1241 = vunpack.c.l.b16 %v792
    %v1242 = vunpack.c.h.b16 %v792
    %v1243 = vunpack.c.l.b16 %v793
    %v1244 = vunpack.c.h.b16 %v793
    %v1245 = vunpack.c.l.b16 %v794
    %v1246 = vunpack.c.h.b16 %v794
    %v1247 = vunpack.c.l.b16 %v795
    %v1248 = vunpack.c.h.b16 %v795
    %v1249 = vunpack.c.l.b16 %v796
    %v1250 = vunpack.c.h.b16 %v796
    %v1251 = vunpack.c.l.b16 %v797
    %v1252 = vunpack.c.h.b16 %v797
    %v1253 = vunpack.c.l.b16 %v798
    %v1254 = vunpack.c.h.b16 %v798
    %v1255 = vunpack.c.l.b16 %v799
    %v1256 = vunpack.c.h.b16 %v799
    %v1257 = vunpack.c.l.b16 %v800
    %v1258 = vunpack.c.h.b16 %v800
    %v1259 = vunpack.c.l.b16 %v801
    %v1260 = vunpack.c.h.b16 %v801
    %v1261 = vunpack.c.l.b16 %v802
    %v1262 = vunpack.c.h.b16 %v802
    %v1263 = vunpack.c.l.b16 %v803
    %v1264 = vunpack.c.h.b16 %v803
    %v1265 = vunpack.c.l.b16 %v804
    %v1266 = vunpack.c.h.b16 %v804
    %v1267 = vunpack.c.l.b16 %v805
    %v1268 = vunpack.c.h.b16 %v805
    %v1269 = vunpack.c.l.b16 %v806
    %v1270 = vunpack.c.h.b16 %v806
    %v1271 = vunpack.c.l.b16 %v807
    %v1272 = vunpack.c.h.b16 %v807
    %v1273 = vunpack.c.l.b16 %v808
    %v1274 = vunpack.c.h.b16 %v808
    %v1275 = vunpack.c.l.b16 %v809
    %v1276 = vunpack.c.h.b16 %v809
    %v1277 = vunpack.c.l.b16 %v810
    %v1278 = vunpack.c.h.b16 %v810
    %v1279 = vunpack.c.l.b16 %v811
    %v1280 = vunpack.c.h.b16 %v811
    %v1281 = vunpack.c.l.b16 %v812
    %v1282 = vunpack.c.h.b16 %v812
    %v1283 = vunpack.c.l.b16 %v813
    %v1284 = vunpack.c.h.b16 %v813
    %v1285 = vunpack.c.l.b16 %v814
    %v1286 = vunpack.c.h.b16 %v814
    %v1287 = vunpack.c.l.b16 %v815
    %v1288 = vunpack.c.h.b16 %v815
    %v1289 = vunpack.c.l.b16 %v816
    %v1290 = vunpack.c.h.b16 %v816
    %v1291 = vunpack.c.l.b16 %v817
    %v1292 = vunpack.c.h.b16 %v817
    %v1293 = vunpack.c.l.b16 %v818
    %v1294 = vunpack.c.h.b16 %v818
    %v1295 = vunpack.c.l.b16 %v819
    %v1296 = vunpack.c.h.b16 %v819
    %v1297 = vunpack.c.l.b16 %v820
    %v1298 = vunpack.c.h.b16 %v820
    %v1299 = vunpack.c.l.b16 %v821
    %v1300 = vunpack.c.h.b16 %v821
    %v1301 = vunpack.c.l.b16 %v822
    %v1302 = vunpack.c.h.b16 %v822
    %v1303 = vunpack.c.l.b16 %v823
    %v1304 = vunpack.c.h.b16 %v823
    %v1305 = vunpack.c.l.b16 %v824
    %v1306 = vunpack.c.h.b16 %v824
    %v1307 = vunpack.c.l.b16 %v825
    %v1308 = vunpack.c.h.b16 %v825
    %v1309 = vunpack.c.l.b16 %v826
    %v1310 = vunpack.c.h.b16 %v826
    %v1311 = vunpack.c.l.b16 %v827
    %v1312 = vunpack.c.h.b16 %v827
    %v1313 = vunpack.c.l.b16 %v828
    %v1314 = vunpack.c.h.b16 %v828
    %v1315 = vunpack.c.l.b16 %v829
    %v1316 = vunpack.c.h.b16 %v829
    %v1317 = vunpack.c.l.b16 %v830
    %v1318 = vunpack.c.h.b16 %v830
    %v1319 = vunpack.c.l.b16 %v831
    %v1320 = vunpack.c.h.b16 %v831
    %v1321 = vunpack.c.l.b16 %v832
    %v1322 = vunpack.c.h.b16 %v832
    %v1323 = vunpack.c.l.b16 %v833
    %v1324 = vunpack.c.h.b16 %v833
    %v1325 = vunpack.c.l.b16 %v834
    %v1326 = vunpack.c.h.b16 %v834
    %v1327 = vunpack.c.l.b16 %v835
    %v1328 = vunpack.c.h.b16 %v835
    %v1329 = vunpack.c.l.b16 %v836
    %v1330 = vunpack.c.h.b16 %v836
    %v1331 = vunpack.c.l.b16 %v837
    %v1332 = vunpack.c.h.b16 %v837
    %v1333 = vunpack.c.l.b16 %v838
    %v1334 = vunpack.c.h.b16 %v838
    %v1335 = vunpack.c.l.b16 %v839
    %v1336 = vunpack.c.h.b16 %v839
    %v1337 = vunpack.c.l.b16 %v840
    %v1338 = vunpack.c.h.b16 %v840
    %v1339 = vunpack.c.l.b16 %v841
    %v1340 = vunpack.c.h.b16 %v841
    %v1341 = vunpack.c.l.b16 %v842
    %v1342 = vunpack.c.h.b16 %v842
    %v1343 = vunpack.c.l.b16 %v843
    %v1344 = vunpack.c.h.b16 %v843
    %v1345 = vunpack.c.l.b16 %v844
    %v1346 = vunpack.c.h.b16 %v844
    %v1347 = vunpack.c.l.b16 %v845
    %v1348 = vunpack.c.h.b16 %v845
    %v1349 = vunpack.c.l.b16 %v846
    %v1350 = vunpack.c.h.b16 %v846
    %v1351 = vunpack.c.l.b16 %v847
    %v1352 = vunpack.c.h.b16 %v847
    %v1353 = vunpack.c.l.b16 %v848
    %v1354 = vunpack.c.h.b16 %v848
    %v1355 = vunpack.c.l.b16 %v849
    %v1356 = vunpack.c.h.b16 %v849
    %v1357 = vunpack.c.l.b16 %v850
    %v1358 = vunpack.c.h.b16 %v850
    %v1359 = vunpack.c.l.b16 %v851
    %v1360 = vunpack.c.h.b16 %v851
    %v1361 = vunpack.c.l.b16 %v852
    %v1362 = vunpack.c.h.b16 %v852
    %v1363 = vunpack.c.l.b16 %v853
    %v1364 = vunpack.c.h.b16 %v853
    %v1365 = vunpack.c.l.b16 %v854
    %v1366 = vunpack.c.h.b16 %v854
    %v1367 = vunpack.c.l.b16 %v855
    %v1368 = vunpack.c.h.b16 %v855
    %v1369 = vunpack.c.l.b16 %v856
    %v1370 = vunpack.c.h.b16 %v856
    %v1371 = vunpack.c.l.b16 %v857
    %v1372 = vunpack.c.h.b16 %v857
    %v1373 = vunpack.c.l.b16 %v858
    %v1374 = vunpack.c.h.b16 %v858
    %v1375 = vunpack.c.l.b16 %v859
    %v1376 = vunpack.c.h.b16 %v859
    %v1377 = vunpack.c.l.b16 %v860
    %v1378 = vunpack.c.h.b16 %v860
    %v1379 = vunpack.c.l.b16 %v861
    %v1380 = vunpack.c.h.b16 %v861
    %v1381 = vunpack.c.l.b16 %v862
    %v1382 = vunpack.c.h.b16 %v862
    %v1383 = vunpack.c.l.b16 %v863
    %v1384 = vunpack.c.h.b16 %v863
    %v1385 = vunpack.c.l.b16 %v864
    %v1386 = vunpack.c.h.b16 %v864
    %v1387 = vunpack.c.l.b16 %v865
    %v1388 = vunpack.c.h.b16 %v865
    %v1389 = vunpack.c.l.b16 %v866
    %v1390 = vunpack.c.h.b16 %v866
    %v1391 = vunpack.c.l.b16 %v867
    %v1392 = vunpack.c.h.b16 %v867
    %v1393 = vunpack.c.l.b16 %v868
    %v1394 = vunpack.c.h.b16 %v868
    %v1395 = vunpack.c.l.b16 %v869
    %v1396 = vunpack.c.h.b16 %v869
    %v1397 = vunpack.c.l.b16 %v870
    %v1398 = vunpack.c.h.b16 %v870
    %v1399 = vunpack.c.l.b16 %v871
    %v1400 = vunpack.c.h.b16 %v871
    %v1401 = vunpack.c.l.b16 %v872
    %v1402 = vunpack.c.h.b16 %v872
    %v1403 = vunpack.c.l.b16 %v873
    %v1404 = vunpack.c.h.b16 %v873
    %v1405 = vunpack.c.l.b16 %v874
    %v1406 = vunpack.c.h.b16 %v874
    %v1407 = vunpack.c.l.b16 %v875
    %v1408 = vunpack.c.h.b16 %v875
    %v1409 = vunpack.c.l.b16 %v876
    %v1410 = vunpack.c.h.b16 %v876
    %v1411 = vunpack.c.l.b16 %v877
    %v1412 = vunpack.c.h.b16 %v877
    %v1413 = vunpack.c.l.b16 %v878
    %v1414 = vunpack.c.h.b16 %v878
    %v1415 = vunpack.c.l.b16 %v879
    %v1416 = vunpack.c.h.b16 %v879
    %v1417 = vunpack.c.l.b16 %v880
    %v1418 = vunpack.c.h.b16 %v880
    %v1419 = vunpack.c.l.b16 %v881
    %v1420 = vunpack.c.h.b16 %v881
    %v1421 = vunpack.c.l.b16 %v882
    %v1422 = vunpack.c.h.b16 %v882
    %v1423 = vunpack.c.l.b16 %v883
    %v1424 = vunpack.c.h.b16 %v883
    %v1425 = vunpack.c.l.b16 %v884
    %v1426 = vunpack.c.h.b16 %v884
    %v1427 = vunpack.c.l.b16 %v885
    %v1428 = vunpack.c.h.b16 %v885
    %v1429 = vunpack.c.l.b16 %v886
    %v1430 = vunpack.c.h.b16 %v886
    %v1431 = vunpack.c.l.b16 %v887
    %v1432 = vunpack.c.h.b16 %v887
    %v1433 = vunpack.c.l.b16 %v888
    %v1434 = vunpack.c.h.b16 %v888
    %v1435 = vunpack.c.l.b16 %v889
    %v1436 = vunpack.c.h.b16 %v889
    %v1437 = vunpack.c.l.b16 %v890
    %v1438 = vunpack.c.h.b16 %v890
    %v1439 = vunpack.c.l.b16 %v891
    %v1440 = vunpack.c.h.b16 %v891
    %v1441 = vunpack.c.l.b16 %v892
    %v1442 = vunpack.c.h.b16 %v892
    %v1443 = vunpack.c.l.b16 %v893
    %v1444 = vunpack.c.h.b16 %v893
    %v1445 = vunpack.c.l.b16 %v894
    %v1446 = vunpack.c.h.b16 %v894
    %v1447 = vunpack.c.l.b16 %v895
    %v1448 = vunpack.c.h.b16 %v895
    %v1449 = vunpack.c.l.b16 %v896
    %v1450 = vunpack.c.h.b16 %v896
    %v1451 = vunpack.c.l.b16 %v897
    %v1452 = vunpack.c.h.b16 %v897
    %v1453 = vunpack.c.l.b16 %v898
    %v1454 = vunpack.c.h.b16 %v898
    %v1455 = vunpack.c.l.b16 %v899
    %v1456 = vunpack.c.h.b16 %v899
    %v1457 = vunpack.c.l.b16 %v900
    %v1458 = vunpack.c.h.b16 %v900
    %v1459 = vunpack.c.l.b16 %v901
    %v1460 = vunpack.c.h.b16 %v901
    %v1461 = vunpack.c.l.b16 %v902
    %v1462 = vunpack.c.h.b16 %v902
    %v1463 = vunpack.c.l.b16 %v903
    %v1464 = vunpack.c.h.b16 %v903
    %v1465 = vunpack.c.l.b16 %v904
    %v1466 = vunpack.c.h.b16 %v904
    %v1467 = vunpack.c.l.b16 %v905
    %v1468 = vunpack.c.h.b16 %v905
    %v1469 = vunpack.c.l.b16 %v906
    %v1470 = vunpack.c.h.b16 %v906
    %v1471 = vunpack.c.l.b16 %v907
    %v1472 = vunpack.c.h.b16 %v907
    %v1473 = vunpack.c.l.b16 %v908
    %v1474 = vunpack.c.h.b16 %v908
    %v1475 = vunpack.c.l.b16 %v909
    %v1476 = vunpack.c.h.b16 %v909
    %v1477 = vunpack.c.l.b16 %v910
    %v1478 = vunpack.c.h.b16 %v910
    %v1479 = vunpack.c.l.b16 %v911
    %v1480 = vunpack.c.h.b16 %v911
    %v1481 = vunpack.c.l.b16 %v912
    %v1482 = vunpack.c.h.b16 %v912
    %v1483 = vunpack.c.l.b16 %v913
    %v1484 = vunpack.c.h.b16 %v913
    %v1485 = vunpack.c.l.b16 %v914
    %v1486 = vunpack.c.h.b16 %v914
    %v1487 = vunpack.c.l.b16 %v915
    %v1488 = vunpack.c.h.b16 %v915
    %v1489 = vunpack.c.l.b16 %v916
    %v1490 = vunpack.c.h.b16 %v916
    %v1491 = vunpack.c.l.b16 %v917
    %v1492 = vunpack.c.h.b16 %v917
    %v1493 = vunpack.c.l.b16 %v918
    %v1494 = vunpack.c.h.b16 %v918
    %v1495 = vunpack.c.l.b16 %v919
    %v1496 = vunpack.c.h.b16 %v919
    %v1497 = vunpack.c.l.b16 %v920
    %v1498 = vunpack.c.h.b16 %v920
    %v1499 = vunpack.c.l.b16 %v921
    %v1500 = vunpack.c.h.b16 %v921
    %v1501 = vunpack.c.l.b16 %v922
    %v1502 = vunpack.c.h.b16 %v922
    %v1503 = vunpack.c.l.b16 %v923
    %v1504 = vunpack.c.h.b16 %v923
    %v1505 = vunpack.c.l.b16 %v924
    %v1506 = vunpack.c.h.b16 %v924
    %v1507 = vunpack.c.l.b16 %v925
    %v1508 = vunpack.c.h.b16 %v925
    %v1509 = vunpack.c.l.b16 %v926
    %v1510 = vunpack.c.h.b16 %v926
    %v1511 = vunpack.c.l.b16 %v927
    %v1512 = vunpack.c.h.b16 %v927
    %v1513 = vunpack.c.l.b16 %v928
    %v1514 = vunpack.c.h.b16 %v928
    %v1515 = vunpack.c.l.b16 %v929
    %v1516 = vunpack.c.h.b16 %v929
    %v1517 = vunpack.c.l.b16 %v930
    %v1518 = vunpack.c.h.b16 %v930
    %v1519 = vunpack.c.l.b16 %v931
    %v1520 = vunpack.c.h.b16 %v931
    %v1521 = vunpack.c.l.b16 %v932
    %v1522 = vunpack.c.h.b16 %v932
    %v1523 = vunpack.c.l.b16 %v933
    %v1524 = vunpack.c.h.b16 %v933
    %v1525 = vunpack.c.l.b16 %v934
    %v1526 = vunpack.c.h.b16 %v934
    %v1527 = vunpack.c.l.b16 %v935
    %v1528 = vunpack.c.h.b16 %v935
    %v1529 = vunpack.c.l.b16 %v936
    %v1530 = vunpack.c.h.b16 %v936
    %v1531 = vunpack.c.l.b16 %v937
    %v1532 = vunpack.c.h.b16 %v937
    %v1533 = vunpack.c.l.b16 %v938
    %v1534 = vunpack.c.h.b16 %v938
    %v1535 = vunpack.c.l.b16 %v939
    %v1536 = vunpack.c.h.b16 %v939
    %v1537 = vunpack.c.l.b16 %v940
    %v1538 = vunpack.c.h.b16 %v940
    %v1539 = vpack.c.b16 %v1151, %v1147
    %v1540 = vpack.c.b16 %v1152, %v1148
    %v1541 = vpack.c.b16 %v1153, %v1149
    %v1542 = vpack.c.b16 %v1154, %v1150
    %v1543 = vpack.c.b16 %v1159, %v1155
    %v1544 = vpack.c.b16 %v1160, %v1156
    %v1545 = vpack.c.b16 %v1161, %v1157
    %v1546 = vpack.c.b16 %v1162, %v1158
    %v1547 = vpack.c.b16 %v1167, %v1163
    %v1548 = vpack.c.b16 %v1168, %v1164
    %v1549 = vpack.c.b16 %v1169, %v1165
    %v1550 = vpack.c.b16 %v1170, %v1166
    %v1551 = vpack.c.b16 %v1175, %v1171
    %v1552 = vpack.c.b16 %v1176, %v1172
    %v1553 = vpack.c.b16 %v1177, %v1173
    %v1554 = vpack.c.b16 %v1178, %v1174
    %v1555 = vpack.c.b16 %v1183, %v1179
    %v1556 = vpack.c.b16 %v1184, %v1180
    %v1557 = vpack.c.b16 %v1185, %v1181
    %v1558 = vpack.c.b16 %v1186, %v1182
    %v1559 = vpack.c.b16 %v1191, %v1187
    %v1560 = vpack.c.b16 %v1192, %v1188
    %v1561 = vpack.c.b16 %v1193, %v1189
    %v1562 = vpack.c.b16 %v1194, %v1190
    %v1563 = vpack.c.b16 %v1199, %v1195
    %v1564 = vpack.c.b16 %v1200, %v1196
    %v1565 = vpack.c.b16 %v1201, %v1197
    %v1566 = vpack.c.b16 %v1202, %v1198
    %v1567 = vpack.c.b16 %v1207, %v1203
    %v1568 = vpack.c.b16 %v1208, %v1204
    %v1569 = vpack.c.b16 %v1209, %v1205
    %v1570 = vpack.c.b16 %v1210, %v1206
    %v1571 = vpack.c.b16 %v1215, %v1211
    %v1572 = vpack.c.b16 %v1216, %v1212
    %v1573 = vpack.c.b16 %v1217, %v1213
    %v1574 = vpack.c.b16 %v1218, %v1214
    %v1575 = vpack.c.b16 %v1223, %v1219
    %v1576 = vpack.c.b16 %v1224, %v1220
    %v1577 = vpack.c.b16 %v1225, %v1221
    %v1578 = vpack.c.b16 %v1226, %v1222
    %v1579 = vpack.c.b16 %v1231, %v1227
    %v1580 = vpack.c.b16 %v1232, %v1228
    %v1581 = vpack.c.b16 %v1233, %v1229
    %v1582 = vpack.c.b16 %v1234, %v1230
    %v1583 = vpack.c.b16 %v1239, %v1235
    %v1584 = vpack.c.b16 %v1240, %v1236
    %v1585 = vpack.c.b16 %v1241, %v1237
    %v1586 = vpack.c.b16 %v1242, %v1238
    %v1587 = vpack.c.b16 %v1247, %v1243
    %v1588 = vpack.c.b16 %v1248, %v1244
    %v1589 = vpack.c.b16 %v1249, %v1245
    %v1590 = vpack.c.b16 %v1250, %v1246
    %v1591 = vpack.c.b16 %v1255, %v1251
    %v1592 = vpack.c.b16 %v1256, %v1252
    %v1593 = vpack.c.b16 %v1257, %v1253
    %v1594 = vpack.c.b16 %v1258, %v1254
    %v1595 = vpack.c.b16 %v1263, %v1259
    %v1596 = vpack.c.b16 %v1264, %v1260
    %v1597 = vpack.c.b16 %v1265, %v1261
    %v1598 = vpack.c.b16 %v1266, %v1262
    %v1599 = vpack.c.b16 %v1271, %v1267
    %v1600 = vpack.c.b16 %v1272, %v1268
    %v1601 = vpack.c.b16 %v1273, %v1269
    %v1602 = vpack.c.b16 %v1274, %v1270
    %v1603 = vpack.c.b16 %v1279, %v1275
    %v1604 = vpack.c.b16 %v1280, %v1276
    %v1605 = vpack.c.b16 %v1281, %v1277
    %v1606 = vpack.c.b16 %v1282, %v1278
    %v1607 = vpack.c.b16 %v1287, %v1283
    %v1608 = vpack.c.b16 %v1288, %v1284
    %v1609 = vpack.c.b16 %v1289, %v1285
    %v1610 = vpack.c.b16 %v1290, %v1286
    %v1611 = vpack.c.b16 %v1295, %v1291
    %v1612 = vpack.c.b16 %v1296, %v1292
    %v1613 = vpack.c.b16 %v1297, %v1293
    %v1614 = vpack.c.b16 %v1298, %v1294
    %v1615 = vpack.c.b16 %v1303, %v1299
    %v1616 = vpack.c.b16 %v1304, %v1300
    %v1617 = vpack.c.b16 %v1305, %v1301
    %v1618 = vpack.c.b16 %v1306, %v1302
    %v1619 = vpack.c.b16 %v1311, %v1307
    %v1620 = vpack.c.b16 %v1312, %v1308
    %v1621 = vpack.c.b16 %v1313, %v1309
    %v1622 = vpack.c.b16 %v1314, %v1310
    %v1623 = vpack.c.b16 %v1319, %v1315
    %v1624 = vpack.c.b16 %v1320, %v1316
    %v1625 = vpack.c.b16 %v1321, %v1317
    %v1626 = vpack.c.b16 %v1322, %v1318
    %v1627 = vpack.c.b16 %v1327, %v1323
    %v1628 = vpack.c.b16 %v1328, %v1324
    %v1629 = vpack.c.b16 %v1329, %v1325
    %v1630 = vpack.c.b16 %v1330, %v1326
    %v1631 = vpack.c.b16 %v1335, %v1331
    %v1632 = vpack.c.b16 %v1336, %v1332
    %v1633 = vpack.c.b16 %v1337, %v1333
    %v1634 = vpack.c.b16 %v1338, %v1334
    %v1635 = vpack.c.b16 %v1343, %v1339
    %v1636 = vpack.c.b16 %v1344, %v1340
    %v1637 = vpack.c.b16 %v1345, %v1341
    %v1638 = vpack.c.b16 %v1346, %v1342
    %v1639 = vpack.c.b16 %v1351, %v1347
    %v1640 = vpack.c.b16 %v1352, %v1348
    %v1641 = vpack.c.b16 %v1353, %v1349
    %v1642 = vpack.c.b16 %v1354, %v1350
    %v1643 = vpack.c.b16 %v1359, %v1355
    %v1644 = vpack.c.b16 %v1360, %v1356
    %v1645 = vpack.c.b16 %v1361, %v1357
    %v1646 = vpack.c.b16 %v1362, %v1358
    %v1647 = vpack.c.b16 %v1367, %v1363
    %v1648 = vpack.c.b16 %v1368, %v1364
    %v1649 = vpack.c.b16 %v1369, %v1365
    %v1650 = vpack.c.b16 %v1370, %v1366
    %v1651 = vpack.c.b16 %v1375, %v1371
    %v1652 = vpack.c.b16 %v1376, %v1372
    %v1653 = vpack.c.b16 %v1377, %v1373
    %v1654 = vpack.c.b16 %v1378, %v1374
    %v1655 = vpack.c.b16 %v1383, %v1379
    %v1656 = vpack.c.b16 %v1384, %v1380
    %v1657 = vpack.c.b16 %v1385, %v1381
    %v1658 = vpack.c.b16 %v1386, %v1382
    %v1659 = vpack.c.b16 %v1391, %v1387
    %v1660 = vpack.c.b16 %v1392, %v1388
    %v1661 = vpack.c.b16 %v1393, %v1389
    %v1662 = vpack.c.b16 %v1394, %v1390
    %v1663 = vpack.c.b16 %v1399, %v1395
    %v1664 = vpack.c.b16 %v1400, %v1396
    %v1665 = vpack.c.b16 %v1401, %v1397
    %v1666 = vpack.c.b16 %v1402, %v1398
    %v1667 = vpack.c.b16 %v1407, %v1403
    %v1668 = vpack.c.b16 %v1408, %v1404
    %v1669 = vpack.c.b16 %v1409, %v1405
    %v1670 = vpack.c.b16 %v1410, %v1406
    %v1671 = vpack.c.b16 %v1415, %v1411
    %v1672 = vpack.c.b16 %v1416, %v1412
    %v1673 = vpack.c.b16 %v1417, %v1413
    %v1674 = vpack.c.b16 %v1418, %v1414
    %v1675 = vpack.c.b16 %v1423, %v1419
    %v1676 = vpack.c.b16 %v1424, %v1420
    %v1677 = vpack.c.b16 %v1425, %v1421
    %v1678 = vpack.c.b16 %v1426, %v1422
    %v1679 = vpack.c.b16 %v1431, %v1427
    %v1680 = vpack.c.b16 %v1432, %v1428
    %v1681 = vpack.c.b16 %v1433, %v1429
    %v1682 = vpack.c.b16 %v1434, %v1430
    %v1683 = vpack.c.b16 %v1439, %v1435
    %v1684 = vpack.c.b16 %v1440, %v1436
    %v1685 = vpack.c.b16 %v1441, %v1437
    %v1686 = vpack.c.b16 %v1442, %v1438
    %v1687 = vpack.c.b16 %v1447, %v1443
    %v1688 = vpack.c.b16 %v1448, %v1444
    %v1689 = vpack.c.b16 %v1449, %v1445
    %v1690 = vpack.c.b16 %v1450, %v1446
    %v1691 = vpack.c.b16 %v1455, %v1451
    %v1692 = vpack.c.b16 %v1456, %v1452
    %v1693 = vpack.c.b16 %v1457, %v1453
    %v1694 = vpack.c.b16 %v1458, %v1454
    %v1695 = vpack.c.b16 %v1463, %v1459
    %v1696 = vpack.c.b16 %v1464, %v1460
    %v1697 = vpack.c.b16 %v1465, %v1461
    %v1698 = vpack.c.b16 %v1466, %v1462
    %v1699 = vpack.c.b16 %v1471, %v1467
    %v1700 = vpack.c.b16 %v1472, %v1468
    %v1701 = vpack.c.b16 %v1473, %v1469
    %v1702 = vpack.c.b16 %v1474, %v1470
    %v1703 = vpack.c.b16 %v1479, %v1475
    %v1704 = vpack.c.b16 %v1480, %v1476
    %v1705 = vpack.c.b16 %v1481, %v1477
    %v1706 = vpack.c.b16 %v1482, %v1478
    %v1707 = vpack.c.b16 %v1487, %v1483
    %v1708 = vpack.c.b16 %v1488, %v1484
    %v1709 = vpack.c.b16 %v1489, %v1485
    %v1710 = vpack.c.b16 %v1490, %v1486
    %v1711 = vpack.c.b16 %v1495, %v1491
    %v1712 = vpack.c.b16 %v1496, %v1492
    %v1713 = vpack.c.b16 %v1497, %v1493
    %v1714 = vpack.c.b16 %v1498, %v1494
    %v1715 = vpack.c.b16 %v1503, %v1499
    %v1716 = vpack.c.b16 %v1504, %v1500
    %v1717 = vpack.c.b16 %v1505, %v1501
    %v1718 = vpack.c.b16 %v1506, %v1502
    %v1719 = vpack.c.b16 %v1511, %v1507
    %v1720 = vpack.c.b16 %v1512, %v1508
    %v1721 = vpack.c.b16 %v1513, %v1509
    %v1722 = vpack.c.b16 %v1514, %v1510
    %v1723 = vpack.c.b16 %v1519, %v1515
    %v1724 = vpack.c.b16 %v1520, %v1516
    %v1725 = vpack.c.b16 %v1521, %v1517
    %v1726 = vpack.c.b16 %v1522, %v1518
    %v1727 = vpack.c.b16 %v1527, %v1523
    %v1728 = vpack.c.b16 %v1528, %v1524
    %v1729 = vpack.c.b16 %v1529, %v1525
    %v1730 = vpack.c.b16 %v1530, %v1526
    %v1731 = vpack.c.b16 %v1535, %v1531
    %v1732 = vpack.c.b16 %v1536, %v1532
    %v1733 = vpack.c.b16 %v1537, %v1533
    %v1734 = vpack.c.b16 %v1538, %v1534
    %vm1931 = vcmask 130048
    %v1933 = vsel %vm1931, %v695, 0
    %v1936 = vsel %vm1931, %v702, 0
    %v1939 = vsel %vm1931, %v709, 0
    %v1942 = vsel %vm1931, %v716, 0
    %v1945 = vsel %vm1931, %v723, 0
    %v1948 = vsel %vm1931, %v730, 0
    %v1951 = vsel %vm1931, %v737, 0
    %v1954 = vsel %vm1931, %v744, 0
    %1956 = vmatpush.bf16.msra.mxu0 %v1567
    %1957 = vmatpush.bf16.msra.mxu0 %v1563
    %1958 = vmatpush.bf16.msra.mxu0 %v1559
    %1959 = vmatpush.bf16.msra.mxu0 %v1555
    %1960 = vmatpush.bf16.msra.mxu0 %v1551
    %1961 = vmatpush.bf16.msra.mxu0 %v1547
    %1962 = vmatpush.bf16.msra.mxu0 %v1543
    %1963 = vmatpush.bf16.msra.mxu0 %v1539
    %1964 = vmatmul.bf16.gmra.mxu0 %v689
    %v1965 = vpop.f32.mrf.mxu0
    %v1966 = vadd.f32 %v943, %v1965
    %v1967 = vpop.f32.mrf.mxu0
    %v1968 = vadd.f32 %v943, %v1967
    %1969 = vmatmul.bf16.gmra.mxu0 %v696
    %v1970 = vpop.f32.mrf.mxu0
    %v1971 = vadd.f32 %v943, %v1970
    %v1972 = vpop.f32.mrf.mxu0
    %v1973 = vadd.f32 %v943, %v1972
    %1974 = vmatmul.bf16.gmra.mxu0 %v703
    %v1975 = vpop.f32.mrf.mxu0
    %v1976 = vadd.f32 %v943, %v1975
    %v1977 = vpop.f32.mrf.mxu0
    %v1978 = vadd.f32 %v943, %v1977
    %1979 = vmatmul.bf16.gmra.mxu0 %v710
    %v1980 = vpop.f32.mrf.mxu0
    %v1981 = vadd.f32 %v943, %v1980
    %v1982 = vpop.f32.mrf.mxu0
    %v1983 = vadd.f32 %v943, %v1982
    %1984 = vmatmul.bf16.gmra.mxu0 %v717
    %v1985 = vpop.f32.mrf.mxu0
    %v1986 = vadd.f32 %v943, %v1985
    %v1987 = vpop.f32.mrf.mxu0
    %v1988 = vadd.f32 %v943, %v1987
    %1989 = vmatmul.bf16.gmra.mxu0 %v724
    %v1990 = vpop.f32.mrf.mxu0
    %v1991 = vadd.f32 %v943, %v1990
    %v1992 = vpop.f32.mrf.mxu0
    %v1993 = vadd.f32 %v943, %v1992
    %1994 = vmatmul.bf16.gmra.mxu0 %v731
    %v1995 = vpop.f32.mrf.mxu0
    %v1996 = vadd.f32 %v943, %v1995
    %v1997 = vpop.f32.mrf.mxu0
    %v1998 = vadd.f32 %v943, %v1997
    %1999 = vmatmul.bf16.gmra.mxu0 %v738
    %v2000 = vpop.f32.mrf.mxu0
    %v2001 = vadd.f32 %v943, %v2000
    %v2002 = vpop.f32.mrf.mxu0
    %v2003 = vadd.f32 %v943, %v2002
    %2004 = vdwg.mxu0
    %2005 = vmatpush.bf16.msra.mxu0 %v1599
    %2006 = vmatpush.bf16.msra.mxu0 %v1595
    %2007 = vmatpush.bf16.msra.mxu0 %v1591
    %2008 = vmatpush.bf16.msra.mxu0 %v1587
    %2009 = vmatpush.bf16.msra.mxu0 %v1583
    %2010 = vmatpush.bf16.msra.mxu0 %v1579
    %2011 = vmatpush.bf16.msra.mxu0 %v1575
    %2012 = vmatpush.bf16.msra.mxu0 %v1571
    %2013 = vmatmul.bf16.gmra.mxu0 %v690
    %v2014 = vpop.f32.mrf.mxu0
    %v2015 = vadd.f32 %v1966, %v2014
    %v2016 = vpop.f32.mrf.mxu0
    %v2017 = vadd.f32 %v1968, %v2016
    %2018 = vmatmul.bf16.gmra.mxu0 %v697
    %v2019 = vpop.f32.mrf.mxu0
    %v2020 = vadd.f32 %v1971, %v2019
    %v2021 = vpop.f32.mrf.mxu0
    %v2022 = vadd.f32 %v1973, %v2021
    %2023 = vmatmul.bf16.gmra.mxu0 %v704
    %v2024 = vpop.f32.mrf.mxu0
    %v2025 = vadd.f32 %v1976, %v2024
    %v2026 = vpop.f32.mrf.mxu0
    %v2027 = vadd.f32 %v1978, %v2026
    %2028 = vmatmul.bf16.gmra.mxu0 %v711
    %v2029 = vpop.f32.mrf.mxu0
    %v2030 = vadd.f32 %v1981, %v2029
    %v2031 = vpop.f32.mrf.mxu0
    %v2032 = vadd.f32 %v1983, %v2031
    %2033 = vmatmul.bf16.gmra.mxu0 %v718
    %v2034 = vpop.f32.mrf.mxu0
    %v2035 = vadd.f32 %v1986, %v2034
    %v2036 = vpop.f32.mrf.mxu0
    %v2037 = vadd.f32 %v1988, %v2036
    %2038 = vmatmul.bf16.gmra.mxu0 %v725
    %v2039 = vpop.f32.mrf.mxu0
    %v2040 = vadd.f32 %v1991, %v2039
    %v2041 = vpop.f32.mrf.mxu0
    %v2042 = vadd.f32 %v1993, %v2041
    %2043 = vmatmul.bf16.gmra.mxu0 %v732
    %v2044 = vpop.f32.mrf.mxu0
    %v2045 = vadd.f32 %v1996, %v2044
    %v2046 = vpop.f32.mrf.mxu0
    %v2047 = vadd.f32 %v1998, %v2046
    %2048 = vmatmul.bf16.gmra.mxu0 %v739
    %v2049 = vpop.f32.mrf.mxu0
    %v2050 = vadd.f32 %v2001, %v2049
    %v2051 = vpop.f32.mrf.mxu0
    %v2052 = vadd.f32 %v2003, %v2051
    %2053 = vdwg.mxu0
    %2054 = vmatpush.bf16.msra.mxu0 %v1631
    %2055 = vmatpush.bf16.msra.mxu0 %v1627
    %2056 = vmatpush.bf16.msra.mxu0 %v1623
    %2057 = vmatpush.bf16.msra.mxu0 %v1619
    %2058 = vmatpush.bf16.msra.mxu0 %v1615
    %2059 = vmatpush.bf16.msra.mxu0 %v1611
    %2060 = vmatpush.bf16.msra.mxu0 %v1607
    %2061 = vmatpush.bf16.msra.mxu0 %v1603
    %2062 = vmatmul.bf16.gmra.mxu0 %v691
    %v2063 = vpop.f32.mrf.mxu0
    %v2064 = vadd.f32 %v2015, %v2063
    %v2065 = vpop.f32.mrf.mxu0
    %v2066 = vadd.f32 %v2017, %v2065
    %2067 = vmatmul.bf16.gmra.mxu0 %v698
    %v2068 = vpop.f32.mrf.mxu0
    %v2069 = vadd.f32 %v2020, %v2068
    %v2070 = vpop.f32.mrf.mxu0
    %v2071 = vadd.f32 %v2022, %v2070
    %2072 = vmatmul.bf16.gmra.mxu0 %v705
    %v2073 = vpop.f32.mrf.mxu0
    %v2074 = vadd.f32 %v2025, %v2073
    %v2075 = vpop.f32.mrf.mxu0
    %v2076 = vadd.f32 %v2027, %v2075
    %2077 = vmatmul.bf16.gmra.mxu0 %v712
    %v2078 = vpop.f32.mrf.mxu0
    %v2079 = vadd.f32 %v2030, %v2078
    %v2080 = vpop.f32.mrf.mxu0
    %v2081 = vadd.f32 %v2032, %v2080
    %2082 = vmatmul.bf16.gmra.mxu0 %v719
    %v2083 = vpop.f32.mrf.mxu0
    %v2084 = vadd.f32 %v2035, %v2083
    %v2085 = vpop.f32.mrf.mxu0
    %v2086 = vadd.f32 %v2037, %v2085
    %2087 = vmatmul.bf16.gmra.mxu0 %v726
    %v2088 = vpop.f32.mrf.mxu0
    %v2089 = vadd.f32 %v2040, %v2088
    %v2090 = vpop.f32.mrf.mxu0
    %v2091 = vadd.f32 %v2042, %v2090
    %2092 = vmatmul.bf16.gmra.mxu0 %v733
    %v2093 = vpop.f32.mrf.mxu0
    %v2094 = vadd.f32 %v2045, %v2093
    %v2095 = vpop.f32.mrf.mxu0
    %v2096 = vadd.f32 %v2047, %v2095
    %2097 = vmatmul.bf16.gmra.mxu0 %v740
    %v2098 = vpop.f32.mrf.mxu0
    %v2099 = vadd.f32 %v2050, %v2098
    %v2100 = vpop.f32.mrf.mxu0
    %v2101 = vadd.f32 %v2052, %v2100
    %2102 = vdwg.mxu0
    %2103 = vmatpush.bf16.msra.mxu0 %v1663
    %2104 = vmatpush.bf16.msra.mxu0 %v1659
    %2105 = vmatpush.bf16.msra.mxu0 %v1655
    %2106 = vmatpush.bf16.msra.mxu0 %v1651
    %2107 = vmatpush.bf16.msra.mxu0 %v1647
    %2108 = vmatpush.bf16.msra.mxu0 %v1643
    %2109 = vmatpush.bf16.msra.mxu0 %v1639
    %2110 = vmatpush.bf16.msra.mxu0 %v1635
    %2111 = vmatmul.bf16.gmra.mxu0 %v692
    %v2112 = vpop.f32.mrf.mxu0
    %v2113 = vadd.f32 %v2064, %v2112
    %v2114 = vpop.f32.mrf.mxu0
    %v2115 = vadd.f32 %v2066, %v2114
    %2116 = vmatmul.bf16.gmra.mxu0 %v699
    %v2117 = vpop.f32.mrf.mxu0
    %v2118 = vadd.f32 %v2069, %v2117
    %v2119 = vpop.f32.mrf.mxu0
    %v2120 = vadd.f32 %v2071, %v2119
    %2121 = vmatmul.bf16.gmra.mxu0 %v706
    %v2122 = vpop.f32.mrf.mxu0
    %v2123 = vadd.f32 %v2074, %v2122
    %v2124 = vpop.f32.mrf.mxu0
    %v2125 = vadd.f32 %v2076, %v2124
    %2126 = vmatmul.bf16.gmra.mxu0 %v713
    %v2127 = vpop.f32.mrf.mxu0
    %v2128 = vadd.f32 %v2079, %v2127
    %v2129 = vpop.f32.mrf.mxu0
    %v2130 = vadd.f32 %v2081, %v2129
    %2131 = vmatmul.bf16.gmra.mxu0 %v720
    %v2132 = vpop.f32.mrf.mxu0
    %v2133 = vadd.f32 %v2084, %v2132
    %v2134 = vpop.f32.mrf.mxu0
    %v2135 = vadd.f32 %v2086, %v2134
    %2136 = vmatmul.bf16.gmra.mxu0 %v727
    %v2137 = vpop.f32.mrf.mxu0
    %v2138 = vadd.f32 %v2089, %v2137
    %v2139 = vpop.f32.mrf.mxu0
    %v2140 = vadd.f32 %v2091, %v2139
    %2141 = vmatmul.bf16.gmra.mxu0 %v734
    %v2142 = vpop.f32.mrf.mxu0
    %v2143 = vadd.f32 %v2094, %v2142
    %v2144 = vpop.f32.mrf.mxu0
    %v2145 = vadd.f32 %v2096, %v2144
    %2146 = vmatmul.bf16.gmra.mxu0 %v741
    %v2147 = vpop.f32.mrf.mxu0
    %v2148 = vadd.f32 %v2099, %v2147
    %v2149 = vpop.f32.mrf.mxu0
    %v2150 = vadd.f32 %v2101, %v2149
    %2151 = vdwg.mxu0
    %2152 = vmatpush.bf16.msra.mxu0 %v1695
    %2153 = vmatpush.bf16.msra.mxu0 %v1691
    %2154 = vmatpush.bf16.msra.mxu0 %v1687
    %2155 = vmatpush.bf16.msra.mxu0 %v1683
    %2156 = vmatpush.bf16.msra.mxu0 %v1679
    %2157 = vmatpush.bf16.msra.mxu0 %v1675
    %2158 = vmatpush.bf16.msra.mxu0 %v1671
    %2159 = vmatpush.bf16.msra.mxu0 %v1667
    %2160 = vmatmul.bf16.gmra.mxu0 %v693
    %v2161 = vpop.f32.mrf.mxu0
    %v2162 = vadd.f32 %v2113, %v2161
    %v2163 = vpop.f32.mrf.mxu0
    %v2164 = vadd.f32 %v2115, %v2163
    %2165 = vmatmul.bf16.gmra.mxu0 %v700
    %v2166 = vpop.f32.mrf.mxu0
    %v2167 = vadd.f32 %v2118, %v2166
    %v2168 = vpop.f32.mrf.mxu0
    %v2169 = vadd.f32 %v2120, %v2168
    %2170 = vmatmul.bf16.gmra.mxu0 %v707
    %v2171 = vpop.f32.mrf.mxu0
    %v2172 = vadd.f32 %v2123, %v2171
    %v2173 = vpop.f32.mrf.mxu0
    %v2174 = vadd.f32 %v2125, %v2173
    %2175 = vmatmul.bf16.gmra.mxu0 %v714
    %v2176 = vpop.f32.mrf.mxu0
    %v2177 = vadd.f32 %v2128, %v2176
    %v2178 = vpop.f32.mrf.mxu0
    %v2179 = vadd.f32 %v2130, %v2178
    %2180 = vmatmul.bf16.gmra.mxu0 %v721
    %v2181 = vpop.f32.mrf.mxu0
    %v2182 = vadd.f32 %v2133, %v2181
    %v2183 = vpop.f32.mrf.mxu0
    %v2184 = vadd.f32 %v2135, %v2183
    %2185 = vmatmul.bf16.gmra.mxu0 %v728
    %v2186 = vpop.f32.mrf.mxu0
    %v2187 = vadd.f32 %v2138, %v2186
    %v2188 = vpop.f32.mrf.mxu0
    %v2189 = vadd.f32 %v2140, %v2188
    %2190 = vmatmul.bf16.gmra.mxu0 %v735
    %v2191 = vpop.f32.mrf.mxu0
    %v2192 = vadd.f32 %v2143, %v2191
    %v2193 = vpop.f32.mrf.mxu0
    %v2194 = vadd.f32 %v2145, %v2193
    %2195 = vmatmul.bf16.gmra.mxu0 %v742
    %v2196 = vpop.f32.mrf.mxu0
    %v2197 = vadd.f32 %v2148, %v2196
    %v2198 = vpop.f32.mrf.mxu0
    %v2199 = vadd.f32 %v2150, %v2198
    %2200 = vdwg.mxu0
    %2201 = vmatpush.bf16.msra.mxu0 %v1727
    %2202 = vmatpush.bf16.msra.mxu0 %v1723
    %2203 = vmatpush.bf16.msra.mxu0 %v1719
    %2204 = vmatpush.bf16.msra.mxu0 %v1715
    %2205 = vmatpush.bf16.msra.mxu0 %v1711
    %2206 = vmatpush.bf16.msra.mxu0 %v1707
    %2207 = vmatpush.bf16.msra.mxu0 %v1703
    %2208 = vmatpush.bf16.msra.mxu0 %v1699
    %2209 = vmatmul.bf16.gmra.mxu0 %v694
    %v2210 = vpop.f32.mrf.mxu0
    %v2211 = vadd.f32 %v2162, %v2210
    %v2212 = vpop.f32.mrf.mxu0
    %v2213 = vadd.f32 %v2164, %v2212
    %2214 = vmatmul.bf16.gmra.mxu0 %v701
    %v2215 = vpop.f32.mrf.mxu0
    %v2216 = vadd.f32 %v2167, %v2215
    %v2217 = vpop.f32.mrf.mxu0
    %v2218 = vadd.f32 %v2169, %v2217
    %2219 = vmatmul.bf16.gmra.mxu0 %v708
    %v2220 = vpop.f32.mrf.mxu0
    %v2221 = vadd.f32 %v2172, %v2220
    %v2222 = vpop.f32.mrf.mxu0
    %v2223 = vadd.f32 %v2174, %v2222
    %2224 = vmatmul.bf16.gmra.mxu0 %v715
    %v2225 = vpop.f32.mrf.mxu0
    %v2226 = vadd.f32 %v2177, %v2225
    %v2227 = vpop.f32.mrf.mxu0
    %v2228 = vadd.f32 %v2179, %v2227
    %2229 = vmatmul.bf16.gmra.mxu0 %v722
    %v2230 = vpop.f32.mrf.mxu0
    %v2231 = vadd.f32 %v2182, %v2230
    %v2232 = vpop.f32.mrf.mxu0
    %v2233 = vadd.f32 %v2184, %v2232
    %2234 = vmatmul.bf16.gmra.mxu0 %v729
    %v2235 = vpop.f32.mrf.mxu0
    %v2236 = vadd.f32 %v2187, %v2235
    %v2237 = vpop.f32.mrf.mxu0
    %v2238 = vadd.f32 %v2189, %v2237
    %2239 = vmatmul.bf16.gmra.mxu0 %v736
    %v2240 = vpop.f32.mrf.mxu0
    %v2241 = vadd.f32 %v2192, %v2240
    %v2242 = vpop.f32.mrf.mxu0
    %v2243 = vadd.f32 %v2194, %v2242
    %2244 = vmatmul.bf16.gmra.mxu0 %v743
    %v2245 = vpop.f32.mrf.mxu0
    %v2246 = vadd.f32 %v2197, %v2245
    %v2247 = vpop.f32.mrf.mxu0
    %v2248 = vadd.f32 %v2199, %v2247
    %2249 = vdwg.mxu0
    %2250 = vmatpush.bf16.msra.mxu0 0
    %2251 = vmatpush.bf16.msra.mxu0 0
    %2252 = vmatpush.bf16.msra.mxu0 0
    %2253 = vmatpush.bf16.msra.mxu0 0
    %2254 = vmatpush.bf16.msra.mxu0 0
    %2255 = vmatpush.bf16.msra.mxu0 0
    %2256 = vmatpush.bf16.msra.mxu0 0
    %2257 = vmatpush.bf16.msra.mxu0 %v1731
    %2258 = vmatmul.bf16.gmra.mxu0 %v1933
    %v2259 = vpop.f32.mrf.mxu0
    %v2260 = vadd.f32 %v2211, %v2259
    %v2261 = vpop.f32.mrf.mxu0
    %v2262 = vadd.f32 %v2213, %v2261
    %2263 = vmatmul.bf16.gmra.mxu0 %v1936
    %v2264 = vpop.f32.mrf.mxu0
    %v2265 = vadd.f32 %v2216, %v2264
    %v2266 = vpop.f32.mrf.mxu0
    %v2267 = vadd.f32 %v2218, %v2266
    %2268 = vmatmul.bf16.gmra.mxu0 %v1939
    %v2269 = vpop.f32.mrf.mxu0
    %v2270 = vadd.f32 %v2221, %v2269
    %v2271 = vpop.f32.mrf.mxu0
    %v2272 = vadd.f32 %v2223, %v2271
    %2273 = vmatmul.bf16.gmra.mxu0 %v1942
    %v2274 = vpop.f32.mrf.mxu0
    %v2275 = vadd.f32 %v2226, %v2274
    %v2276 = vpop.f32.mrf.mxu0
    %v2277 = vadd.f32 %v2228, %v2276
    %2278 = vmatmul.bf16.gmra.mxu0 %v1945
    %v2279 = vpop.f32.mrf.mxu0
    %v2280 = vadd.f32 %v2231, %v2279
    %v2281 = vpop.f32.mrf.mxu0
    %v2282 = vadd.f32 %v2233, %v2281
    %2283 = vmatmul.bf16.gmra.mxu0 %v1948
    %v2284 = vpop.f32.mrf.mxu0
    %v2285 = vadd.f32 %v2236, %v2284
    %v2286 = vpop.f32.mrf.mxu0
    %v2287 = vadd.f32 %v2238, %v2286
    %2288 = vmatmul.bf16.gmra.mxu0 %v1951
    %v2289 = vpop.f32.mrf.mxu0
    %v2290 = vadd.f32 %v2241, %v2289
    %v2291 = vpop.f32.mrf.mxu0
    %v2292 = vadd.f32 %v2243, %v2291
    %2293 = vmatmul.bf16.gmra.mxu0 %v1954
    %v2294 = vpop.f32.mrf.mxu0
    %v2295 = vadd.f32 %v2246, %v2294
    %v2296 = vpop.f32.mrf.mxu0
    %v2297 = vadd.f32 %v2248, %v2296
    %2298 = vdwg.mxu0
    %2299 = vmatpush.bf16.msra.mxu0 %v1568
    %2300 = vmatpush.bf16.msra.mxu0 %v1564
    %2301 = vmatpush.bf16.msra.mxu0 %v1560
    %2302 = vmatpush.bf16.msra.mxu0 %v1556
    %2303 = vmatpush.bf16.msra.mxu0 %v1552
    %2304 = vmatpush.bf16.msra.mxu0 %v1548
    %2305 = vmatpush.bf16.msra.mxu0 %v1544
    %2306 = vmatpush.bf16.msra.mxu0 %v1540
    %2307 = vmatmul.bf16.gmra.mxu0 %v689
    %v2308 = vpop.f32.mrf.mxu0
    %v2309 = vadd.f32 %v944, %v2308
    %v2310 = vpop.f32.mrf.mxu0
    %v2311 = vadd.f32 %v944, %v2310
    %2312 = vmatmul.bf16.gmra.mxu0 %v696
    %v2313 = vpop.f32.mrf.mxu0
    %v2314 = vadd.f32 %v944, %v2313
    %v2315 = vpop.f32.mrf.mxu0
    %v2316 = vadd.f32 %v944, %v2315
    %2317 = vmatmul.bf16.gmra.mxu0 %v703
    %v2318 = vpop.f32.mrf.mxu0
    %v2319 = vadd.f32 %v944, %v2318
    %v2320 = vpop.f32.mrf.mxu0
    %v2321 = vadd.f32 %v944, %v2320
    %2322 = vmatmul.bf16.gmra.mxu0 %v710
    %v2323 = vpop.f32.mrf.mxu0
    %v2324 = vadd.f32 %v944, %v2323
    %v2325 = vpop.f32.mrf.mxu0
    %v2326 = vadd.f32 %v944, %v2325
    %2327 = vmatmul.bf16.gmra.mxu0 %v717
    %v2328 = vpop.f32.mrf.mxu0
    %v2329 = vadd.f32 %v944, %v2328
    %v2330 = vpop.f32.mrf.mxu0
    %v2331 = vadd.f32 %v944, %v2330
    %2332 = vmatmul.bf16.gmra.mxu0 %v724
    %v2333 = vpop.f32.mrf.mxu0
    %v2334 = vadd.f32 %v944, %v2333
    %v2335 = vpop.f32.mrf.mxu0
    %v2336 = vadd.f32 %v944, %v2335
    %2337 = vmatmul.bf16.gmra.mxu0 %v731
    %v2338 = vpop.f32.mrf.mxu0
    %v2339 = vadd.f32 %v944, %v2338
    %v2340 = vpop.f32.mrf.mxu0
    %v2341 = vadd.f32 %v944, %v2340
    %2342 = vmatmul.bf16.gmra.mxu0 %v738
    %v2343 = vpop.f32.mrf.mxu0
    %v2344 = vadd.f32 %v944, %v2343
    %v2345 = vpop.f32.mrf.mxu0
    %v2346 = vadd.f32 %v944, %v2345
    %2347 = vdwg.mxu0
    %2348 = vmatpush.bf16.msra.mxu0 %v1600
    %2349 = vmatpush.bf16.msra.mxu0 %v1596
    %2350 = vmatpush.bf16.msra.mxu0 %v1592
    %2351 = vmatpush.bf16.msra.mxu0 %v1588
    %2352 = vmatpush.bf16.msra.mxu0 %v1584
    %2353 = vmatpush.bf16.msra.mxu0 %v1580
    %2354 = vmatpush.bf16.msra.mxu0 %v1576
    %2355 = vmatpush.bf16.msra.mxu0 %v1572
    %2356 = vmatmul.bf16.gmra.mxu0 %v690
    %v2357 = vpop.f32.mrf.mxu0
    %v2358 = vadd.f32 %v2309, %v2357
    %v2359 = vpop.f32.mrf.mxu0
    %v2360 = vadd.f32 %v2311, %v2359
    %2361 = vmatmul.bf16.gmra.mxu0 %v697
    %v2362 = vpop.f32.mrf.mxu0
    %v2363 = vadd.f32 %v2314, %v2362
    %v2364 = vpop.f32.mrf.mxu0
    %v2365 = vadd.f32 %v2316, %v2364
    %2366 = vmatmul.bf16.gmra.mxu0 %v704
    %v2367 = vpop.f32.mrf.mxu0
    %v2368 = vadd.f32 %v2319, %v2367
    %v2369 = vpop.f32.mrf.mxu0
    %v2370 = vadd.f32 %v2321, %v2369
    %2371 = vmatmul.bf16.gmra.mxu0 %v711
    %v2372 = vpop.f32.mrf.mxu0
    %v2373 = vadd.f32 %v2324, %v2372
    %v2374 = vpop.f32.mrf.mxu0
    %v2375 = vadd.f32 %v2326, %v2374
    %2376 = vmatmul.bf16.gmra.mxu0 %v718
    %v2377 = vpop.f32.mrf.mxu0
    %v2378 = vadd.f32 %v2329, %v2377
    %v2379 = vpop.f32.mrf.mxu0
    %v2380 = vadd.f32 %v2331, %v2379
    %2381 = vmatmul.bf16.gmra.mxu0 %v725
    %v2382 = vpop.f32.mrf.mxu0
    %v2383 = vadd.f32 %v2334, %v2382
    %v2384 = vpop.f32.mrf.mxu0
    %v2385 = vadd.f32 %v2336, %v2384
    %2386 = vmatmul.bf16.gmra.mxu0 %v732
    %v2387 = vpop.f32.mrf.mxu0
    %v2388 = vadd.f32 %v2339, %v2387
    %v2389 = vpop.f32.mrf.mxu0
    %v2390 = vadd.f32 %v2341, %v2389
    %2391 = vmatmul.bf16.gmra.mxu0 %v739
    %v2392 = vpop.f32.mrf.mxu0
    %v2393 = vadd.f32 %v2344, %v2392
    %v2394 = vpop.f32.mrf.mxu0
    %v2395 = vadd.f32 %v2346, %v2394
    %2396 = vdwg.mxu0
    %2397 = vmatpush.bf16.msra.mxu0 %v1632
    %2398 = vmatpush.bf16.msra.mxu0 %v1628
    %2399 = vmatpush.bf16.msra.mxu0 %v1624
    %2400 = vmatpush.bf16.msra.mxu0 %v1620
    %2401 = vmatpush.bf16.msra.mxu0 %v1616
    %2402 = vmatpush.bf16.msra.mxu0 %v1612
    %2403 = vmatpush.bf16.msra.mxu0 %v1608
    %2404 = vmatpush.bf16.msra.mxu0 %v1604
    %2405 = vmatmul.bf16.gmra.mxu0 %v691
    %v2406 = vpop.f32.mrf.mxu0
    %v2407 = vadd.f32 %v2358, %v2406
    %v2408 = vpop.f32.mrf.mxu0
    %v2409 = vadd.f32 %v2360, %v2408
    %2410 = vmatmul.bf16.gmra.mxu0 %v698
    %v2411 = vpop.f32.mrf.mxu0
    %v2412 = vadd.f32 %v2363, %v2411
    %v2413 = vpop.f32.mrf.mxu0
    %v2414 = vadd.f32 %v2365, %v2413
    %2415 = vmatmul.bf16.gmra.mxu0 %v705
    %v2416 = vpop.f32.mrf.mxu0
    %v2417 = vadd.f32 %v2368, %v2416
    %v2418 = vpop.f32.mrf.mxu0
    %v2419 = vadd.f32 %v2370, %v2418
    %2420 = vmatmul.bf16.gmra.mxu0 %v712
    %v2421 = vpop.f32.mrf.mxu0
    %v2422 = vadd.f32 %v2373, %v2421
    %v2423 = vpop.f32.mrf.mxu0
    %v2424 = vadd.f32 %v2375, %v2423
    %2425 = vmatmul.bf16.gmra.mxu0 %v719
    %v2426 = vpop.f32.mrf.mxu0
    %v2427 = vadd.f32 %v2378, %v2426
    %v2428 = vpop.f32.mrf.mxu0
    %v2429 = vadd.f32 %v2380, %v2428
    %2430 = vmatmul.bf16.gmra.mxu0 %v726
    %v2431 = vpop.f32.mrf.mxu0
    %v2432 = vadd.f32 %v2383, %v2431
    %v2433 = vpop.f32.mrf.mxu0
    %v2434 = vadd.f32 %v2385, %v2433
    %2435 = vmatmul.bf16.gmra.mxu0 %v733
    %v2436 = vpop.f32.mrf.mxu0
    %v2437 = vadd.f32 %v2388, %v2436
    %v2438 = vpop.f32.mrf.mxu0
    %v2439 = vadd.f32 %v2390, %v2438
    %2440 = vmatmul.bf16.gmra.mxu0 %v740
    %v2441 = vpop.f32.mrf.mxu0
    %v2442 = vadd.f32 %v2393, %v2441
    %v2443 = vpop.f32.mrf.mxu0
    %v2444 = vadd.f32 %v2395, %v2443
    %2445 = vdwg.mxu0
    %2446 = vmatpush.bf16.msra.mxu0 %v1664
    %2447 = vmatpush.bf16.msra.mxu0 %v1660
    %2448 = vmatpush.bf16.msra.mxu0 %v1656
    %2449 = vmatpush.bf16.msra.mxu0 %v1652
    %2450 = vmatpush.bf16.msra.mxu0 %v1648
    %2451 = vmatpush.bf16.msra.mxu0 %v1644
    %2452 = vmatpush.bf16.msra.mxu0 %v1640
    %2453 = vmatpush.bf16.msra.mxu0 %v1636
    %2454 = vmatmul.bf16.gmra.mxu0 %v692
    %v2455 = vpop.f32.mrf.mxu0
    %v2456 = vadd.f32 %v2407, %v2455
    %v2457 = vpop.f32.mrf.mxu0
    %v2458 = vadd.f32 %v2409, %v2457
    %2459 = vmatmul.bf16.gmra.mxu0 %v699
    %v2460 = vpop.f32.mrf.mxu0
    %v2461 = vadd.f32 %v2412, %v2460
    %v2462 = vpop.f32.mrf.mxu0
    %v2463 = vadd.f32 %v2414, %v2462
    %2464 = vmatmul.bf16.gmra.mxu0 %v706
    %v2465 = vpop.f32.mrf.mxu0
    %v2466 = vadd.f32 %v2417, %v2465
    %v2467 = vpop.f32.mrf.mxu0
    %v2468 = vadd.f32 %v2419, %v2467
    %2469 = vmatmul.bf16.gmra.mxu0 %v713
    %v2470 = vpop.f32.mrf.mxu0
    %v2471 = vadd.f32 %v2422, %v2470
    %v2472 = vpop.f32.mrf.mxu0
    %v2473 = vadd.f32 %v2424, %v2472
    %2474 = vmatmul.bf16.gmra.mxu0 %v720
    %v2475 = vpop.f32.mrf.mxu0
    %v2476 = vadd.f32 %v2427, %v2475
    %v2477 = vpop.f32.mrf.mxu0
    %v2478 = vadd.f32 %v2429, %v2477
    %2479 = vmatmul.bf16.gmra.mxu0 %v727
    %v2480 = vpop.f32.mrf.mxu0
    %v2481 = vadd.f32 %v2432, %v2480
    %v2482 = vpop.f32.mrf.mxu0
    %v2483 = vadd.f32 %v2434, %v2482
    %2484 = vmatmul.bf16.gmra.mxu0 %v734
    %v2485 = vpop.f32.mrf.mxu0
    %v2486 = vadd.f32 %v2437, %v2485
    %v2487 = vpop.f32.mrf.mxu0
    %v2488 = vadd.f32 %v2439, %v2487
    %2489 = vmatmul.bf16.gmra.mxu0 %v741
    %v2490 = vpop.f32.mrf.mxu0
    %v2491 = vadd.f32 %v2442, %v2490
    %v2492 = vpop.f32.mrf.mxu0
    %v2493 = vadd.f32 %v2444, %v2492
    %2494 = vdwg.mxu0
    %2495 = vmatpush.bf16.msra.mxu0 %v1696
    %2496 = vmatpush.bf16.msra.mxu0 %v1692
    %2497 = vmatpush.bf16.msra.mxu0 %v1688
    %2498 = vmatpush.bf16.msra.mxu0 %v1684
    %2499 = vmatpush.bf16.msra.mxu0 %v1680
    %2500 = vmatpush.bf16.msra.mxu0 %v1676
    %2501 = vmatpush.bf16.msra.mxu0 %v1672
    %2502 = vmatpush.bf16.msra.mxu0 %v1668
    %2503 = vmatmul.bf16.gmra.mxu0 %v693
    %v2504 = vpop.f32.mrf.mxu0
    %v2505 = vadd.f32 %v2456, %v2504
    %v2506 = vpop.f32.mrf.mxu0
    %v2507 = vadd.f32 %v2458, %v2506
    %2508 = vmatmul.bf16.gmra.mxu0 %v700
    %v2509 = vpop.f32.mrf.mxu0
    %v2510 = vadd.f32 %v2461, %v2509
    %v2511 = vpop.f32.mrf.mxu0
    %v2512 = vadd.f32 %v2463, %v2511
    %2513 = vmatmul.bf16.gmra.mxu0 %v707
    %v2514 = vpop.f32.mrf.mxu0
    %v2515 = vadd.f32 %v2466, %v2514
    %v2516 = vpop.f32.mrf.mxu0
    %v2517 = vadd.f32 %v2468, %v2516
    %2518 = vmatmul.bf16.gmra.mxu0 %v714
    %v2519 = vpop.f32.mrf.mxu0
    %v2520 = vadd.f32 %v2471, %v2519
    %v2521 = vpop.f32.mrf.mxu0
    %v2522 = vadd.f32 %v2473, %v2521
    %2523 = vmatmul.bf16.gmra.mxu0 %v721
    %v2524 = vpop.f32.mrf.mxu0
    %v2525 = vadd.f32 %v2476, %v2524
    %v2526 = vpop.f32.mrf.mxu0
    %v2527 = vadd.f32 %v2478, %v2526
    %2528 = vmatmul.bf16.gmra.mxu0 %v728
    %v2529 = vpop.f32.mrf.mxu0
    %v2530 = vadd.f32 %v2481, %v2529
    %v2531 = vpop.f32.mrf.mxu0
    %v2532 = vadd.f32 %v2483, %v2531
    %2533 = vmatmul.bf16.gmra.mxu0 %v735
    %v2534 = vpop.f32.mrf.mxu0
    %v2535 = vadd.f32 %v2486, %v2534
    %v2536 = vpop.f32.mrf.mxu0
    %v2537 = vadd.f32 %v2488, %v2536
    %2538 = vmatmul.bf16.gmra.mxu0 %v742
    %v2539 = vpop.f32.mrf.mxu0
    %v2540 = vadd.f32 %v2491, %v2539
    %v2541 = vpop.f32.mrf.mxu0
    %v2542 = vadd.f32 %v2493, %v2541
    %2543 = vdwg.mxu0
    %2544 = vmatpush.bf16.msra.mxu0 %v1728
    %2545 = vmatpush.bf16.msra.mxu0 %v1724
    %2546 = vmatpush.bf16.msra.mxu0 %v1720
    %2547 = vmatpush.bf16.msra.mxu0 %v1716
    %2548 = vmatpush.bf16.msra.mxu0 %v1712
    %2549 = vmatpush.bf16.msra.mxu0 %v1708
    %2550 = vmatpush.bf16.msra.mxu0 %v1704
    %2551 = vmatpush.bf16.msra.mxu0 %v1700
    %2552 = vmatmul.bf16.gmra.mxu0 %v694
    %v2553 = vpop.f32.mrf.mxu0
    %v2554 = vadd.f32 %v2505, %v2553
    %v2555 = vpop.f32.mrf.mxu0
    %v2556 = vadd.f32 %v2507, %v2555
    %2557 = vmatmul.bf16.gmra.mxu0 %v701
    %v2558 = vpop.f32.mrf.mxu0
    %v2559 = vadd.f32 %v2510, %v2558
    %v2560 = vpop.f32.mrf.mxu0
    %v2561 = vadd.f32 %v2512, %v2560
    %2562 = vmatmul.bf16.gmra.mxu0 %v708
    %v2563 = vpop.f32.mrf.mxu0
    %v2564 = vadd.f32 %v2515, %v2563
    %v2565 = vpop.f32.mrf.mxu0
    %v2566 = vadd.f32 %v2517, %v2565
    %2567 = vmatmul.bf16.gmra.mxu0 %v715
    %v2568 = vpop.f32.mrf.mxu0
    %v2569 = vadd.f32 %v2520, %v2568
    %v2570 = vpop.f32.mrf.mxu0
    %v2571 = vadd.f32 %v2522, %v2570
    %2572 = vmatmul.bf16.gmra.mxu0 %v722
    %v2573 = vpop.f32.mrf.mxu0
    %v2574 = vadd.f32 %v2525, %v2573
    %v2575 = vpop.f32.mrf.mxu0
    %v2576 = vadd.f32 %v2527, %v2575
    %2577 = vmatmul.bf16.gmra.mxu0 %v729
    %v2578 = vpop.f32.mrf.mxu0
    %v2579 = vadd.f32 %v2530, %v2578
    %v2580 = vpop.f32.mrf.mxu0
    %v2581 = vadd.f32 %v2532, %v2580
    %2582 = vmatmul.bf16.gmra.mxu0 %v736
    %v2583 = vpop.f32.mrf.mxu0
    %v2584 = vadd.f32 %v2535, %v2583
    %v2585 = vpop.f32.mrf.mxu0
    %v2586 = vadd.f32 %v2537, %v2585
    %2587 = vmatmul.bf16.gmra.mxu0 %v743
    %v2588 = vpop.f32.mrf.mxu0
    %v2589 = vadd.f32 %v2540, %v2588
    %v2590 = vpop.f32.mrf.mxu0
    %v2591 = vadd.f32 %v2542, %v2590
    %2592 = vdwg.mxu0
    %2593 = vmatpush.bf16.msra.mxu0 0
    %2594 = vmatpush.bf16.msra.mxu0 0
    %2595 = vmatpush.bf16.msra.mxu0 0
    %2596 = vmatpush.bf16.msra.mxu0 0
    %2597 = vmatpush.bf16.msra.mxu0 0
    %2598 = vmatpush.bf16.msra.mxu0 0
    %2599 = vmatpush.bf16.msra.mxu0 0
    %2600 = vmatpush.bf16.msra.mxu0 %v1732
    %2601 = vmatmul.bf16.gmra.mxu0 %v1933
    %v2602 = vpop.f32.mrf.mxu0
    %v2603 = vadd.f32 %v2554, %v2602
    %v2604 = vpop.f32.mrf.mxu0
    %v2605 = vadd.f32 %v2556, %v2604
    %2606 = vmatmul.bf16.gmra.mxu0 %v1936
    %v2607 = vpop.f32.mrf.mxu0
    %v2608 = vadd.f32 %v2559, %v2607
    %v2609 = vpop.f32.mrf.mxu0
    %v2610 = vadd.f32 %v2561, %v2609
    %2611 = vmatmul.bf16.gmra.mxu0 %v1939
    %v2612 = vpop.f32.mrf.mxu0
    %v2613 = vadd.f32 %v2564, %v2612
    %v2614 = vpop.f32.mrf.mxu0
    %v2615 = vadd.f32 %v2566, %v2614
    %2616 = vmatmul.bf16.gmra.mxu0 %v1942
    %v2617 = vpop.f32.mrf.mxu0
    %v2618 = vadd.f32 %v2569, %v2617
    %v2619 = vpop.f32.mrf.mxu0
    %v2620 = vadd.f32 %v2571, %v2619
    %2621 = vmatmul.bf16.gmra.mxu0 %v1945
    %v2622 = vpop.f32.mrf.mxu0
    %v2623 = vadd.f32 %v2574, %v2622
    %v2624 = vpop.f32.mrf.mxu0
    %v2625 = vadd.f32 %v2576, %v2624
    %2626 = vmatmul.bf16.gmra.mxu0 %v1948
    %v2627 = vpop.f32.mrf.mxu0
    %v2628 = vadd.f32 %v2579, %v2627
    %v2629 = vpop.f32.mrf.mxu0
    %v2630 = vadd.f32 %v2581, %v2629
    %2631 = vmatmul.bf16.gmra.mxu0 %v1951
    %v2632 = vpop.f32.mrf.mxu0
    %v2633 = vadd.f32 %v2584, %v2632
    %v2634 = vpop.f32.mrf.mxu0
    %v2635 = vadd.f32 %v2586, %v2634
    %2636 = vmatmul.bf16.gmra.mxu0 %v1954
    %v2637 = vpop.f32.mrf.mxu0
    %v2638 = vadd.f32 %v2589, %v2637
    %v2639 = vpop.f32.mrf.mxu0
    %v2640 = vadd.f32 %v2591, %v2639
    %2641 = vdwg.mxu0
    %2642 = vmatpush.bf16.msra.mxu0 %v1569
    %2643 = vmatpush.bf16.msra.mxu0 %v1565
    %2644 = vmatpush.bf16.msra.mxu0 %v1561
    %2645 = vmatpush.bf16.msra.mxu0 %v1557
    %2646 = vmatpush.bf16.msra.mxu0 %v1553
    %2647 = vmatpush.bf16.msra.mxu0 %v1549
    %2648 = vmatpush.bf16.msra.mxu0 %v1545
    %2649 = vmatpush.bf16.msra.mxu0 %v1541
    %2650 = vmatmul.bf16.gmra.mxu0 %v689
    %v2651 = vpop.f32.mrf.mxu0
    %v2652 = vadd.f32 %v945, %v2651
    %v2653 = vpop.f32.mrf.mxu0
    %v2654 = vadd.f32 %v945, %v2653
    %2655 = vmatmul.bf16.gmra.mxu0 %v696
    %v2656 = vpop.f32.mrf.mxu0
    %v2657 = vadd.f32 %v945, %v2656
    %v2658 = vpop.f32.mrf.mxu0
    %v2659 = vadd.f32 %v945, %v2658
    %2660 = vmatmul.bf16.gmra.mxu0 %v703
    %v2661 = vpop.f32.mrf.mxu0
    %v2662 = vadd.f32 %v945, %v2661
    %v2663 = vpop.f32.mrf.mxu0
    %v2664 = vadd.f32 %v945, %v2663
    %2665 = vmatmul.bf16.gmra.mxu0 %v710
    %v2666 = vpop.f32.mrf.mxu0
    %v2667 = vadd.f32 %v945, %v2666
    %v2668 = vpop.f32.mrf.mxu0
    %v2669 = vadd.f32 %v945, %v2668
    %2670 = vmatmul.bf16.gmra.mxu0 %v717
    %v2671 = vpop.f32.mrf.mxu0
    %v2672 = vadd.f32 %v945, %v2671
    %v2673 = vpop.f32.mrf.mxu0
    %v2674 = vadd.f32 %v945, %v2673
    %2675 = vmatmul.bf16.gmra.mxu0 %v724
    %v2676 = vpop.f32.mrf.mxu0
    %v2677 = vadd.f32 %v945, %v2676
    %v2678 = vpop.f32.mrf.mxu0
    %v2679 = vadd.f32 %v945, %v2678
    %2680 = vmatmul.bf16.gmra.mxu0 %v731
    %v2681 = vpop.f32.mrf.mxu0
    %v2682 = vadd.f32 %v945, %v2681
    %v2683 = vpop.f32.mrf.mxu0
    %v2684 = vadd.f32 %v945, %v2683
    %2685 = vmatmul.bf16.gmra.mxu0 %v738
    %v2686 = vpop.f32.mrf.mxu0
    %v2687 = vadd.f32 %v945, %v2686
    %v2688 = vpop.f32.mrf.mxu0
    %v2689 = vadd.f32 %v945, %v2688
    %2690 = vdwg.mxu0
    %2691 = vmatpush.bf16.msra.mxu0 %v1601
    %2692 = vmatpush.bf16.msra.mxu0 %v1597
    %2693 = vmatpush.bf16.msra.mxu0 %v1593
    %2694 = vmatpush.bf16.msra.mxu0 %v1589
    %2695 = vmatpush.bf16.msra.mxu0 %v1585
    %2696 = vmatpush.bf16.msra.mxu0 %v1581
    %2697 = vmatpush.bf16.msra.mxu0 %v1577
    %2698 = vmatpush.bf16.msra.mxu0 %v1573
    %2699 = vmatmul.bf16.gmra.mxu0 %v690
    %v2700 = vpop.f32.mrf.mxu0
    %v2701 = vadd.f32 %v2652, %v2700
    %v2702 = vpop.f32.mrf.mxu0
    %v2703 = vadd.f32 %v2654, %v2702
    %2704 = vmatmul.bf16.gmra.mxu0 %v697
    %v2705 = vpop.f32.mrf.mxu0
    %v2706 = vadd.f32 %v2657, %v2705
    %v2707 = vpop.f32.mrf.mxu0
    %v2708 = vadd.f32 %v2659, %v2707
    %2709 = vmatmul.bf16.gmra.mxu0 %v704
    %v2710 = vpop.f32.mrf.mxu0
    %v2711 = vadd.f32 %v2662, %v2710
    %v2712 = vpop.f32.mrf.mxu0
    %v2713 = vadd.f32 %v2664, %v2712
    %2714 = vmatmul.bf16.gmra.mxu0 %v711
    %v2715 = vpop.f32.mrf.mxu0
    %v2716 = vadd.f32 %v2667, %v2715
    %v2717 = vpop.f32.mrf.mxu0
    %v2718 = vadd.f32 %v2669, %v2717
    %2719 = vmatmul.bf16.gmra.mxu0 %v718
    %v2720 = vpop.f32.mrf.mxu0
    %v2721 = vadd.f32 %v2672, %v2720
    %v2722 = vpop.f32.mrf.mxu0
    %v2723 = vadd.f32 %v2674, %v2722
    %2724 = vmatmul.bf16.gmra.mxu0 %v725
    %v2725 = vpop.f32.mrf.mxu0
    %v2726 = vadd.f32 %v2677, %v2725
    %v2727 = vpop.f32.mrf.mxu0
    %v2728 = vadd.f32 %v2679, %v2727
    %2729 = vmatmul.bf16.gmra.mxu0 %v732
    %v2730 = vpop.f32.mrf.mxu0
    %v2731 = vadd.f32 %v2682, %v2730
    %v2732 = vpop.f32.mrf.mxu0
    %v2733 = vadd.f32 %v2684, %v2732
    %2734 = vmatmul.bf16.gmra.mxu0 %v739
    %v2735 = vpop.f32.mrf.mxu0
    %v2736 = vadd.f32 %v2687, %v2735
    %v2737 = vpop.f32.mrf.mxu0
    %v2738 = vadd.f32 %v2689, %v2737
    %2739 = vdwg.mxu0
    %2740 = vmatpush.bf16.msra.mxu0 %v1633
    %2741 = vmatpush.bf16.msra.mxu0 %v1629
    %2742 = vmatpush.bf16.msra.mxu0 %v1625
    %2743 = vmatpush.bf16.msra.mxu0 %v1621
    %2744 = vmatpush.bf16.msra.mxu0 %v1617
    %2745 = vmatpush.bf16.msra.mxu0 %v1613
    %2746 = vmatpush.bf16.msra.mxu0 %v1609
    %2747 = vmatpush.bf16.msra.mxu0 %v1605
    %2748 = vmatmul.bf16.gmra.mxu0 %v691
    %v2749 = vpop.f32.mrf.mxu0
    %v2750 = vadd.f32 %v2701, %v2749
    %v2751 = vpop.f32.mrf.mxu0
    %v2752 = vadd.f32 %v2703, %v2751
    %2753 = vmatmul.bf16.gmra.mxu0 %v698
    %v2754 = vpop.f32.mrf.mxu0
    %v2755 = vadd.f32 %v2706, %v2754
    %v2756 = vpop.f32.mrf.mxu0
    %v2757 = vadd.f32 %v2708, %v2756
    %2758 = vmatmul.bf16.gmra.mxu0 %v705
    %v2759 = vpop.f32.mrf.mxu0
    %v2760 = vadd.f32 %v2711, %v2759
    %v2761 = vpop.f32.mrf.mxu0
    %v2762 = vadd.f32 %v2713, %v2761
    %2763 = vmatmul.bf16.gmra.mxu0 %v712
    %v2764 = vpop.f32.mrf.mxu0
    %v2765 = vadd.f32 %v2716, %v2764
    %v2766 = vpop.f32.mrf.mxu0
    %v2767 = vadd.f32 %v2718, %v2766
    %2768 = vmatmul.bf16.gmra.mxu0 %v719
    %v2769 = vpop.f32.mrf.mxu0
    %v2770 = vadd.f32 %v2721, %v2769
    %v2771 = vpop.f32.mrf.mxu0
    %v2772 = vadd.f32 %v2723, %v2771
    %2773 = vmatmul.bf16.gmra.mxu0 %v726
    %v2774 = vpop.f32.mrf.mxu0
    %v2775 = vadd.f32 %v2726, %v2774
    %v2776 = vpop.f32.mrf.mxu0
    %v2777 = vadd.f32 %v2728, %v2776
    %2778 = vmatmul.bf16.gmra.mxu0 %v733
    %v2779 = vpop.f32.mrf.mxu0
    %v2780 = vadd.f32 %v2731, %v2779
    %v2781 = vpop.f32.mrf.mxu0
    %v2782 = vadd.f32 %v2733, %v2781
    %2783 = vmatmul.bf16.gmra.mxu0 %v740
    %v2784 = vpop.f32.mrf.mxu0
    %v2785 = vadd.f32 %v2736, %v2784
    %v2786 = vpop.f32.mrf.mxu0
    %v2787 = vadd.f32 %v2738, %v2786
    %2788 = vdwg.mxu0
    %2789 = vmatpush.bf16.msra.mxu0 %v1665
    %2790 = vmatpush.bf16.msra.mxu0 %v1661
    %2791 = vmatpush.bf16.msra.mxu0 %v1657
    %2792 = vmatpush.bf16.msra.mxu0 %v1653
    %2793 = vmatpush.bf16.msra.mxu0 %v1649
    %2794 = vmatpush.bf16.msra.mxu0 %v1645
    %2795 = vmatpush.bf16.msra.mxu0 %v1641
    %2796 = vmatpush.bf16.msra.mxu0 %v1637
    %2797 = vmatmul.bf16.gmra.mxu0 %v692
    %v2798 = vpop.f32.mrf.mxu0
    %v2799 = vadd.f32 %v2750, %v2798
    %v2800 = vpop.f32.mrf.mxu0
    %v2801 = vadd.f32 %v2752, %v2800
    %2802 = vmatmul.bf16.gmra.mxu0 %v699
    %v2803 = vpop.f32.mrf.mxu0
    %v2804 = vadd.f32 %v2755, %v2803
    %v2805 = vpop.f32.mrf.mxu0
    %v2806 = vadd.f32 %v2757, %v2805
    %2807 = vmatmul.bf16.gmra.mxu0 %v706
    %v2808 = vpop.f32.mrf.mxu0
    %v2809 = vadd.f32 %v2760, %v2808
    %v2810 = vpop.f32.mrf.mxu0
    %v2811 = vadd.f32 %v2762, %v2810
    %2812 = vmatmul.bf16.gmra.mxu0 %v713
    %v2813 = vpop.f32.mrf.mxu0
    %v2814 = vadd.f32 %v2765, %v2813
    %v2815 = vpop.f32.mrf.mxu0
    %v2816 = vadd.f32 %v2767, %v2815
    %2817 = vmatmul.bf16.gmra.mxu0 %v720
    %v2818 = vpop.f32.mrf.mxu0
    %v2819 = vadd.f32 %v2770, %v2818
    %v2820 = vpop.f32.mrf.mxu0
    %v2821 = vadd.f32 %v2772, %v2820
    %2822 = vmatmul.bf16.gmra.mxu0 %v727
    %v2823 = vpop.f32.mrf.mxu0
    %v2824 = vadd.f32 %v2775, %v2823
    %v2825 = vpop.f32.mrf.mxu0
    %v2826 = vadd.f32 %v2777, %v2825
    %2827 = vmatmul.bf16.gmra.mxu0 %v734
    %v2828 = vpop.f32.mrf.mxu0
    %v2829 = vadd.f32 %v2780, %v2828
    %v2830 = vpop.f32.mrf.mxu0
    %v2831 = vadd.f32 %v2782, %v2830
    %2832 = vmatmul.bf16.gmra.mxu0 %v741
    %v2833 = vpop.f32.mrf.mxu0
    %v2834 = vadd.f32 %v2785, %v2833
    %v2835 = vpop.f32.mrf.mxu0
    %v2836 = vadd.f32 %v2787, %v2835
    %2837 = vdwg.mxu0
    %2838 = vmatpush.bf16.msra.mxu0 %v1697
    %2839 = vmatpush.bf16.msra.mxu0 %v1693
    %2840 = vmatpush.bf16.msra.mxu0 %v1689
    %2841 = vmatpush.bf16.msra.mxu0 %v1685
    %2842 = vmatpush.bf16.msra.mxu0 %v1681
    %2843 = vmatpush.bf16.msra.mxu0 %v1677
    %2844 = vmatpush.bf16.msra.mxu0 %v1673
    %2845 = vmatpush.bf16.msra.mxu0 %v1669
    %2846 = vmatmul.bf16.gmra.mxu0 %v693
    %v2847 = vpop.f32.mrf.mxu0
    %v2848 = vadd.f32 %v2799, %v2847
    %v2849 = vpop.f32.mrf.mxu0
    %v2850 = vadd.f32 %v2801, %v2849
    %2851 = vmatmul.bf16.gmra.mxu0 %v700
    %v2852 = vpop.f32.mrf.mxu0
    %v2853 = vadd.f32 %v2804, %v2852
    %v2854 = vpop.f32.mrf.mxu0
    %v2855 = vadd.f32 %v2806, %v2854
    %2856 = vmatmul.bf16.gmra.mxu0 %v707
    %v2857 = vpop.f32.mrf.mxu0
    %v2858 = vadd.f32 %v2809, %v2857
    %v2859 = vpop.f32.mrf.mxu0
    %v2860 = vadd.f32 %v2811, %v2859
    %2861 = vmatmul.bf16.gmra.mxu0 %v714
    %v2862 = vpop.f32.mrf.mxu0
    %v2863 = vadd.f32 %v2814, %v2862
    %v2864 = vpop.f32.mrf.mxu0
    %v2865 = vadd.f32 %v2816, %v2864
    %2866 = vmatmul.bf16.gmra.mxu0 %v721
    %v2867 = vpop.f32.mrf.mxu0
    %v2868 = vadd.f32 %v2819, %v2867
    %v2869 = vpop.f32.mrf.mxu0
    %v2870 = vadd.f32 %v2821, %v2869
    %2871 = vmatmul.bf16.gmra.mxu0 %v728
    %v2872 = vpop.f32.mrf.mxu0
    %v2873 = vadd.f32 %v2824, %v2872
    %v2874 = vpop.f32.mrf.mxu0
    %v2875 = vadd.f32 %v2826, %v2874
    %2876 = vmatmul.bf16.gmra.mxu0 %v735
    %v2877 = vpop.f32.mrf.mxu0
    %v2878 = vadd.f32 %v2829, %v2877
    %v2879 = vpop.f32.mrf.mxu0
    %v2880 = vadd.f32 %v2831, %v2879
    %2881 = vmatmul.bf16.gmra.mxu0 %v742
    %v2882 = vpop.f32.mrf.mxu0
    %v2883 = vadd.f32 %v2834, %v2882
    %v2884 = vpop.f32.mrf.mxu0
    %v2885 = vadd.f32 %v2836, %v2884
    %2886 = vdwg.mxu0
    %2887 = vmatpush.bf16.msra.mxu0 %v1729
    %2888 = vmatpush.bf16.msra.mxu0 %v1725
    %2889 = vmatpush.bf16.msra.mxu0 %v1721
    %2890 = vmatpush.bf16.msra.mxu0 %v1717
    %2891 = vmatpush.bf16.msra.mxu0 %v1713
    %2892 = vmatpush.bf16.msra.mxu0 %v1709
    %2893 = vmatpush.bf16.msra.mxu0 %v1705
    %2894 = vmatpush.bf16.msra.mxu0 %v1701
    %2895 = vmatmul.bf16.gmra.mxu0 %v694
    %v2896 = vpop.f32.mrf.mxu0
    %v2897 = vadd.f32 %v2848, %v2896
    %v2898 = vpop.f32.mrf.mxu0
    %v2899 = vadd.f32 %v2850, %v2898
    %2900 = vmatmul.bf16.gmra.mxu0 %v701
    %v2901 = vpop.f32.mrf.mxu0
    %v2902 = vadd.f32 %v2853, %v2901
    %v2903 = vpop.f32.mrf.mxu0
    %v2904 = vadd.f32 %v2855, %v2903
    %2905 = vmatmul.bf16.gmra.mxu0 %v708
    %v2906 = vpop.f32.mrf.mxu0
    %v2907 = vadd.f32 %v2858, %v2906
    %v2908 = vpop.f32.mrf.mxu0
    %v2909 = vadd.f32 %v2860, %v2908
    %2910 = vmatmul.bf16.gmra.mxu0 %v715
    %v2911 = vpop.f32.mrf.mxu0
    %v2912 = vadd.f32 %v2863, %v2911
    %v2913 = vpop.f32.mrf.mxu0
    %v2914 = vadd.f32 %v2865, %v2913
    %2915 = vmatmul.bf16.gmra.mxu0 %v722
    %v2916 = vpop.f32.mrf.mxu0
    %v2917 = vadd.f32 %v2868, %v2916
    %v2918 = vpop.f32.mrf.mxu0
    %v2919 = vadd.f32 %v2870, %v2918
    %2920 = vmatmul.bf16.gmra.mxu0 %v729
    %v2921 = vpop.f32.mrf.mxu0
    %v2922 = vadd.f32 %v2873, %v2921
    %v2923 = vpop.f32.mrf.mxu0
    %v2924 = vadd.f32 %v2875, %v2923
    %2925 = vmatmul.bf16.gmra.mxu0 %v736
    %v2926 = vpop.f32.mrf.mxu0
    %v2927 = vadd.f32 %v2878, %v2926
    %v2928 = vpop.f32.mrf.mxu0
    %v2929 = vadd.f32 %v2880, %v2928
    %2930 = vmatmul.bf16.gmra.mxu0 %v743
    %v2931 = vpop.f32.mrf.mxu0
    %v2932 = vadd.f32 %v2883, %v2931
    %v2933 = vpop.f32.mrf.mxu0
    %v2934 = vadd.f32 %v2885, %v2933
    %2935 = vdwg.mxu0
    %2936 = vmatpush.bf16.msra.mxu0 0
    %2937 = vmatpush.bf16.msra.mxu0 0
    %2938 = vmatpush.bf16.msra.mxu0 0
    %2939 = vmatpush.bf16.msra.mxu0 0
    %2940 = vmatpush.bf16.msra.mxu0 0
    %2941 = vmatpush.bf16.msra.mxu0 0
    %2942 = vmatpush.bf16.msra.mxu0 0
    %2943 = vmatpush.bf16.msra.mxu0 %v1733
    %2944 = vmatmul.bf16.gmra.mxu0 %v1933
    %v2945 = vpop.f32.mrf.mxu0
    %v2946 = vadd.f32 %v2897, %v2945
    %v2947 = vpop.f32.mrf.mxu0
    %v2948 = vadd.f32 %v2899, %v2947
    %2949 = vmatmul.bf16.gmra.mxu0 %v1936
    %v2950 = vpop.f32.mrf.mxu0
    %v2951 = vadd.f32 %v2902, %v2950
    %v2952 = vpop.f32.mrf.mxu0
    %v2953 = vadd.f32 %v2904, %v2952
    %2954 = vmatmul.bf16.gmra.mxu0 %v1939
    %v2955 = vpop.f32.mrf.mxu0
    %v2956 = vadd.f32 %v2907, %v2955
    %v2957 = vpop.f32.mrf.mxu0
    %v2958 = vadd.f32 %v2909, %v2957
    %2959 = vmatmul.bf16.gmra.mxu0 %v1942
    %v2960 = vpop.f32.mrf.mxu0
    %v2961 = vadd.f32 %v2912, %v2960
    %v2962 = vpop.f32.mrf.mxu0
    %v2963 = vadd.f32 %v2914, %v2962
    %2964 = vmatmul.bf16.gmra.mxu0 %v1945
    %v2965 = vpop.f32.mrf.mxu0
    %v2966 = vadd.f32 %v2917, %v2965
    %v2967 = vpop.f32.mrf.mxu0
    %v2968 = vadd.f32 %v2919, %v2967
    %2969 = vmatmul.bf16.gmra.mxu0 %v1948
    %v2970 = vpop.f32.mrf.mxu0
    %v2971 = vadd.f32 %v2922, %v2970
    %v2972 = vpop.f32.mrf.mxu0
    %v2973 = vadd.f32 %v2924, %v2972
    %2974 = vmatmul.bf16.gmra.mxu0 %v1951
    %v2975 = vpop.f32.mrf.mxu0
    %v2976 = vadd.f32 %v2927, %v2975
    %v2977 = vpop.f32.mrf.mxu0
    %v2978 = vadd.f32 %v2929, %v2977
    %2979 = vmatmul.bf16.gmra.mxu0 %v1954
    %v2980 = vpop.f32.mrf.mxu0
    %v2981 = vadd.f32 %v2932, %v2980
    %v2982 = vpop.f32.mrf.mxu0
    %v2983 = vadd.f32 %v2934, %v2982
    %2984 = vdwg.mxu0
    %2985 = vmatpush.bf16.msra.mxu0 %v1570
    %2986 = vmatpush.bf16.msra.mxu0 %v1566
    %2987 = vmatpush.bf16.msra.mxu0 %v1562
    %2988 = vmatpush.bf16.msra.mxu0 %v1558
    %2989 = vmatpush.bf16.msra.mxu0 %v1554
    %2990 = vmatpush.bf16.msra.mxu0 %v1550
    %2991 = vmatpush.bf16.msra.mxu0 %v1546
    %2992 = vmatpush.bf16.msra.mxu0 %v1542
    %2993 = vmatmul.bf16.gmra.mxu0 %v689
    %v2994 = vpop.f32.mrf.mxu0
    %v2995 = vadd.f32 %v946, %v2994
    %v2996 = vpop.f32.mrf.mxu0
    %v2997 = vadd.f32 %v946, %v2996
    %2998 = vmatmul.bf16.gmra.mxu0 %v696
    %v2999 = vpop.f32.mrf.mxu0
    %v3000 = vadd.f32 %v946, %v2999
    %v3001 = vpop.f32.mrf.mxu0
    %v3002 = vadd.f32 %v946, %v3001
    %3003 = vmatmul.bf16.gmra.mxu0 %v703
    %v3004 = vpop.f32.mrf.mxu0
    %v3005 = vadd.f32 %v946, %v3004
    %v3006 = vpop.f32.mrf.mxu0
    %v3007 = vadd.f32 %v946, %v3006
    %3008 = vmatmul.bf16.gmra.mxu0 %v710
    %v3009 = vpop.f32.mrf.mxu0
    %v3010 = vadd.f32 %v946, %v3009
    %v3011 = vpop.f32.mrf.mxu0
    %v3012 = vadd.f32 %v946, %v3011
    %3013 = vmatmul.bf16.gmra.mxu0 %v717
    %v3014 = vpop.f32.mrf.mxu0
    %v3015 = vadd.f32 %v946, %v3014
    %v3016 = vpop.f32.mrf.mxu0
    %v3017 = vadd.f32 %v946, %v3016
    %3018 = vmatmul.bf16.gmra.mxu0 %v724
    %v3019 = vpop.f32.mrf.mxu0
    %v3020 = vadd.f32 %v946, %v3019
    %v3021 = vpop.f32.mrf.mxu0
    %v3022 = vadd.f32 %v946, %v3021
    %3023 = vmatmul.bf16.gmra.mxu0 %v731
    %v3024 = vpop.f32.mrf.mxu0
    %v3025 = vadd.f32 %v946, %v3024
    %v3026 = vpop.f32.mrf.mxu0
    %v3027 = vadd.f32 %v946, %v3026
    %3028 = vmatmul.bf16.gmra.mxu0 %v738
    %v3029 = vpop.f32.mrf.mxu0
    %v3030 = vadd.f32 %v946, %v3029
    %v3031 = vpop.f32.mrf.mxu0
    %v3032 = vadd.f32 %v946, %v3031
    %3033 = vdwg.mxu0
    %3034 = vmatpush.bf16.msra.mxu0 %v1602
    %3035 = vmatpush.bf16.msra.mxu0 %v1598
    %3036 = vmatpush.bf16.msra.mxu0 %v1594
    %3037 = vmatpush.bf16.msra.mxu0 %v1590
    %3038 = vmatpush.bf16.msra.mxu0 %v1586
    %3039 = vmatpush.bf16.msra.mxu0 %v1582
    %3040 = vmatpush.bf16.msra.mxu0 %v1578
    %3041 = vmatpush.bf16.msra.mxu0 %v1574
    %3042 = vmatmul.bf16.gmra.mxu0 %v690
    %v3043 = vpop.f32.mrf.mxu0
    %v3044 = vadd.f32 %v2995, %v3043
    %v3045 = vpop.f32.mrf.mxu0
    %v3046 = vadd.f32 %v2997, %v3045
    %3047 = vmatmul.bf16.gmra.mxu0 %v697
    %v3048 = vpop.f32.mrf.mxu0
    %v3049 = vadd.f32 %v3000, %v3048
    %v3050 = vpop.f32.mrf.mxu0
    %v3051 = vadd.f32 %v3002, %v3050
    %3052 = vmatmul.bf16.gmra.mxu0 %v704
    %v3053 = vpop.f32.mrf.mxu0
    %v3054 = vadd.f32 %v3005, %v3053
    %v3055 = vpop.f32.mrf.mxu0
    %v3056 = vadd.f32 %v3007, %v3055
    %3057 = vmatmul.bf16.gmra.mxu0 %v711
    %v3058 = vpop.f32.mrf.mxu0
    %v3059 = vadd.f32 %v3010, %v3058
    %v3060 = vpop.f32.mrf.mxu0
    %v3061 = vadd.f32 %v3012, %v3060
    %3062 = vmatmul.bf16.gmra.mxu0 %v718
    %v3063 = vpop.f32.mrf.mxu0
    %v3064 = vadd.f32 %v3015, %v3063
    %v3065 = vpop.f32.mrf.mxu0
    %v3066 = vadd.f32 %v3017, %v3065
    %3067 = vmatmul.bf16.gmra.mxu0 %v725
    %v3068 = vpop.f32.mrf.mxu0
    %v3069 = vadd.f32 %v3020, %v3068
    %v3070 = vpop.f32.mrf.mxu0
    %v3071 = vadd.f32 %v3022, %v3070
    %3072 = vmatmul.bf16.gmra.mxu0 %v732
    %v3073 = vpop.f32.mrf.mxu0
    %v3074 = vadd.f32 %v3025, %v3073
    %v3075 = vpop.f32.mrf.mxu0
    %v3076 = vadd.f32 %v3027, %v3075
    %3077 = vmatmul.bf16.gmra.mxu0 %v739
    %v3078 = vpop.f32.mrf.mxu0
    %v3079 = vadd.f32 %v3030, %v3078
    %v3080 = vpop.f32.mrf.mxu0
    %v3081 = vadd.f32 %v3032, %v3080
    %3082 = vdwg.mxu0
    %3083 = vmatpush.bf16.msra.mxu0 %v1634
    %3084 = vmatpush.bf16.msra.mxu0 %v1630
    %3085 = vmatpush.bf16.msra.mxu0 %v1626
    %3086 = vmatpush.bf16.msra.mxu0 %v1622
    %3087 = vmatpush.bf16.msra.mxu0 %v1618
    %3088 = vmatpush.bf16.msra.mxu0 %v1614
    %3089 = vmatpush.bf16.msra.mxu0 %v1610
    %3090 = vmatpush.bf16.msra.mxu0 %v1606
    %3091 = vmatmul.bf16.gmra.mxu0 %v691
    %v3092 = vpop.f32.mrf.mxu0
    %v3093 = vadd.f32 %v3044, %v3092
    %v3094 = vpop.f32.mrf.mxu0
    %v3095 = vadd.f32 %v3046, %v3094
    %3096 = vmatmul.bf16.gmra.mxu0 %v698
    %v3097 = vpop.f32.mrf.mxu0
    %v3098 = vadd.f32 %v3049, %v3097
    %v3099 = vpop.f32.mrf.mxu0
    %v3100 = vadd.f32 %v3051, %v3099
    %3101 = vmatmul.bf16.gmra.mxu0 %v705
    %v3102 = vpop.f32.mrf.mxu0
    %v3103 = vadd.f32 %v3054, %v3102
    %v3104 = vpop.f32.mrf.mxu0
    %v3105 = vadd.f32 %v3056, %v3104
    %3106 = vmatmul.bf16.gmra.mxu0 %v712
    %v3107 = vpop.f32.mrf.mxu0
    %v3108 = vadd.f32 %v3059, %v3107
    %v3109 = vpop.f32.mrf.mxu0
    %v3110 = vadd.f32 %v3061, %v3109
    %3111 = vmatmul.bf16.gmra.mxu0 %v719
    %v3112 = vpop.f32.mrf.mxu0
    %v3113 = vadd.f32 %v3064, %v3112
    %v3114 = vpop.f32.mrf.mxu0
    %v3115 = vadd.f32 %v3066, %v3114
    %3116 = vmatmul.bf16.gmra.mxu0 %v726
    %v3117 = vpop.f32.mrf.mxu0
    %v3118 = vadd.f32 %v3069, %v3117
    %v3119 = vpop.f32.mrf.mxu0
    %v3120 = vadd.f32 %v3071, %v3119
    %3121 = vmatmul.bf16.gmra.mxu0 %v733
    %v3122 = vpop.f32.mrf.mxu0
    %v3123 = vadd.f32 %v3074, %v3122
    %v3124 = vpop.f32.mrf.mxu0
    %v3125 = vadd.f32 %v3076, %v3124
    %3126 = vmatmul.bf16.gmra.mxu0 %v740
    %v3127 = vpop.f32.mrf.mxu0
    %v3128 = vadd.f32 %v3079, %v3127
    %v3129 = vpop.f32.mrf.mxu0
    %v3130 = vadd.f32 %v3081, %v3129
    %3131 = vdwg.mxu0
    %3132 = vmatpush.bf16.msra.mxu0 %v1666
    %3133 = vmatpush.bf16.msra.mxu0 %v1662
    %3134 = vmatpush.bf16.msra.mxu0 %v1658
    %3135 = vmatpush.bf16.msra.mxu0 %v1654
    %3136 = vmatpush.bf16.msra.mxu0 %v1650
    %3137 = vmatpush.bf16.msra.mxu0 %v1646
    %3138 = vmatpush.bf16.msra.mxu0 %v1642
    %3139 = vmatpush.bf16.msra.mxu0 %v1638
    %3140 = vmatmul.bf16.gmra.mxu0 %v692
    %v3141 = vpop.f32.mrf.mxu0
    %v3142 = vadd.f32 %v3093, %v3141
    %v3143 = vpop.f32.mrf.mxu0
    %v3144 = vadd.f32 %v3095, %v3143
    %3145 = vmatmul.bf16.gmra.mxu0 %v699
    %v3146 = vpop.f32.mrf.mxu0
    %v3147 = vadd.f32 %v3098, %v3146
    %v3148 = vpop.f32.mrf.mxu0
    %v3149 = vadd.f32 %v3100, %v3148
    %3150 = vmatmul.bf16.gmra.mxu0 %v706
    %v3151 = vpop.f32.mrf.mxu0
    %v3152 = vadd.f32 %v3103, %v3151
    %v3153 = vpop.f32.mrf.mxu0
    %v3154 = vadd.f32 %v3105, %v3153
    %3155 = vmatmul.bf16.gmra.mxu0 %v713
    %v3156 = vpop.f32.mrf.mxu0
    %v3157 = vadd.f32 %v3108, %v3156
    %v3158 = vpop.f32.mrf.mxu0
    %v3159 = vadd.f32 %v3110, %v3158
    %3160 = vmatmul.bf16.gmra.mxu0 %v720
    %v3161 = vpop.f32.mrf.mxu0
    %v3162 = vadd.f32 %v3113, %v3161
    %v3163 = vpop.f32.mrf.mxu0
    %v3164 = vadd.f32 %v3115, %v3163
    %3165 = vmatmul.bf16.gmra.mxu0 %v727
    %v3166 = vpop.f32.mrf.mxu0
    %v3167 = vadd.f32 %v3118, %v3166
    %v3168 = vpop.f32.mrf.mxu0
    %v3169 = vadd.f32 %v3120, %v3168
    %3170 = vmatmul.bf16.gmra.mxu0 %v734
    %v3171 = vpop.f32.mrf.mxu0
    %v3172 = vadd.f32 %v3123, %v3171
    %v3173 = vpop.f32.mrf.mxu0
    %v3174 = vadd.f32 %v3125, %v3173
    %3175 = vmatmul.bf16.gmra.mxu0 %v741
    %v3176 = vpop.f32.mrf.mxu0
    %v3177 = vadd.f32 %v3128, %v3176
    %v3178 = vpop.f32.mrf.mxu0
    %v3179 = vadd.f32 %v3130, %v3178
    %3180 = vdwg.mxu0
    %3181 = vmatpush.bf16.msra.mxu0 %v1698
    %3182 = vmatpush.bf16.msra.mxu0 %v1694
    %3183 = vmatpush.bf16.msra.mxu0 %v1690
    %3184 = vmatpush.bf16.msra.mxu0 %v1686
    %3185 = vmatpush.bf16.msra.mxu0 %v1682
    %3186 = vmatpush.bf16.msra.mxu0 %v1678
    %3187 = vmatpush.bf16.msra.mxu0 %v1674
    %3188 = vmatpush.bf16.msra.mxu0 %v1670
    %3189 = vmatmul.bf16.gmra.mxu0 %v693
    %v3190 = vpop.f32.mrf.mxu0
    %v3191 = vadd.f32 %v3142, %v3190
    %v3192 = vpop.f32.mrf.mxu0
    %v3193 = vadd.f32 %v3144, %v3192
    %3194 = vmatmul.bf16.gmra.mxu0 %v700
    %v3195 = vpop.f32.mrf.mxu0
    %v3196 = vadd.f32 %v3147, %v3195
    %v3197 = vpop.f32.mrf.mxu0
    %v3198 = vadd.f32 %v3149, %v3197
    %3199 = vmatmul.bf16.gmra.mxu0 %v707
    %v3200 = vpop.f32.mrf.mxu0
    %v3201 = vadd.f32 %v3152, %v3200
    %v3202 = vpop.f32.mrf.mxu0
    %v3203 = vadd.f32 %v3154, %v3202
    %3204 = vmatmul.bf16.gmra.mxu0 %v714
    %v3205 = vpop.f32.mrf.mxu0
    %v3206 = vadd.f32 %v3157, %v3205
    %v3207 = vpop.f32.mrf.mxu0
    %v3208 = vadd.f32 %v3159, %v3207
    %3209 = vmatmul.bf16.gmra.mxu0 %v721
    %v3210 = vpop.f32.mrf.mxu0
    %v3211 = vadd.f32 %v3162, %v3210
    %v3212 = vpop.f32.mrf.mxu0
    %v3213 = vadd.f32 %v3164, %v3212
    %3214 = vmatmul.bf16.gmra.mxu0 %v728
    %v3215 = vpop.f32.mrf.mxu0
    %v3216 = vadd.f32 %v3167, %v3215
    %v3217 = vpop.f32.mrf.mxu0
    %v3218 = vadd.f32 %v3169, %v3217
    %3219 = vmatmul.bf16.gmra.mxu0 %v735
    %v3220 = vpop.f32.mrf.mxu0
    %v3221 = vadd.f32 %v3172, %v3220
    %v3222 = vpop.f32.mrf.mxu0
    %v3223 = vadd.f32 %v3174, %v3222
    %3224 = vmatmul.bf16.gmra.mxu0 %v742
    %v3225 = vpop.f32.mrf.mxu0
    %v3226 = vadd.f32 %v3177, %v3225
    %v3227 = vpop.f32.mrf.mxu0
    %v3228 = vadd.f32 %v3179, %v3227
    %3229 = vdwg.mxu0
    %3230 = vmatpush.bf16.msra.mxu0 %v1730
    %3231 = vmatpush.bf16.msra.mxu0 %v1726
    %3232 = vmatpush.bf16.msra.mxu0 %v1722
    %3233 = vmatpush.bf16.msra.mxu0 %v1718
    %3234 = vmatpush.bf16.msra.mxu0 %v1714
    %3235 = vmatpush.bf16.msra.mxu0 %v1710
    %3236 = vmatpush.bf16.msra.mxu0 %v1706
    %3237 = vmatpush.bf16.msra.mxu0 %v1702
    %3238 = vmatmul.bf16.gmra.mxu0 %v694
    %v3239 = vpop.f32.mrf.mxu0
    %v3240 = vadd.f32 %v3191, %v3239
    %v3241 = vpop.f32.mrf.mxu0
    %v3242 = vadd.f32 %v3193, %v3241
    %3243 = vmatmul.bf16.gmra.mxu0 %v701
    %v3244 = vpop.f32.mrf.mxu0
    %v3245 = vadd.f32 %v3196, %v3244
    %v3246 = vpop.f32.mrf.mxu0
    %v3247 = vadd.f32 %v3198, %v3246
    %3248 = vmatmul.bf16.gmra.mxu0 %v708
    %v3249 = vpop.f32.mrf.mxu0
    %v3250 = vadd.f32 %v3201, %v3249
    %v3251 = vpop.f32.mrf.mxu0
    %v3252 = vadd.f32 %v3203, %v3251
    %3253 = vmatmul.bf16.gmra.mxu0 %v715
    %v3254 = vpop.f32.mrf.mxu0
    %v3255 = vadd.f32 %v3206, %v3254
    %v3256 = vpop.f32.mrf.mxu0
    %v3257 = vadd.f32 %v3208, %v3256
    %3258 = vmatmul.bf16.gmra.mxu0 %v722
    %v3259 = vpop.f32.mrf.mxu0
    %v3260 = vadd.f32 %v3211, %v3259
    %v3261 = vpop.f32.mrf.mxu0
    %v3262 = vadd.f32 %v3213, %v3261
    %3263 = vmatmul.bf16.gmra.mxu0 %v729
    %v3264 = vpop.f32.mrf.mxu0
    %v3265 = vadd.f32 %v3216, %v3264
    %v3266 = vpop.f32.mrf.mxu0
    %v3267 = vadd.f32 %v3218, %v3266
    %3268 = vmatmul.bf16.gmra.mxu0 %v736
    %v3269 = vpop.f32.mrf.mxu0
    %v3270 = vadd.f32 %v3221, %v3269
    %v3271 = vpop.f32.mrf.mxu0
    %v3272 = vadd.f32 %v3223, %v3271
    %3273 = vmatmul.bf16.gmra.mxu0 %v743
    %v3274 = vpop.f32.mrf.mxu0
    %v3275 = vadd.f32 %v3226, %v3274
    %v3276 = vpop.f32.mrf.mxu0
    %v3277 = vadd.f32 %v3228, %v3276
    %3278 = vdwg.mxu0
    %3279 = vmatpush.bf16.msra.mxu0 0
    %3280 = vmatpush.bf16.msra.mxu0 0
    %3281 = vmatpush.bf16.msra.mxu0 0
    %3282 = vmatpush.bf16.msra.mxu0 0
    %3283 = vmatpush.bf16.msra.mxu0 0
    %3284 = vmatpush.bf16.msra.mxu0 0
    %3285 = vmatpush.bf16.msra.mxu0 0
    %3286 = vmatpush.bf16.msra.mxu0 %v1734
    %3287 = vmatmul.bf16.gmra.mxu0 %v1933
    %v3288 = vpop.f32.mrf.mxu0
    %v3289 = vadd.f32 %v3240, %v3288
    %v3290 = vpop.f32.mrf.mxu0
    %v3291 = vadd.f32 %v3242, %v3290
    %3292 = vmatmul.bf16.gmra.mxu0 %v1936
    %v3293 = vpop.f32.mrf.mxu0
    %v3294 = vadd.f32 %v3245, %v3293
    %v3295 = vpop.f32.mrf.mxu0
    %v3296 = vadd.f32 %v3247, %v3295
    %3297 = vmatmul.bf16.gmra.mxu0 %v1939
    %v3298 = vpop.f32.mrf.mxu0
    %v3299 = vadd.f32 %v3250, %v3298
    %v3300 = vpop.f32.mrf.mxu0
    %v3301 = vadd.f32 %v3252, %v3300
    %3302 = vmatmul.bf16.gmra.mxu0 %v1942
    %v3303 = vpop.f32.mrf.mxu0
    %v3304 = vadd.f32 %v3255, %v3303
    %v3305 = vpop.f32.mrf.mxu0
    %v3306 = vadd.f32 %v3257, %v3305
    %3307 = vmatmul.bf16.gmra.mxu0 %v1945
    %v3308 = vpop.f32.mrf.mxu0
    %v3309 = vadd.f32 %v3260, %v3308
    %v3310 = vpop.f32.mrf.mxu0
    %v3311 = vadd.f32 %v3262, %v3310
    %3312 = vmatmul.bf16.gmra.mxu0 %v1948
    %v3313 = vpop.f32.mrf.mxu0
    %v3314 = vadd.f32 %v3265, %v3313
    %v3315 = vpop.f32.mrf.mxu0
    %v3316 = vadd.f32 %v3267, %v3315
    %3317 = vmatmul.bf16.gmra.mxu0 %v1951
    %v3318 = vpop.f32.mrf.mxu0
    %v3319 = vadd.f32 %v3270, %v3318
    %v3320 = vpop.f32.mrf.mxu0
    %v3321 = vadd.f32 %v3272, %v3320
    %3322 = vmatmul.bf16.gmra.mxu0 %v1954
    %v3323 = vpop.f32.mrf.mxu0
    %v3324 = vadd.f32 %v3275, %v3323
    %v3325 = vpop.f32.mrf.mxu0
    %v3326 = vadd.f32 %v3277, %v3325
    %3327 = vdwg.mxu0
    %v3328 = vmax.f32 %v2260, 0.0
    %v3329 = vmax.f32 %v2603, 0.0
    %v3330 = vmax.f32 %v2946, 0.0
    %v3331 = vmax.f32 %v3289, 0.0
    %v3332 = vmax.f32 %v2262, 0.0
    %v3333 = vmax.f32 %v2605, 0.0
    %v3334 = vmax.f32 %v2948, 0.0
    %v3335 = vmax.f32 %v3291, 0.0
    %v3336 = vmax.f32 %v2265, 0.0
    %v3337 = vmax.f32 %v2608, 0.0
    %v3338 = vmax.f32 %v2951, 0.0
    %v3339 = vmax.f32 %v3294, 0.0
    %v3340 = vmax.f32 %v2267, 0.0
    %v3341 = vmax.f32 %v2610, 0.0
    %v3342 = vmax.f32 %v2953, 0.0
    %v3343 = vmax.f32 %v3296, 0.0
    %v3344 = vmax.f32 %v2270, 0.0
    %v3345 = vmax.f32 %v2613, 0.0
    %v3346 = vmax.f32 %v2956, 0.0
    %v3347 = vmax.f32 %v3299, 0.0
    %v3348 = vmax.f32 %v2272, 0.0
    %v3349 = vmax.f32 %v2615, 0.0
    %v3350 = vmax.f32 %v2958, 0.0
    %v3351 = vmax.f32 %v3301, 0.0
    %v3352 = vmax.f32 %v2275, 0.0
    %v3353 = vmax.f32 %v2618, 0.0
    %v3354 = vmax.f32 %v2961, 0.0
    %v3355 = vmax.f32 %v3304, 0.0
    %v3356 = vmax.f32 %v2277, 0.0
    %v3357 = vmax.f32 %v2620, 0.0
    %v3358 = vmax.f32 %v2963, 0.0
    %v3359 = vmax.f32 %v3306, 0.0
    %v3360 = vmax.f32 %v2280, 0.0
    %v3361 = vmax.f32 %v2623, 0.0
    %v3362 = vmax.f32 %v2966, 0.0
    %v3363 = vmax.f32 %v3309, 0.0
    %v3364 = vmax.f32 %v2282, 0.0
    %v3365 = vmax.f32 %v2625, 0.0
    %v3366 = vmax.f32 %v2968, 0.0
    %v3367 = vmax.f32 %v3311, 0.0
    %v3368 = vmax.f32 %v2285, 0.0
    %v3369 = vmax.f32 %v2628, 0.0
    %v3370 = vmax.f32 %v2971, 0.0
    %v3371 = vmax.f32 %v3314, 0.0
    %v3372 = vmax.f32 %v2287, 0.0
    %v3373 = vmax.f32 %v2630, 0.0
    %v3374 = vmax.f32 %v2973, 0.0
    %v3375 = vmax.f32 %v3316, 0.0
    %v3376 = vmax.f32 %v2290, 0.0
    %v3377 = vmax.f32 %v2633, 0.0
    %v3378 = vmax.f32 %v2976, 0.0
    %v3379 = vmax.f32 %v3319, 0.0
    %v3380 = vmax.f32 %v2292, 0.0
    %v3381 = vmax.f32 %v2635, 0.0
    %v3382 = vmax.f32 %v2978, 0.0
    %v3383 = vmax.f32 %v3321, 0.0
    %v3384 = vmax.f32 %v2295, 0.0
    %v3385 = vmax.f32 %v2638, 0.0
    %v3386 = vmax.f32 %v2981, 0.0
    %v3387 = vmax.f32 %v3324, 0.0
    %v3388 = vmax.f32 %v2297, 0.0
    %v3389 = vmax.f32 %v2640, 0.0
    %v3390 = vmax.f32 %v2983, 0.0
    %v3391 = vmax.f32 %v3326, 0.0
    %v3392 = vpack.c.bf16 %v3332, %v3328
    %v3393 = vpack.c.bf16 %v3333, %v3329
    %v3394 = vpack.c.bf16 %v3334, %v3330
    %v3395 = vpack.c.bf16 %v3335, %v3331
    %v3396 = vpack.c.bf16 %v3340, %v3336
    %v3397 = vpack.c.bf16 %v3341, %v3337
    %v3398 = vpack.c.bf16 %v3342, %v3338
    %v3399 = vpack.c.bf16 %v3343, %v3339
    %v3400 = vpack.c.bf16 %v3348, %v3344
    %v3401 = vpack.c.bf16 %v3349, %v3345
    %v3402 = vpack.c.bf16 %v3350, %v3346
    %v3403 = vpack.c.bf16 %v3351, %v3347
    %v3404 = vpack.c.bf16 %v3356, %v3352
    %v3405 = vpack.c.bf16 %v3357, %v3353
    %v3406 = vpack.c.bf16 %v3358, %v3354
    %v3407 = vpack.c.bf16 %v3359, %v3355
    %v3408 = vpack.c.bf16 %v3364, %v3360
    %v3409 = vpack.c.bf16 %v3365, %v3361
    %v3410 = vpack.c.bf16 %v3366, %v3362
    %v3411 = vpack.c.bf16 %v3367, %v3363
    %v3412 = vpack.c.bf16 %v3372, %v3368
    %v3413 = vpack.c.bf16 %v3373, %v3369
    %v3414 = vpack.c.bf16 %v3374, %v3370
    %v3415 = vpack.c.bf16 %v3375, %v3371
    %v3416 = vpack.c.bf16 %v3380, %v3376
    %v3417 = vpack.c.bf16 %v3381, %v3377
    %v3418 = vpack.c.bf16 %v3382, %v3378
    %v3419 = vpack.c.bf16 %v3383, %v3379
    %v3420 = vpack.c.bf16 %v3388, %v3384
    %v3421 = vpack.c.bf16 %v3389, %v3385
    %v3422 = vpack.c.bf16 %v3390, %v3386
    %v3423 = vpack.c.bf16 %v3391, %v3387
    %v3424 = vld [vmem:[#allocation4] sm:$0xff]
    %v3425 = vld [vmem:[#allocation4 + $0x8] sm:$0xff]
    %v3426 = vld [vmem:[#allocation4 + $0x10] sm:$0xff]
    %v3427 = vld [vmem:[#allocation4 + $0x18] sm:$0xff]
    %v3428 = vld [vmem:[#allocation4 + $0x20] sm:$0xff]
    %v3429 = vld [vmem:[#allocation4 + $0x28] sm:$0xff]
    %v3430 = vld [vmem:[#allocation4 + $0x30] sm:$0xff]
    %v3431 = vld [vmem:[#allocation4 + $0x38] sm:$0xff]
    %v3432 = vld [vmem:[#allocation4 + $0x40] sm:$0xff]
    %v3433 = vld [vmem:[#allocation4 + $0x48] sm:$0xff]
    %v3434 = vld [vmem:[#allocation4 + $0x50] sm:$0xff]
    %v3435 = vld [vmem:[#allocation4 + $0x58] sm:$0xff]
    %v3436 = vld [vmem:[#allocation4 + $0x60] sm:$0xff]
    %v3437 = vld [vmem:[#allocation4 + $0x68] sm:$0xff]
    %v3438 = vld [vmem:[#allocation4 + $0x70] sm:$0xff]
    %v3439 = vld [vmem:[#allocation4 + $0x78] sm:$0xff]
    %v3440 = vld [vmem:[#allocation4 + $0x80] sm:$0xff]
    %v3441 = vld [vmem:[#allocation4 + $0x88] sm:$0xff]
    %v3442 = vld [vmem:[#allocation4 + $0x90] sm:$0xff]
    %v3443 = vld [vmem:[#allocation4 + $0x98] sm:$0xff]
    %v3444 = vld [vmem:[#allocation4 + $0xa0] sm:$0xff]
    %v3445 = vld [vmem:[#allocation4 + $0xa8] sm:$0xff]
    %v3446 = vld [vmem:[#allocation4 + $0xb0] sm:$0xff]
    %v3447 = vld [vmem:[#allocation4 + $0xb8] sm:$0xff]
    %v3448 = vld [vmem:[#allocation4 + $0xc0] sm:$0xff]
    %v3449 = vld [vmem:[#allocation4 + $0xc8] sm:$0xff]
    %v3450 = vld [vmem:[#allocation4 + $0xd0] sm:$0xff]
    %v3451 = vld [vmem:[#allocation4 + $0xd8] sm:$0xff]
    %v3452 = vld [vmem:[#allocation4 + $0xe0] sm:$0xff]
    %v3453 = vld [vmem:[#allocation4 + $0xe8] sm:$0xff]
    %v3454 = vld [vmem:[#allocation4 + $0xf0] sm:$0xff]
    %v3455 = vld [vmem:[#allocation4 + $0xf8] sm:$0xff]
    %v3456 = vld [vmem:[#allocation4 + $0x100] sm:$0xff]
    %v3457 = vld [vmem:[#allocation4 + $0x108] sm:$0xff]
    %v3458 = vld [vmem:[#allocation4 + $0x110] sm:$0xff]
    %v3459 = vld [vmem:[#allocation4 + $0x118] sm:$0xff]
    %v3460 = vld [vmem:[#allocation4 + $0x120] sm:$0xff]
    %v3461 = vld [vmem:[#allocation4 + $0x128] sm:$0xff]
    %v3462 = vld [vmem:[#allocation4 + $0x130] sm:$0xff]
    %v3463 = vld [vmem:[#allocation4 + $0x138] sm:$0xff]
    %v3464 = vld [vmem:[#allocation4 + $0x140] sm:$0xff]
    %v3465 = vld [vmem:[#allocation4 + $0x148] sm:$0xff]
    %v3466 = vld [vmem:[#allocation4 + $0x150] sm:$0xff]
    %v3467 = vld [vmem:[#allocation4 + $0x158] sm:$0xff]
    %v3468 = vld [vmem:[#allocation4 + $0x160] sm:$0xff]
    %v3469 = vld [vmem:[#allocation4 + $0x168] sm:$0xff]
    %v3470 = vld [vmem:[#allocation4 + $0x170] sm:$0xff]
    %v3471 = vld [vmem:[#allocation4 + $0x178] sm:$0xff]
    %v3472 = vld [vmem:[#allocation4 + $0x180] sm:$0xff]
    %v3473 = vld [vmem:[#allocation4 + $0x188] sm:$0xff]
    %v3474 = vld [vmem:[#allocation4 + $0x190] sm:$0xff]
    %v3475 = vld [vmem:[#allocation4 + $0x198] sm:$0xff]
    %v3476 = vld [vmem:[#allocation4 + $0x1a0] sm:$0xff]
    %v3477 = vld [vmem:[#allocation4 + $0x1a8] sm:$0xff]
    %v3478 = vld [vmem:[#allocation4 + $0x1b0] sm:$0xff]
    %v3479 = vld [vmem:[#allocation4 + $0x1b8] sm:$0xff]
    %v3480 = vld [vmem:[#allocation4 + $0x1c0] sm:$0xff]
    %v3481 = vld [vmem:[#allocation4 + $0x1c8] sm:$0xff]
    %v3482 = vld [vmem:[#allocation4 + $0x1d0] sm:$0xff]
    %v3483 = vld [vmem:[#allocation4 + $0x1d8] sm:$0xff]
    %v3484 = vld [vmem:[#allocation4 + $0x1e0] sm:$0xff]
    %v3485 = vld [vmem:[#allocation4 + $0x1e8] sm:$0xff]
    %v3486 = vld [vmem:[#allocation4 + $0x1f0] sm:$0xff]
    %v3487 = vld [vmem:[#allocation4 + $0x1f8] sm:$0xff]
    %v3488 = vld [vmem:[#allocation4 + $0x200] sm:$0xff]
    %v3489 = vld [vmem:[#allocation4 + $0x208] sm:$0xff]
    %v3490 = vld [vmem:[#allocation4 + $0x210] sm:$0xff]
    %v3491 = vld [vmem:[#allocation4 + $0x218] sm:$0xff]
    %v3492 = vld [vmem:[#allocation4 + $0x220] sm:$0xff]
    %v3493 = vld [vmem:[#allocation4 + $0x228] sm:$0xff]
    %v3494 = vld [vmem:[#allocation4 + $0x230] sm:$0xff]
    %v3495 = vld [vmem:[#allocation4 + $0x238] sm:$0xff]
    %v3496 = vld [vmem:[#allocation4 + $0x240] sm:$0xff]
    %v3497 = vld [vmem:[#allocation4 + $0x248] sm:$0xff]
    %v3498 = vld [vmem:[#allocation4 + $0x250] sm:$0xff]
    %v3499 = vld [vmem:[#allocation4 + $0x258] sm:$0xff]
    %v3500 = vld [vmem:[#allocation4 + $0x260] sm:$0xff]
    %v3501 = vld [vmem:[#allocation4 + $0x268] sm:$0xff]
    %v3502 = vld [vmem:[#allocation4 + $0x270] sm:$0xff]
    %v3503 = vld [vmem:[#allocation4 + $0x278] sm:$0xff]
    %v3504 = vld [vmem:[#allocation4 + $0x280] sm:$0xff]
    %v3505 = vld [vmem:[#allocation4 + $0x288] sm:$0xff]
    %v3506 = vld [vmem:[#allocation4 + $0x290] sm:$0xff]
    %v3507 = vld [vmem:[#allocation4 + $0x298] sm:$0xff]
    %v3508 = vld [vmem:[#allocation4 + $0x2a0] sm:$0xff]
    %v3509 = vld [vmem:[#allocation4 + $0x2a8] sm:$0xff]
    %v3510 = vld [vmem:[#allocation4 + $0x2b0] sm:$0xff]
    %v3511 = vld [vmem:[#allocation4 + $0x2b8] sm:$0xff]
    %v3512 = vld [vmem:[#allocation4 + $0x2c0] sm:$0xff]
    %v3513 = vld [vmem:[#allocation4 + $0x2c8] sm:$0xff]
    %v3514 = vld [vmem:[#allocation4 + $0x2d0] sm:$0xff]
    %v3515 = vld [vmem:[#allocation4 + $0x2d8] sm:$0xff]
    %v3516 = vld [vmem:[#allocation4 + $0x2e0] sm:$0xff]
    %v3517 = vld [vmem:[#allocation4 + $0x2e8] sm:$0xff]
    %v3518 = vld [vmem:[#allocation4 + $0x2f0] sm:$0xff]
    %v3519 = vld [vmem:[#allocation4 + $0x2f8] sm:$0xff]
    %v3520 = vld [vmem:[#allocation4 + $0x300] sm:$0xff]
    %v3521 = vld [vmem:[#allocation4 + $0x308] sm:$0xff]
    %v3522 = vld [vmem:[#allocation4 + $0x310] sm:$0xff]
    %v3523 = vld [vmem:[#allocation4 + $0x318] sm:$0xff]
    %v3524 = vld [vmem:[#allocation4 + $0x320] sm:$0xff]
    %v3525 = vld [vmem:[#allocation4 + $0x328] sm:$0xff]
    %v3526 = vld [vmem:[#allocation4 + $0x330] sm:$0xff]
    %v3527 = vld [vmem:[#allocation4 + $0x338] sm:$0xff]
    %v3528 = vld [vmem:[#allocation4 + $0x340] sm:$0xff]
    %v3529 = vld [vmem:[#allocation4 + $0x348] sm:$0xff]
    %v3530 = vld [vmem:[#allocation4 + $0x350] sm:$0xff]
    %v3531 = vld [vmem:[#allocation4 + $0x358] sm:$0xff]
    %v3532 = vld [vmem:[#allocation4 + $0x360] sm:$0xff]
    %v3533 = vld [vmem:[#allocation4 + $0x368] sm:$0xff]
    %v3534 = vld [vmem:[#allocation4 + $0x370] sm:$0xff]
    %v3535 = vld [vmem:[#allocation4 + $0x378] sm:$0xff]
    %v3536 = vld [vmem:[#allocation4 + $0x380] sm:$0xff]
    %v3537 = vld [vmem:[#allocation4 + $0x388] sm:$0xff]
    %v3538 = vld [vmem:[#allocation4 + $0x390] sm:$0xff]
    %v3539 = vld [vmem:[#allocation4 + $0x398] sm:$0xff]
    %v3540 = vld [vmem:[#allocation4 + $0x3a0] sm:$0xff]
    %v3541 = vld [vmem:[#allocation4 + $0x3a8] sm:$0xff]
    %v3542 = vld [vmem:[#allocation4 + $0x3b0] sm:$0xff]
    %v3543 = vld [vmem:[#allocation4 + $0x3b8] sm:$0xff]
    %v3544 = vld [vmem:[#allocation4 + $0x3c0] sm:$0xff]
    %v3545 = vld [vmem:[#allocation4 + $0x3c8] sm:$0xff]
    %v3546 = vld [vmem:[#allocation4 + $0x3d0] sm:$0xff]
    %v3547 = vld [vmem:[#allocation4 + $0x3d8] sm:$0xff]
    %v3548 = vld [vmem:[#allocation4 + $0x3e0] sm:$0xff]
    %v3549 = vld [vmem:[#allocation4 + $0x3e8] sm:$0xff]
    %v3550 = vld [vmem:[#allocation4 + $0x3f0] sm:$0xff]
    %v3551 = vld [vmem:[#allocation4 + $0x3f8] sm:$0xff]
    %v3552 = vld [vmem:[%s4] sm:$0xf]
    %v3554 = vperm.slane %v3552, 0
    %v3555 = vperm.slane %v3552, 1
    %v3556 = vperm.slane %v3552, 2
    %v3557 = vperm.slane %v3552, 3
    %v3690 = vunpack.c.l.b16 %v3424
    %v3691 = vunpack.c.h.b16 %v3424
    %v3692 = vunpack.c.l.b16 %v3425
    %v3693 = vunpack.c.h.b16 %v3425
    %v3694 = vunpack.c.l.b16 %v3426
    %v3695 = vunpack.c.h.b16 %v3426
    %v3696 = vunpack.c.l.b16 %v3427
    %v3697 = vunpack.c.h.b16 %v3427
    %v3698 = vunpack.c.l.b16 %v3428
    %v3699 = vunpack.c.h.b16 %v3428
    %v3700 = vunpack.c.l.b16 %v3429
    %v3701 = vunpack.c.h.b16 %v3429
    %v3702 = vunpack.c.l.b16 %v3430
    %v3703 = vunpack.c.h.b16 %v3430
    %v3704 = vunpack.c.l.b16 %v3431
    %v3705 = vunpack.c.h.b16 %v3431
    %v3706 = vunpack.c.l.b16 %v3432
    %v3707 = vunpack.c.h.b16 %v3432
    %v3708 = vunpack.c.l.b16 %v3433
    %v3709 = vunpack.c.h.b16 %v3433
    %v3710 = vunpack.c.l.b16 %v3434
    %v3711 = vunpack.c.h.b16 %v3434
    %v3712 = vunpack.c.l.b16 %v3435
    %v3713 = vunpack.c.h.b16 %v3435
    %v3714 = vunpack.c.l.b16 %v3436
    %v3715 = vunpack.c.h.b16 %v3436
    %v3716 = vunpack.c.l.b16 %v3437
    %v3717 = vunpack.c.h.b16 %v3437
    %v3718 = vunpack.c.l.b16 %v3438
    %v3719 = vunpack.c.h.b16 %v3438
    %v3720 = vunpack.c.l.b16 %v3439
    %v3721 = vunpack.c.h.b16 %v3439
    %v3722 = vunpack.c.l.b16 %v3440
    %v3723 = vunpack.c.h.b16 %v3440
    %v3724 = vunpack.c.l.b16 %v3441
    %v3725 = vunpack.c.h.b16 %v3441
    %v3726 = vunpack.c.l.b16 %v3442
    %v3727 = vunpack.c.h.b16 %v3442
    %v3728 = vunpack.c.l.b16 %v3443
    %v3729 = vunpack.c.h.b16 %v3443
    %v3730 = vunpack.c.l.b16 %v3444
    %v3731 = vunpack.c.h.b16 %v3444
    %v3732 = vunpack.c.l.b16 %v3445
    %v3733 = vunpack.c.h.b16 %v3445
    %v3734 = vunpack.c.l.b16 %v3446
    %v3735 = vunpack.c.h.b16 %v3446
    %v3736 = vunpack.c.l.b16 %v3447
    %v3737 = vunpack.c.h.b16 %v3447
    %v3738 = vunpack.c.l.b16 %v3448
    %v3739 = vunpack.c.h.b16 %v3448
    %v3740 = vunpack.c.l.b16 %v3449
    %v3741 = vunpack.c.h.b16 %v3449
    %v3742 = vunpack.c.l.b16 %v3450
    %v3743 = vunpack.c.h.b16 %v3450
    %v3744 = vunpack.c.l.b16 %v3451
    %v3745 = vunpack.c.h.b16 %v3451
    %v3746 = vunpack.c.l.b16 %v3452
    %v3747 = vunpack.c.h.b16 %v3452
    %v3748 = vunpack.c.l.b16 %v3453
    %v3749 = vunpack.c.h.b16 %v3453
    %v3750 = vunpack.c.l.b16 %v3454
    %v3751 = vunpack.c.h.b16 %v3454
    %v3752 = vunpack.c.l.b16 %v3455
    %v3753 = vunpack.c.h.b16 %v3455
    %v3754 = vunpack.c.l.b16 %v3456
    %v3755 = vunpack.c.h.b16 %v3456
    %v3756 = vunpack.c.l.b16 %v3457
    %v3757 = vunpack.c.h.b16 %v3457
    %v3758 = vunpack.c.l.b16 %v3458
    %v3759 = vunpack.c.h.b16 %v3458
    %v3760 = vunpack.c.l.b16 %v3459
    %v3761 = vunpack.c.h.b16 %v3459
    %v3762 = vunpack.c.l.b16 %v3460
    %v3763 = vunpack.c.h.b16 %v3460
    %v3764 = vunpack.c.l.b16 %v3461
    %v3765 = vunpack.c.h.b16 %v3461
    %v3766 = vunpack.c.l.b16 %v3462
    %v3767 = vunpack.c.h.b16 %v3462
    %v3768 = vunpack.c.l.b16 %v3463
    %v3769 = vunpack.c.h.b16 %v3463
    %v3770 = vunpack.c.l.b16 %v3464
    %v3771 = vunpack.c.h.b16 %v3464
    %v3772 = vunpack.c.l.b16 %v3465
    %v3773 = vunpack.c.h.b16 %v3465
    %v3774 = vunpack.c.l.b16 %v3466
    %v3775 = vunpack.c.h.b16 %v3466
    %v3776 = vunpack.c.l.b16 %v3467
    %v3777 = vunpack.c.h.b16 %v3467
    %v3778 = vunpack.c.l.b16 %v3468
    %v3779 = vunpack.c.h.b16 %v3468
    %v3780 = vunpack.c.l.b16 %v3469
    %v3781 = vunpack.c.h.b16 %v3469
    %v3782 = vunpack.c.l.b16 %v3470
    %v3783 = vunpack.c.h.b16 %v3470
    %v3784 = vunpack.c.l.b16 %v3471
    %v3785 = vunpack.c.h.b16 %v3471
    %v3786 = vunpack.c.l.b16 %v3472
    %v3787 = vunpack.c.h.b16 %v3472
    %v3788 = vunpack.c.l.b16 %v3473
    %v3789 = vunpack.c.h.b16 %v3473
    %v3790 = vunpack.c.l.b16 %v3474
    %v3791 = vunpack.c.h.b16 %v3474
    %v3792 = vunpack.c.l.b16 %v3475
    %v3793 = vunpack.c.h.b16 %v3475
    %v3794 = vunpack.c.l.b16 %v3476
    %v3795 = vunpack.c.h.b16 %v3476
    %v3796 = vunpack.c.l.b16 %v3477
    %v3797 = vunpack.c.h.b16 %v3477
    %v3798 = vunpack.c.l.b16 %v3478
    %v3799 = vunpack.c.h.b16 %v3478
    %v3800 = vunpack.c.l.b16 %v3479
    %v3801 = vunpack.c.h.b16 %v3479
    %v3802 = vunpack.c.l.b16 %v3480
    %v3803 = vunpack.c.h.b16 %v3480
    %v3804 = vunpack.c.l.b16 %v3481
    %v3805 = vunpack.c.h.b16 %v3481
    %v3806 = vunpack.c.l.b16 %v3482
    %v3807 = vunpack.c.h.b16 %v3482
    %v3808 = vunpack.c.l.b16 %v3483
    %v3809 = vunpack.c.h.b16 %v3483
    %v3810 = vunpack.c.l.b16 %v3484
    %v3811 = vunpack.c.h.b16 %v3484
    %v3812 = vunpack.c.l.b16 %v3485
    %v3813 = vunpack.c.h.b16 %v3485
    %v3814 = vunpack.c.l.b16 %v3486
    %v3815 = vunpack.c.h.b16 %v3486
    %v3816 = vunpack.c.l.b16 %v3487
    %v3817 = vunpack.c.h.b16 %v3487
    %v3818 = vunpack.c.l.b16 %v3488
    %v3819 = vunpack.c.h.b16 %v3488
    %v3820 = vunpack.c.l.b16 %v3489
    %v3821 = vunpack.c.h.b16 %v3489
    %v3822 = vunpack.c.l.b16 %v3490
    %v3823 = vunpack.c.h.b16 %v3490
    %v3824 = vunpack.c.l.b16 %v3491
    %v3825 = vunpack.c.h.b16 %v3491
    %v3826 = vunpack.c.l.b16 %v3492
    %v3827 = vunpack.c.h.b16 %v3492
    %v3828 = vunpack.c.l.b16 %v3493
    %v3829 = vunpack.c.h.b16 %v3493
    %v3830 = vunpack.c.l.b16 %v3494
    %v3831 = vunpack.c.h.b16 %v3494
    %v3832 = vunpack.c.l.b16 %v3495
    %v3833 = vunpack.c.h.b16 %v3495
    %v3834 = vunpack.c.l.b16 %v3496
    %v3835 = vunpack.c.h.b16 %v3496
    %v3836 = vunpack.c.l.b16 %v3497
    %v3837 = vunpack.c.h.b16 %v3497
    %v3838 = vunpack.c.l.b16 %v3498
    %v3839 = vunpack.c.h.b16 %v3498
    %v3840 = vunpack.c.l.b16 %v3499
    %v3841 = vunpack.c.h.b16 %v3499
    %v3842 = vunpack.c.l.b16 %v3500
    %v3843 = vunpack.c.h.b16 %v3500
    %v3844 = vunpack.c.l.b16 %v3501
    %v3845 = vunpack.c.h.b16 %v3501
    %v3846 = vunpack.c.l.b16 %v3502
    %v3847 = vunpack.c.h.b16 %v3502
    %v3848 = vunpack.c.l.b16 %v3503
    %v3849 = vunpack.c.h.b16 %v3503
    %v3850 = vunpack.c.l.b16 %v3504
    %v3851 = vunpack.c.h.b16 %v3504
    %v3852 = vunpack.c.l.b16 %v3505
    %v3853 = vunpack.c.h.b16 %v3505
    %v3854 = vunpack.c.l.b16 %v3506
    %v3855 = vunpack.c.h.b16 %v3506
    %v3856 = vunpack.c.l.b16 %v3507
    %v3857 = vunpack.c.h.b16 %v3507
    %v3858 = vunpack.c.l.b16 %v3508
    %v3859 = vunpack.c.h.b16 %v3508
    %v3860 = vunpack.c.l.b16 %v3509
    %v3861 = vunpack.c.h.b16 %v3509
    %v3862 = vunpack.c.l.b16 %v3510
    %v3863 = vunpack.c.h.b16 %v3510
    %v3864 = vunpack.c.l.b16 %v3511
    %v3865 = vunpack.c.h.b16 %v3511
    %v3866 = vunpack.c.l.b16 %v3512
    %v3867 = vunpack.c.h.b16 %v3512
    %v3868 = vunpack.c.l.b16 %v3513
    %v3869 = vunpack.c.h.b16 %v3513
    %v3870 = vunpack.c.l.b16 %v3514
    %v3871 = vunpack.c.h.b16 %v3514
    %v3872 = vunpack.c.l.b16 %v3515
    %v3873 = vunpack.c.h.b16 %v3515
    %v3874 = vunpack.c.l.b16 %v3516
    %v3875 = vunpack.c.h.b16 %v3516
    %v3876 = vunpack.c.l.b16 %v3517
    %v3877 = vunpack.c.h.b16 %v3517
    %v3878 = vunpack.c.l.b16 %v3518
    %v3879 = vunpack.c.h.b16 %v3518
    %v3880 = vunpack.c.l.b16 %v3519
    %v3881 = vunpack.c.h.b16 %v3519
    %v3882 = vunpack.c.l.b16 %v3520
    %v3883 = vunpack.c.h.b16 %v3520
    %v3884 = vunpack.c.l.b16 %v3521
    %v3885 = vunpack.c.h.b16 %v3521
    %v3886 = vunpack.c.l.b16 %v3522
    %v3887 = vunpack.c.h.b16 %v3522
    %v3888 = vunpack.c.l.b16 %v3523
    %v3889 = vunpack.c.h.b16 %v3523
    %v3890 = vunpack.c.l.b16 %v3524
    %v3891 = vunpack.c.h.b16 %v3524
    %v3892 = vunpack.c.l.b16 %v3525
    %v3893 = vunpack.c.h.b16 %v3525
    %v3894 = vunpack.c.l.b16 %v3526
    %v3895 = vunpack.c.h.b16 %v3526
    %v3896 = vunpack.c.l.b16 %v3527
    %v3897 = vunpack.c.h.b16 %v3527
    %v3898 = vunpack.c.l.b16 %v3528
    %v3899 = vunpack.c.h.b16 %v3528
    %v3900 = vunpack.c.l.b16 %v3529
    %v3901 = vunpack.c.h.b16 %v3529
    %v3902 = vunpack.c.l.b16 %v3530
    %v3903 = vunpack.c.h.b16 %v3530
    %v3904 = vunpack.c.l.b16 %v3531
    %v3905 = vunpack.c.h.b16 %v3531
    %v3906 = vunpack.c.l.b16 %v3532
    %v3907 = vunpack.c.h.b16 %v3532
    %v3908 = vunpack.c.l.b16 %v3533
    %v3909 = vunpack.c.h.b16 %v3533
    %v3910 = vunpack.c.l.b16 %v3534
    %v3911 = vunpack.c.h.b16 %v3534
    %v3912 = vunpack.c.l.b16 %v3535
    %v3913 = vunpack.c.h.b16 %v3535
    %v3914 = vunpack.c.l.b16 %v3536
    %v3915 = vunpack.c.h.b16 %v3536
    %v3916 = vunpack.c.l.b16 %v3537
    %v3917 = vunpack.c.h.b16 %v3537
    %v3918 = vunpack.c.l.b16 %v3538
    %v3919 = vunpack.c.h.b16 %v3538
    %v3920 = vunpack.c.l.b16 %v3539
    %v3921 = vunpack.c.h.b16 %v3539
    %v3922 = vunpack.c.l.b16 %v3540
    %v3923 = vunpack.c.h.b16 %v3540
    %v3924 = vunpack.c.l.b16 %v3541
    %v3925 = vunpack.c.h.b16 %v3541
    %v3926 = vunpack.c.l.b16 %v3542
    %v3927 = vunpack.c.h.b16 %v3542
    %v3928 = vunpack.c.l.b16 %v3543
    %v3929 = vunpack.c.h.b16 %v3543
    %v3930 = vunpack.c.l.b16 %v3544
    %v3931 = vunpack.c.h.b16 %v3544
    %v3932 = vunpack.c.l.b16 %v3545
    %v3933 = vunpack.c.h.b16 %v3545
    %v3934 = vunpack.c.l.b16 %v3546
    %v3935 = vunpack.c.h.b16 %v3546
    %v3936 = vunpack.c.l.b16 %v3547
    %v3937 = vunpack.c.h.b16 %v3547
    %v3938 = vunpack.c.l.b16 %v3548
    %v3939 = vunpack.c.h.b16 %v3548
    %v3940 = vunpack.c.l.b16 %v3549
    %v3941 = vunpack.c.h.b16 %v3549
    %v3942 = vunpack.c.l.b16 %v3550
    %v3943 = vunpack.c.h.b16 %v3550
    %v3944 = vunpack.c.l.b16 %v3551
    %v3945 = vunpack.c.h.b16 %v3551
    %v3946 = vpack.c.b16 %v3694, %v3690
    %v3947 = vpack.c.b16 %v3695, %v3691
    %v3948 = vpack.c.b16 %v3696, %v3692
    %v3949 = vpack.c.b16 %v3697, %v3693
    %v3950 = vpack.c.b16 %v3702, %v3698
    %v3951 = vpack.c.b16 %v3703, %v3699
    %v3952 = vpack.c.b16 %v3704, %v3700
    %v3953 = vpack.c.b16 %v3705, %v3701
    %v3954 = vpack.c.b16 %v3710, %v3706
    %v3955 = vpack.c.b16 %v3711, %v3707
    %v3956 = vpack.c.b16 %v3712, %v3708
    %v3957 = vpack.c.b16 %v3713, %v3709
    %v3958 = vpack.c.b16 %v3718, %v3714
    %v3959 = vpack.c.b16 %v3719, %v3715
    %v3960 = vpack.c.b16 %v3720, %v3716
    %v3961 = vpack.c.b16 %v3721, %v3717
    %v3962 = vpack.c.b16 %v3726, %v3722
    %v3963 = vpack.c.b16 %v3727, %v3723
    %v3964 = vpack.c.b16 %v3728, %v3724
    %v3965 = vpack.c.b16 %v3729, %v3725
    %v3966 = vpack.c.b16 %v3734, %v3730
    %v3967 = vpack.c.b16 %v3735, %v3731
    %v3968 = vpack.c.b16 %v3736, %v3732
    %v3969 = vpack.c.b16 %v3737, %v3733
    %v3970 = vpack.c.b16 %v3742, %v3738
    %v3971 = vpack.c.b16 %v3743, %v3739
    %v3972 = vpack.c.b16 %v3744, %v3740
    %v3973 = vpack.c.b16 %v3745, %v3741
    %v3974 = vpack.c.b16 %v3750, %v3746
    %v3975 = vpack.c.b16 %v3751, %v3747
    %v3976 = vpack.c.b16 %v3752, %v3748
    %v3977 = vpack.c.b16 %v3753, %v3749
    %v3978 = vpack.c.b16 %v3758, %v3754
    %v3979 = vpack.c.b16 %v3759, %v3755
    %v3980 = vpack.c.b16 %v3760, %v3756
    %v3981 = vpack.c.b16 %v3761, %v3757
    %v3982 = vpack.c.b16 %v3766, %v3762
    %v3983 = vpack.c.b16 %v3767, %v3763
    %v3984 = vpack.c.b16 %v3768, %v3764
    %v3985 = vpack.c.b16 %v3769, %v3765
    %v3986 = vpack.c.b16 %v3774, %v3770
    %v3987 = vpack.c.b16 %v3775, %v3771
    %v3988 = vpack.c.b16 %v3776, %v3772
    %v3989 = vpack.c.b16 %v3777, %v3773
    %v3990 = vpack.c.b16 %v3782, %v3778
    %v3991 = vpack.c.b16 %v3783, %v3779
    %v3992 = vpack.c.b16 %v3784, %v3780
    %v3993 = vpack.c.b16 %v3785, %v3781
    %v3994 = vpack.c.b16 %v3790, %v3786
    %v3995 = vpack.c.b16 %v3791, %v3787
    %v3996 = vpack.c.b16 %v3792, %v3788
    %v3997 = vpack.c.b16 %v3793, %v3789
    %v3998 = vpack.c.b16 %v3798, %v3794
    %v3999 = vpack.c.b16 %v3799, %v3795
    %v4000 = vpack.c.b16 %v3800, %v3796
    %v4001 = vpack.c.b16 %v3801, %v3797
    %v4002 = vpack.c.b16 %v3806, %v3802
    %v4003 = vpack.c.b16 %v3807, %v3803
    %v4004 = vpack.c.b16 %v3808, %v3804
    %v4005 = vpack.c.b16 %v3809, %v3805
    %v4006 = vpack.c.b16 %v3814, %v3810
    %v4007 = vpack.c.b16 %v3815, %v3811
    %v4008 = vpack.c.b16 %v3816, %v3812
    %v4009 = vpack.c.b16 %v3817, %v3813
    %v4010 = vpack.c.b16 %v3822, %v3818
    %v4011 = vpack.c.b16 %v3823, %v3819
    %v4012 = vpack.c.b16 %v3824, %v3820
    %v4013 = vpack.c.b16 %v3825, %v3821
    %v4014 = vpack.c.b16 %v3830, %v3826
    %v4015 = vpack.c.b16 %v3831, %v3827
    %v4016 = vpack.c.b16 %v3832, %v3828
    %v4017 = vpack.c.b16 %v3833, %v3829
    %v4018 = vpack.c.b16 %v3838, %v3834
    %v4019 = vpack.c.b16 %v3839, %v3835
    %v4020 = vpack.c.b16 %v3840, %v3836
    %v4021 = vpack.c.b16 %v3841, %v3837
    %v4022 = vpack.c.b16 %v3846, %v3842
    %v4023 = vpack.c.b16 %v3847, %v3843
    %v4024 = vpack.c.b16 %v3848, %v3844
    %v4025 = vpack.c.b16 %v3849, %v3845
    %v4026 = vpack.c.b16 %v3854, %v3850
    %v4027 = vpack.c.b16 %v3855, %v3851
    %v4028 = vpack.c.b16 %v3856, %v3852
    %v4029 = vpack.c.b16 %v3857, %v3853
    %v4030 = vpack.c.b16 %v3862, %v3858
    %v4031 = vpack.c.b16 %v3863, %v3859
    %v4032 = vpack.c.b16 %v3864, %v3860
    %v4033 = vpack.c.b16 %v3865, %v3861
    %v4034 = vpack.c.b16 %v3870, %v3866
    %v4035 = vpack.c.b16 %v3871, %v3867
    %v4036 = vpack.c.b16 %v3872, %v3868
    %v4037 = vpack.c.b16 %v3873, %v3869
    %v4038 = vpack.c.b16 %v3878, %v3874
    %v4039 = vpack.c.b16 %v3879, %v3875
    %v4040 = vpack.c.b16 %v3880, %v3876
    %v4041 = vpack.c.b16 %v3881, %v3877
    %v4042 = vpack.c.b16 %v3886, %v3882
    %v4043 = vpack.c.b16 %v3887, %v3883
    %v4044 = vpack.c.b16 %v3888, %v3884
    %v4045 = vpack.c.b16 %v3889, %v3885
    %v4046 = vpack.c.b16 %v3894, %v3890
    %v4047 = vpack.c.b16 %v3895, %v3891
    %v4048 = vpack.c.b16 %v3896, %v3892
    %v4049 = vpack.c.b16 %v3897, %v3893
    %v4050 = vpack.c.b16 %v3902, %v3898
    %v4051 = vpack.c.b16 %v3903, %v3899
    %v4052 = vpack.c.b16 %v3904, %v3900
    %v4053 = vpack.c.b16 %v3905, %v3901
    %v4054 = vpack.c.b16 %v3910, %v3906
    %v4055 = vpack.c.b16 %v3911, %v3907
    %v4056 = vpack.c.b16 %v3912, %v3908
    %v4057 = vpack.c.b16 %v3913, %v3909
    %v4058 = vpack.c.b16 %v3918, %v3914
    %v4059 = vpack.c.b16 %v3919, %v3915
    %v4060 = vpack.c.b16 %v3920, %v3916
    %v4061 = vpack.c.b16 %v3921, %v3917
    %v4062 = vpack.c.b16 %v3926, %v3922
    %v4063 = vpack.c.b16 %v3927, %v3923
    %v4064 = vpack.c.b16 %v3928, %v3924
    %v4065 = vpack.c.b16 %v3929, %v3925
    %v4066 = vpack.c.b16 %v3934, %v3930
    %v4067 = vpack.c.b16 %v3935, %v3931
    %v4068 = vpack.c.b16 %v3936, %v3932
    %v4069 = vpack.c.b16 %v3937, %v3933
    %v4070 = vpack.c.b16 %v3942, %v3938
    %v4071 = vpack.c.b16 %v3943, %v3939
    %v4072 = vpack.c.b16 %v3944, %v3940
    %v4073 = vpack.c.b16 %v3945, %v3941
    %4202 = vmatpush.bf16.msra.mxu0 %v3974
    %4203 = vmatpush.bf16.msra.mxu0 %v3970
    %4204 = vmatpush.bf16.msra.mxu0 %v3966
    %4205 = vmatpush.bf16.msra.mxu0 %v3962
    %4206 = vmatpush.bf16.msra.mxu0 %v3958
    %4207 = vmatpush.bf16.msra.mxu0 %v3954
    %4208 = vmatpush.bf16.msra.mxu0 %v3950
    %4209 = vmatpush.bf16.msra.mxu0 %v3946
    %4210 = vmatmul.bf16.gmra.mxu0 %v3392
    %v4211 = vpop.f32.mrf.mxu0
    %v4212 = vadd.f32 %v3554, %v4211
    %v4213 = vpop.f32.mrf.mxu0
    %v4214 = vadd.f32 %v3554, %v4213
    %4215 = vmatmul.bf16.gmra.mxu0 %v3396
    %v4216 = vpop.f32.mrf.mxu0
    %v4217 = vadd.f32 %v3554, %v4216
    %v4218 = vpop.f32.mrf.mxu0
    %v4219 = vadd.f32 %v3554, %v4218
    %4220 = vmatmul.bf16.gmra.mxu0 %v3400
    %v4221 = vpop.f32.mrf.mxu0
    %v4222 = vadd.f32 %v3554, %v4221
    %v4223 = vpop.f32.mrf.mxu0
    %v4224 = vadd.f32 %v3554, %v4223
    %4225 = vmatmul.bf16.gmra.mxu0 %v3404
    %v4226 = vpop.f32.mrf.mxu0
    %v4227 = vadd.f32 %v3554, %v4226
    %v4228 = vpop.f32.mrf.mxu0
    %v4229 = vadd.f32 %v3554, %v4228
    %4230 = vmatmul.bf16.gmra.mxu0 %v3408
    %v4231 = vpop.f32.mrf.mxu0
    %v4232 = vadd.f32 %v3554, %v4231
    %v4233 = vpop.f32.mrf.mxu0
    %v4234 = vadd.f32 %v3554, %v4233
    %4235 = vmatmul.bf16.gmra.mxu0 %v3412
    %v4236 = vpop.f32.mrf.mxu0
    %v4237 = vadd.f32 %v3554, %v4236
    %v4238 = vpop.f32.mrf.mxu0
    %v4239 = vadd.f32 %v3554, %v4238
    %4240 = vmatmul.bf16.gmra.mxu0 %v3416
    %v4241 = vpop.f32.mrf.mxu0
    %v4242 = vadd.f32 %v3554, %v4241
    %v4243 = vpop.f32.mrf.mxu0
    %v4244 = vadd.f32 %v3554, %v4243
    %4245 = vmatmul.bf16.gmra.mxu0 %v3420
    %v4246 = vpop.f32.mrf.mxu0
    %v4247 = vadd.f32 %v3554, %v4246
    %v4248 = vpop.f32.mrf.mxu0
    %v4249 = vadd.f32 %v3554, %v4248
    %4250 = vdwg.mxu0
    %4251 = vmatpush.bf16.msra.mxu0 %v4006
    %4252 = vmatpush.bf16.msra.mxu0 %v4002
    %4253 = vmatpush.bf16.msra.mxu0 %v3998
    %4254 = vmatpush.bf16.msra.mxu0 %v3994
    %4255 = vmatpush.bf16.msra.mxu0 %v3990
    %4256 = vmatpush.bf16.msra.mxu0 %v3986
    %4257 = vmatpush.bf16.msra.mxu0 %v3982
    %4258 = vmatpush.bf16.msra.mxu0 %v3978
    %4259 = vmatmul.bf16.gmra.mxu0 %v3393
    %v4260 = vpop.f32.mrf.mxu0
    %v4261 = vadd.f32 %v4212, %v4260
    %v4262 = vpop.f32.mrf.mxu0
    %v4263 = vadd.f32 %v4214, %v4262
    %4264 = vmatmul.bf16.gmra.mxu0 %v3397
    %v4265 = vpop.f32.mrf.mxu0
    %v4266 = vadd.f32 %v4217, %v4265
    %v4267 = vpop.f32.mrf.mxu0
    %v4268 = vadd.f32 %v4219, %v4267
    %4269 = vmatmul.bf16.gmra.mxu0 %v3401
    %v4270 = vpop.f32.mrf.mxu0
    %v4271 = vadd.f32 %v4222, %v4270
    %v4272 = vpop.f32.mrf.mxu0
    %v4273 = vadd.f32 %v4224, %v4272
    %4274 = vmatmul.bf16.gmra.mxu0 %v3405
    %v4275 = vpop.f32.mrf.mxu0
    %v4276 = vadd.f32 %v4227, %v4275
    %v4277 = vpop.f32.mrf.mxu0
    %v4278 = vadd.f32 %v4229, %v4277
    %4279 = vmatmul.bf16.gmra.mxu0 %v3409
    %v4280 = vpop.f32.mrf.mxu0
    %v4281 = vadd.f32 %v4232, %v4280
    %v4282 = vpop.f32.mrf.mxu0
    %v4283 = vadd.f32 %v4234, %v4282
    %4284 = vmatmul.bf16.gmra.mxu0 %v3413
    %v4285 = vpop.f32.mrf.mxu0
    %v4286 = vadd.f32 %v4237, %v4285
    %v4287 = vpop.f32.mrf.mxu0
    %v4288 = vadd.f32 %v4239, %v4287
    %4289 = vmatmul.bf16.gmra.mxu0 %v3417
    %v4290 = vpop.f32.mrf.mxu0
    %v4291 = vadd.f32 %v4242, %v4290
    %v4292 = vpop.f32.mrf.mxu0
    %v4293 = vadd.f32 %v4244, %v4292
    %4294 = vmatmul.bf16.gmra.mxu0 %v3421
    %v4295 = vpop.f32.mrf.mxu0
    %v4296 = vadd.f32 %v4247, %v4295
    %v4297 = vpop.f32.mrf.mxu0
    %v4298 = vadd.f32 %v4249, %v4297
    %4299 = vdwg.mxu0
    %4300 = vmatpush.bf16.msra.mxu0 %v4038
    %4301 = vmatpush.bf16.msra.mxu0 %v4034
    %4302 = vmatpush.bf16.msra.mxu0 %v4030
    %4303 = vmatpush.bf16.msra.mxu0 %v4026
    %4304 = vmatpush.bf16.msra.mxu0 %v4022
    %4305 = vmatpush.bf16.msra.mxu0 %v4018
    %4306 = vmatpush.bf16.msra.mxu0 %v4014
    %4307 = vmatpush.bf16.msra.mxu0 %v4010
    %4308 = vmatmul.bf16.gmra.mxu0 %v3394
    %v4309 = vpop.f32.mrf.mxu0
    %v4310 = vadd.f32 %v4261, %v4309
    %v4311 = vpop.f32.mrf.mxu0
    %v4312 = vadd.f32 %v4263, %v4311
    %4313 = vmatmul.bf16.gmra.mxu0 %v3398
    %v4314 = vpop.f32.mrf.mxu0
    %v4315 = vadd.f32 %v4266, %v4314
    %v4316 = vpop.f32.mrf.mxu0
    %v4317 = vadd.f32 %v4268, %v4316
    %4318 = vmatmul.bf16.gmra.mxu0 %v3402
    %v4319 = vpop.f32.mrf.mxu0
    %v4320 = vadd.f32 %v4271, %v4319
    %v4321 = vpop.f32.mrf.mxu0
    %v4322 = vadd.f32 %v4273, %v4321
    %4323 = vmatmul.bf16.gmra.mxu0 %v3406
    %v4324 = vpop.f32.mrf.mxu0
    %v4325 = vadd.f32 %v4276, %v4324
    %v4326 = vpop.f32.mrf.mxu0
    %v4327 = vadd.f32 %v4278, %v4326
    %4328 = vmatmul.bf16.gmra.mxu0 %v3410
    %v4329 = vpop.f32.mrf.mxu0
    %v4330 = vadd.f32 %v4281, %v4329
    %v4331 = vpop.f32.mrf.mxu0
    %v4332 = vadd.f32 %v4283, %v4331
    %4333 = vmatmul.bf16.gmra.mxu0 %v3414
    %v4334 = vpop.f32.mrf.mxu0
    %v4335 = vadd.f32 %v4286, %v4334
    %v4336 = vpop.f32.mrf.mxu0
    %v4337 = vadd.f32 %v4288, %v4336
    %4338 = vmatmul.bf16.gmra.mxu0 %v3418
    %v4339 = vpop.f32.mrf.mxu0
    %v4340 = vadd.f32 %v4291, %v4339
    %v4341 = vpop.f32.mrf.mxu0
    %v4342 = vadd.f32 %v4293, %v4341
    %4343 = vmatmul.bf16.gmra.mxu0 %v3422
    %v4344 = vpop.f32.mrf.mxu0
    %v4345 = vadd.f32 %v4296, %v4344
    %v4346 = vpop.f32.mrf.mxu0
    %v4347 = vadd.f32 %v4298, %v4346
    %4348 = vdwg.mxu0
    %4349 = vmatpush.bf16.msra.mxu0 %v4070
    %4350 = vmatpush.bf16.msra.mxu0 %v4066
    %4351 = vmatpush.bf16.msra.mxu0 %v4062
    %4352 = vmatpush.bf16.msra.mxu0 %v4058
    %4353 = vmatpush.bf16.msra.mxu0 %v4054
    %4354 = vmatpush.bf16.msra.mxu0 %v4050
    %4355 = vmatpush.bf16.msra.mxu0 %v4046
    %4356 = vmatpush.bf16.msra.mxu0 %v4042
    %4357 = vmatmul.bf16.gmra.mxu0 %v3395
    %v4358 = vpop.f32.mrf.mxu0
    %v4359 = vadd.f32 %v4310, %v4358
    %v4360 = vpop.f32.mrf.mxu0
    %v4361 = vadd.f32 %v4312, %v4360
    %4362 = vmatmul.bf16.gmra.mxu0 %v3399
    %v4363 = vpop.f32.mrf.mxu0
    %v4364 = vadd.f32 %v4315, %v4363
    %v4365 = vpop.f32.mrf.mxu0
    %v4366 = vadd.f32 %v4317, %v4365
    %4367 = vmatmul.bf16.gmra.mxu0 %v3403
    %v4368 = vpop.f32.mrf.mxu0
    %v4369 = vadd.f32 %v4320, %v4368
    %v4370 = vpop.f32.mrf.mxu0
    %v4371 = vadd.f32 %v4322, %v4370
    %4372 = vmatmul.bf16.gmra.mxu0 %v3407
    %v4373 = vpop.f32.mrf.mxu0
    %v4374 = vadd.f32 %v4325, %v4373
    %v4375 = vpop.f32.mrf.mxu0
    %v4376 = vadd.f32 %v4327, %v4375
    %4377 = vmatmul.bf16.gmra.mxu0 %v3411
    %v4378 = vpop.f32.mrf.mxu0
    %v4379 = vadd.f32 %v4330, %v4378
    %v4380 = vpop.f32.mrf.mxu0
    %v4381 = vadd.f32 %v4332, %v4380
    %4382 = vmatmul.bf16.gmra.mxu0 %v3415
    %v4383 = vpop.f32.mrf.mxu0
    %v4384 = vadd.f32 %v4335, %v4383
    %v4385 = vpop.f32.mrf.mxu0
    %v4386 = vadd.f32 %v4337, %v4385
    %4387 = vmatmul.bf16.gmra.mxu0 %v3419
    %v4388 = vpop.f32.mrf.mxu0
    %v4389 = vadd.f32 %v4340, %v4388
    %v4390 = vpop.f32.mrf.mxu0
    %v4391 = vadd.f32 %v4342, %v4390
    %4392 = vmatmul.bf16.gmra.mxu0 %v3423
    %v4393 = vpop.f32.mrf.mxu0
    %v4394 = vadd.f32 %v4345, %v4393
    %v4395 = vpop.f32.mrf.mxu0
    %v4396 = vadd.f32 %v4347, %v4395
    %4397 = vdwg.mxu0
    %4398 = vmatpush.bf16.msra.mxu0 %v3975
    %4399 = vmatpush.bf16.msra.mxu0 %v3971
    %4400 = vmatpush.bf16.msra.mxu0 %v3967
    %4401 = vmatpush.bf16.msra.mxu0 %v3963
    %4402 = vmatpush.bf16.msra.mxu0 %v3959
    %4403 = vmatpush.bf16.msra.mxu0 %v3955
    %4404 = vmatpush.bf16.msra.mxu0 %v3951
    %4405 = vmatpush.bf16.msra.mxu0 %v3947
    %4406 = vmatmul.bf16.gmra.mxu0 %v3392
    %v4407 = vpop.f32.mrf.mxu0
    %v4408 = vadd.f32 %v3555, %v4407
    %v4409 = vpop.f32.mrf.mxu0
    %v4410 = vadd.f32 %v3555, %v4409
    %4411 = vmatmul.bf16.gmra.mxu0 %v3396
    %v4412 = vpop.f32.mrf.mxu0
    %v4413 = vadd.f32 %v3555, %v4412
    %v4414 = vpop.f32.mrf.mxu0
    %v4415 = vadd.f32 %v3555, %v4414
    %4416 = vmatmul.bf16.gmra.mxu0 %v3400
    %v4417 = vpop.f32.mrf.mxu0
    %v4418 = vadd.f32 %v3555, %v4417
    %v4419 = vpop.f32.mrf.mxu0
    %v4420 = vadd.f32 %v3555, %v4419
    %4421 = vmatmul.bf16.gmra.mxu0 %v3404
    %v4422 = vpop.f32.mrf.mxu0
    %v4423 = vadd.f32 %v3555, %v4422
    %v4424 = vpop.f32.mrf.mxu0
    %v4425 = vadd.f32 %v3555, %v4424
    %4426 = vmatmul.bf16.gmra.mxu0 %v3408
    %v4427 = vpop.f32.mrf.mxu0
    %v4428 = vadd.f32 %v3555, %v4427
    %v4429 = vpop.f32.mrf.mxu0
    %v4430 = vadd.f32 %v3555, %v4429
    %4431 = vmatmul.bf16.gmra.mxu0 %v3412
    %v4432 = vpop.f32.mrf.mxu0
    %v4433 = vadd.f32 %v3555, %v4432
    %v4434 = vpop.f32.mrf.mxu0
    %v4435 = vadd.f32 %v3555, %v4434
    %4436 = vmatmul.bf16.gmra.mxu0 %v3416
    %v4437 = vpop.f32.mrf.mxu0
    %v4438 = vadd.f32 %v3555, %v4437
    %v4439 = vpop.f32.mrf.mxu0
    %v4440 = vadd.f32 %v3555, %v4439
    %4441 = vmatmul.bf16.gmra.mxu0 %v3420
    %v4442 = vpop.f32.mrf.mxu0
    %v4443 = vadd.f32 %v3555, %v4442
    %v4444 = vpop.f32.mrf.mxu0
    %v4445 = vadd.f32 %v3555, %v4444
    %4446 = vdwg.mxu0
    %4447 = vmatpush.bf16.msra.mxu0 %v4007
    %4448 = vmatpush.bf16.msra.mxu0 %v4003
    %4449 = vmatpush.bf16.msra.mxu0 %v3999
    %4450 = vmatpush.bf16.msra.mxu0 %v3995
    %4451 = vmatpush.bf16.msra.mxu0 %v3991
    %4452 = vmatpush.bf16.msra.mxu0 %v3987
    %4453 = vmatpush.bf16.msra.mxu0 %v3983
    %4454 = vmatpush.bf16.msra.mxu0 %v3979
    %4455 = vmatmul.bf16.gmra.mxu0 %v3393
    %v4456 = vpop.f32.mrf.mxu0
    %v4457 = vadd.f32 %v4408, %v4456
    %v4458 = vpop.f32.mrf.mxu0
    %v4459 = vadd.f32 %v4410, %v4458
    %4460 = vmatmul.bf16.gmra.mxu0 %v3397
    %v4461 = vpop.f32.mrf.mxu0
    %v4462 = vadd.f32 %v4413, %v4461
    %v4463 = vpop.f32.mrf.mxu0
    %v4464 = vadd.f32 %v4415, %v4463
    %4465 = vmatmul.bf16.gmra.mxu0 %v3401
    %v4466 = vpop.f32.mrf.mxu0
    %v4467 = vadd.f32 %v4418, %v4466
    %v4468 = vpop.f32.mrf.mxu0
    %v4469 = vadd.f32 %v4420, %v4468
    %4470 = vmatmul.bf16.gmra.mxu0 %v3405
    %v4471 = vpop.f32.mrf.mxu0
    %v4472 = vadd.f32 %v4423, %v4471
    %v4473 = vpop.f32.mrf.mxu0
    %v4474 = vadd.f32 %v4425, %v4473
    %4475 = vmatmul.bf16.gmra.mxu0 %v3409
    %v4476 = vpop.f32.mrf.mxu0
    %v4477 = vadd.f32 %v4428, %v4476
    %v4478 = vpop.f32.mrf.mxu0
    %v4479 = vadd.f32 %v4430, %v4478
    %4480 = vmatmul.bf16.gmra.mxu0 %v3413
    %v4481 = vpop.f32.mrf.mxu0
    %v4482 = vadd.f32 %v4433, %v4481
    %v4483 = vpop.f32.mrf.mxu0
    %v4484 = vadd.f32 %v4435, %v4483
    %4485 = vmatmul.bf16.gmra.mxu0 %v3417
    %v4486 = vpop.f32.mrf.mxu0
    %v4487 = vadd.f32 %v4438, %v4486
    %v4488 = vpop.f32.mrf.mxu0
    %v4489 = vadd.f32 %v4440, %v4488
    %4490 = vmatmul.bf16.gmra.mxu0 %v3421
    %v4491 = vpop.f32.mrf.mxu0
    %v4492 = vadd.f32 %v4443, %v4491
    %v4493 = vpop.f32.mrf.mxu0
    %v4494 = vadd.f32 %v4445, %v4493
    %4495 = vdwg.mxu0
    %4496 = vmatpush.bf16.msra.mxu0 %v4039
    %4497 = vmatpush.bf16.msra.mxu0 %v4035
    %4498 = vmatpush.bf16.msra.mxu0 %v4031
    %4499 = vmatpush.bf16.msra.mxu0 %v4027
    %4500 = vmatpush.bf16.msra.mxu0 %v4023
    %4501 = vmatpush.bf16.msra.mxu0 %v4019
    %4502 = vmatpush.bf16.msra.mxu0 %v4015
    %4503 = vmatpush.bf16.msra.mxu0 %v4011
    %4504 = vmatmul.bf16.gmra.mxu0 %v3394
    %v4505 = vpop.f32.mrf.mxu0
    %v4506 = vadd.f32 %v4457, %v4505
    %v4507 = vpop.f32.mrf.mxu0
    %v4508 = vadd.f32 %v4459, %v4507
    %4509 = vmatmul.bf16.gmra.mxu0 %v3398
    %v4510 = vpop.f32.mrf.mxu0
    %v4511 = vadd.f32 %v4462, %v4510
    %v4512 = vpop.f32.mrf.mxu0
    %v4513 = vadd.f32 %v4464, %v4512
    %4514 = vmatmul.bf16.gmra.mxu0 %v3402
    %v4515 = vpop.f32.mrf.mxu0
    %v4516 = vadd.f32 %v4467, %v4515
    %v4517 = vpop.f32.mrf.mxu0
    %v4518 = vadd.f32 %v4469, %v4517
    %4519 = vmatmul.bf16.gmra.mxu0 %v3406
    %v4520 = vpop.f32.mrf.mxu0
    %v4521 = vadd.f32 %v4472, %v4520
    %v4522 = vpop.f32.mrf.mxu0
    %v4523 = vadd.f32 %v4474, %v4522
    %4524 = vmatmul.bf16.gmra.mxu0 %v3410
    %v4525 = vpop.f32.mrf.mxu0
    %v4526 = vadd.f32 %v4477, %v4525
    %v4527 = vpop.f32.mrf.mxu0
    %v4528 = vadd.f32 %v4479, %v4527
    %4529 = vmatmul.bf16.gmra.mxu0 %v3414
    %v4530 = vpop.f32.mrf.mxu0
    %v4531 = vadd.f32 %v4482, %v4530
    %v4532 = vpop.f32.mrf.mxu0
    %v4533 = vadd.f32 %v4484, %v4532
    %4534 = vmatmul.bf16.gmra.mxu0 %v3418
    %v4535 = vpop.f32.mrf.mxu0
    %v4536 = vadd.f32 %v4487, %v4535
    %v4537 = vpop.f32.mrf.mxu0
    %v4538 = vadd.f32 %v4489, %v4537
    %4539 = vmatmul.bf16.gmra.mxu0 %v3422
    %v4540 = vpop.f32.mrf.mxu0
    %v4541 = vadd.f32 %v4492, %v4540
    %v4542 = vpop.f32.mrf.mxu0
    %v4543 = vadd.f32 %v4494, %v4542
    %4544 = vdwg.mxu0
    %4545 = vmatpush.bf16.msra.mxu0 %v4071
    %4546 = vmatpush.bf16.msra.mxu0 %v4067
    %4547 = vmatpush.bf16.msra.mxu0 %v4063
    %4548 = vmatpush.bf16.msra.mxu0 %v4059
    %4549 = vmatpush.bf16.msra.mxu0 %v4055
    %4550 = vmatpush.bf16.msra.mxu0 %v4051
    %4551 = vmatpush.bf16.msra.mxu0 %v4047
    %4552 = vmatpush.bf16.msra.mxu0 %v4043
    %4553 = vmatmul.bf16.gmra.mxu0 %v3395
    %v4554 = vpop.f32.mrf.mxu0
    %v4555 = vadd.f32 %v4506, %v4554
    %v4556 = vpop.f32.mrf.mxu0
    %v4557 = vadd.f32 %v4508, %v4556
    %4558 = vmatmul.bf16.gmra.mxu0 %v3399
    %v4559 = vpop.f32.mrf.mxu0
    %v4560 = vadd.f32 %v4511, %v4559
    %v4561 = vpop.f32.mrf.mxu0
    %v4562 = vadd.f32 %v4513, %v4561
    %4563 = vmatmul.bf16.gmra.mxu0 %v3403
    %v4564 = vpop.f32.mrf.mxu0
    %v4565 = vadd.f32 %v4516, %v4564
    %v4566 = vpop.f32.mrf.mxu0
    %v4567 = vadd.f32 %v4518, %v4566
    %4568 = vmatmul.bf16.gmra.mxu0 %v3407
    %v4569 = vpop.f32.mrf.mxu0
    %v4570 = vadd.f32 %v4521, %v4569
    %v4571 = vpop.f32.mrf.mxu0
    %v4572 = vadd.f32 %v4523, %v4571
    %4573 = vmatmul.bf16.gmra.mxu0 %v3411
    %v4574 = vpop.f32.mrf.mxu0
    %v4575 = vadd.f32 %v4526, %v4574
    %v4576 = vpop.f32.mrf.mxu0
    %v4577 = vadd.f32 %v4528, %v4576
    %4578 = vmatmul.bf16.gmra.mxu0 %v3415
    %v4579 = vpop.f32.mrf.mxu0
    %v4580 = vadd.f32 %v4531, %v4579
    %v4581 = vpop.f32.mrf.mxu0
    %v4582 = vadd.f32 %v4533, %v4581
    %4583 = vmatmul.bf16.gmra.mxu0 %v3419
    %v4584 = vpop.f32.mrf.mxu0
    %v4585 = vadd.f32 %v4536, %v4584
    %v4586 = vpop.f32.mrf.mxu0
    %v4587 = vadd.f32 %v4538, %v4586
    %4588 = vmatmul.bf16.gmra.mxu0 %v3423
    %v4589 = vpop.f32.mrf.mxu0
    %v4590 = vadd.f32 %v4541, %v4589
    %v4591 = vpop.f32.mrf.mxu0
    %v4592 = vadd.f32 %v4543, %v4591
    %4593 = vdwg.mxu0
    %4594 = vmatpush.bf16.msra.mxu0 %v3976
    %4595 = vmatpush.bf16.msra.mxu0 %v3972
    %4596 = vmatpush.bf16.msra.mxu0 %v3968
    %4597 = vmatpush.bf16.msra.mxu0 %v3964
    %4598 = vmatpush.bf16.msra.mxu0 %v3960
    %4599 = vmatpush.bf16.msra.mxu0 %v3956
    %4600 = vmatpush.bf16.msra.mxu0 %v3952
    %4601 = vmatpush.bf16.msra.mxu0 %v3948
    %4602 = vmatmul.bf16.gmra.mxu0 %v3392
    %v4603 = vpop.f32.mrf.mxu0
    %v4604 = vadd.f32 %v3556, %v4603
    %v4605 = vpop.f32.mrf.mxu0
    %v4606 = vadd.f32 %v3556, %v4605
    %4607 = vmatmul.bf16.gmra.mxu0 %v3396
    %v4608 = vpop.f32.mrf.mxu0
    %v4609 = vadd.f32 %v3556, %v4608
    %v4610 = vpop.f32.mrf.mxu0
    %v4611 = vadd.f32 %v3556, %v4610
    %4612 = vmatmul.bf16.gmra.mxu0 %v3400
    %v4613 = vpop.f32.mrf.mxu0
    %v4614 = vadd.f32 %v3556, %v4613
    %v4615 = vpop.f32.mrf.mxu0
    %v4616 = vadd.f32 %v3556, %v4615
    %4617 = vmatmul.bf16.gmra.mxu0 %v3404
    %v4618 = vpop.f32.mrf.mxu0
    %v4619 = vadd.f32 %v3556, %v4618
    %v4620 = vpop.f32.mrf.mxu0
    %v4621 = vadd.f32 %v3556, %v4620
    %4622 = vmatmul.bf16.gmra.mxu0 %v3408
    %v4623 = vpop.f32.mrf.mxu0
    %v4624 = vadd.f32 %v3556, %v4623
    %v4625 = vpop.f32.mrf.mxu0
    %v4626 = vadd.f32 %v3556, %v4625
    %4627 = vmatmul.bf16.gmra.mxu0 %v3412
    %v4628 = vpop.f32.mrf.mxu0
    %v4629 = vadd.f32 %v3556, %v4628
    %v4630 = vpop.f32.mrf.mxu0
    %v4631 = vadd.f32 %v3556, %v4630
    %4632 = vmatmul.bf16.gmra.mxu0 %v3416
    %v4633 = vpop.f32.mrf.mxu0
    %v4634 = vadd.f32 %v3556, %v4633
    %v4635 = vpop.f32.mrf.mxu0
    %v4636 = vadd.f32 %v3556, %v4635
    %4637 = vmatmul.bf16.gmra.mxu0 %v3420
    %v4638 = vpop.f32.mrf.mxu0
    %v4639 = vadd.f32 %v3556, %v4638
    %v4640 = vpop.f32.mrf.mxu0
    %v4641 = vadd.f32 %v3556, %v4640
    %4642 = vdwg.mxu0
    %4643 = vmatpush.bf16.msra.mxu0 %v4008
    %4644 = vmatpush.bf16.msra.mxu0 %v4004
    %4645 = vmatpush.bf16.msra.mxu0 %v4000
    %4646 = vmatpush.bf16.msra.mxu0 %v3996
    %4647 = vmatpush.bf16.msra.mxu0 %v3992
    %4648 = vmatpush.bf16.msra.mxu0 %v3988
    %4649 = vmatpush.bf16.msra.mxu0 %v3984
    %4650 = vmatpush.bf16.msra.mxu0 %v3980
    %4651 = vmatmul.bf16.gmra.mxu0 %v3393
    %v4652 = vpop.f32.mrf.mxu0
    %v4653 = vadd.f32 %v4604, %v4652
    %v4654 = vpop.f32.mrf.mxu0
    %v4655 = vadd.f32 %v4606, %v4654
    %4656 = vmatmul.bf16.gmra.mxu0 %v3397
    %v4657 = vpop.f32.mrf.mxu0
    %v4658 = vadd.f32 %v4609, %v4657
    %v4659 = vpop.f32.mrf.mxu0
    %v4660 = vadd.f32 %v4611, %v4659
    %4661 = vmatmul.bf16.gmra.mxu0 %v3401
    %v4662 = vpop.f32.mrf.mxu0
    %v4663 = vadd.f32 %v4614, %v4662
    %v4664 = vpop.f32.mrf.mxu0
    %v4665 = vadd.f32 %v4616, %v4664
    %4666 = vmatmul.bf16.gmra.mxu0 %v3405
    %v4667 = vpop.f32.mrf.mxu0
    %v4668 = vadd.f32 %v4619, %v4667
    %v4669 = vpop.f32.mrf.mxu0
    %v4670 = vadd.f32 %v4621, %v4669
    %4671 = vmatmul.bf16.gmra.mxu0 %v3409
    %v4672 = vpop.f32.mrf.mxu0
    %v4673 = vadd.f32 %v4624, %v4672
    %v4674 = vpop.f32.mrf.mxu0
    %v4675 = vadd.f32 %v4626, %v4674
    %4676 = vmatmul.bf16.gmra.mxu0 %v3413
    %v4677 = vpop.f32.mrf.mxu0
    %v4678 = vadd.f32 %v4629, %v4677
    %v4679 = vpop.f32.mrf.mxu0
    %v4680 = vadd.f32 %v4631, %v4679
    %4681 = vmatmul.bf16.gmra.mxu0 %v3417
    %v4682 = vpop.f32.mrf.mxu0
    %v4683 = vadd.f32 %v4634, %v4682
    %v4684 = vpop.f32.mrf.mxu0
    %v4685 = vadd.f32 %v4636, %v4684
    %4686 = vmatmul.bf16.gmra.mxu0 %v3421
    %v4687 = vpop.f32.mrf.mxu0
    %v4688 = vadd.f32 %v4639, %v4687
    %v4689 = vpop.f32.mrf.mxu0
    %v4690 = vadd.f32 %v4641, %v4689
    %4691 = vdwg.mxu0
    %4692 = vmatpush.bf16.msra.mxu0 %v4040
    %4693 = vmatpush.bf16.msra.mxu0 %v4036
    %4694 = vmatpush.bf16.msra.mxu0 %v4032
    %4695 = vmatpush.bf16.msra.mxu0 %v4028
    %4696 = vmatpush.bf16.msra.mxu0 %v4024
    %4697 = vmatpush.bf16.msra.mxu0 %v4020
    %4698 = vmatpush.bf16.msra.mxu0 %v4016
    %4699 = vmatpush.bf16.msra.mxu0 %v4012
    %4700 = vmatmul.bf16.gmra.mxu0 %v3394
    %v4701 = vpop.f32.mrf.mxu0
    %v4702 = vadd.f32 %v4653, %v4701
    %v4703 = vpop.f32.mrf.mxu0
    %v4704 = vadd.f32 %v4655, %v4703
    %4705 = vmatmul.bf16.gmra.mxu0 %v3398
    %v4706 = vpop.f32.mrf.mxu0
    %v4707 = vadd.f32 %v4658, %v4706
    %v4708 = vpop.f32.mrf.mxu0
    %v4709 = vadd.f32 %v4660, %v4708
    %4710 = vmatmul.bf16.gmra.mxu0 %v3402
    %v4711 = vpop.f32.mrf.mxu0
    %v4712 = vadd.f32 %v4663, %v4711
    %v4713 = vpop.f32.mrf.mxu0
    %v4714 = vadd.f32 %v4665, %v4713
    %4715 = vmatmul.bf16.gmra.mxu0 %v3406
    %v4716 = vpop.f32.mrf.mxu0
    %v4717 = vadd.f32 %v4668, %v4716
    %v4718 = vpop.f32.mrf.mxu0
    %v4719 = vadd.f32 %v4670, %v4718
    %4720 = vmatmul.bf16.gmra.mxu0 %v3410
    %v4721 = vpop.f32.mrf.mxu0
    %v4722 = vadd.f32 %v4673, %v4721
    %v4723 = vpop.f32.mrf.mxu0
    %v4724 = vadd.f32 %v4675, %v4723
    %4725 = vmatmul.bf16.gmra.mxu0 %v3414
    %v4726 = vpop.f32.mrf.mxu0
    %v4727 = vadd.f32 %v4678, %v4726
    %v4728 = vpop.f32.mrf.mxu0
    %v4729 = vadd.f32 %v4680, %v4728
    %4730 = vmatmul.bf16.gmra.mxu0 %v3418
    %v4731 = vpop.f32.mrf.mxu0
    %v4732 = vadd.f32 %v4683, %v4731
    %v4733 = vpop.f32.mrf.mxu0
    %v4734 = vadd.f32 %v4685, %v4733
    %4735 = vmatmul.bf16.gmra.mxu0 %v3422
    %v4736 = vpop.f32.mrf.mxu0
    %v4737 = vadd.f32 %v4688, %v4736
    %v4738 = vpop.f32.mrf.mxu0
    %v4739 = vadd.f32 %v4690, %v4738
    %4740 = vdwg.mxu0
    %4741 = vmatpush.bf16.msra.mxu0 %v4072
    %4742 = vmatpush.bf16.msra.mxu0 %v4068
    %4743 = vmatpush.bf16.msra.mxu0 %v4064
    %4744 = vmatpush.bf16.msra.mxu0 %v4060
    %4745 = vmatpush.bf16.msra.mxu0 %v4056
    %4746 = vmatpush.bf16.msra.mxu0 %v4052
    %4747 = vmatpush.bf16.msra.mxu0 %v4048
    %4748 = vmatpush.bf16.msra.mxu0 %v4044
    %4749 = vmatmul.bf16.gmra.mxu0 %v3395
    %v4750 = vpop.f32.mrf.mxu0
    %v4751 = vadd.f32 %v4702, %v4750
    %v4752 = vpop.f32.mrf.mxu0
    %v4753 = vadd.f32 %v4704, %v4752
    %4754 = vmatmul.bf16.gmra.mxu0 %v3399
    %v4755 = vpop.f32.mrf.mxu0
    %v4756 = vadd.f32 %v4707, %v4755
    %v4757 = vpop.f32.mrf.mxu0
    %v4758 = vadd.f32 %v4709, %v4757
    %4759 = vmatmul.bf16.gmra.mxu0 %v3403
    %v4760 = vpop.f32.mrf.mxu0
    %v4761 = vadd.f32 %v4712, %v4760
    %v4762 = vpop.f32.mrf.mxu0
    %v4763 = vadd.f32 %v4714, %v4762
    %4764 = vmatmul.bf16.gmra.mxu0 %v3407
    %v4765 = vpop.f32.mrf.mxu0
    %v4766 = vadd.f32 %v4717, %v4765
    %v4767 = vpop.f32.mrf.mxu0
    %v4768 = vadd.f32 %v4719, %v4767
    %4769 = vmatmul.bf16.gmra.mxu0 %v3411
    %v4770 = vpop.f32.mrf.mxu0
    %v4771 = vadd.f32 %v4722, %v4770
    %v4772 = vpop.f32.mrf.mxu0
    %v4773 = vadd.f32 %v4724, %v4772
    %4774 = vmatmul.bf16.gmra.mxu0 %v3415
    %v4775 = vpop.f32.mrf.mxu0
    %v4776 = vadd.f32 %v4727, %v4775
    %v4777 = vpop.f32.mrf.mxu0
    %v4778 = vadd.f32 %v4729, %v4777
    %4779 = vmatmul.bf16.gmra.mxu0 %v3419
    %v4780 = vpop.f32.mrf.mxu0
    %v4781 = vadd.f32 %v4732, %v4780
    %v4782 = vpop.f32.mrf.mxu0
    %v4783 = vadd.f32 %v4734, %v4782
    %4784 = vmatmul.bf16.gmra.mxu0 %v3423
    %v4785 = vpop.f32.mrf.mxu0
    %v4786 = vadd.f32 %v4737, %v4785
    %v4787 = vpop.f32.mrf.mxu0
    %v4788 = vadd.f32 %v4739, %v4787
    %4789 = vdwg.mxu0
    %4790 = vmatpush.bf16.msra.mxu0 %v3977
    %4791 = vmatpush.bf16.msra.mxu0 %v3973
    %4792 = vmatpush.bf16.msra.mxu0 %v3969
    %4793 = vmatpush.bf16.msra.mxu0 %v3965
    %4794 = vmatpush.bf16.msra.mxu0 %v3961
    %4795 = vmatpush.bf16.msra.mxu0 %v3957
    %4796 = vmatpush.bf16.msra.mxu0 %v3953
    %4797 = vmatpush.bf16.msra.mxu0 %v3949
    %4798 = vmatmul.bf16.gmra.mxu0 %v3392
    %v4799 = vpop.f32.mrf.mxu0
    %v4800 = vadd.f32 %v3557, %v4799
    %v4801 = vpop.f32.mrf.mxu0
    %v4802 = vadd.f32 %v3557, %v4801
    %4803 = vmatmul.bf16.gmra.mxu0 %v3396
    %v4804 = vpop.f32.mrf.mxu0
    %v4805 = vadd.f32 %v3557, %v4804
    %v4806 = vpop.f32.mrf.mxu0
    %v4807 = vadd.f32 %v3557, %v4806
    %4808 = vmatmul.bf16.gmra.mxu0 %v3400
    %v4809 = vpop.f32.mrf.mxu0
    %v4810 = vadd.f32 %v3557, %v4809
    %v4811 = vpop.f32.mrf.mxu0
    %v4812 = vadd.f32 %v3557, %v4811
    %4813 = vmatmul.bf16.gmra.mxu0 %v3404
    %v4814 = vpop.f32.mrf.mxu0
    %v4815 = vadd.f32 %v3557, %v4814
    %v4816 = vpop.f32.mrf.mxu0
    %v4817 = vadd.f32 %v3557, %v4816
    %4818 = vmatmul.bf16.gmra.mxu0 %v3408
    %v4819 = vpop.f32.mrf.mxu0
    %v4820 = vadd.f32 %v3557, %v4819
    %v4821 = vpop.f32.mrf.mxu0
    %v4822 = vadd.f32 %v3557, %v4821
    %4823 = vmatmul.bf16.gmra.mxu0 %v3412
    %v4824 = vpop.f32.mrf.mxu0
    %v4825 = vadd.f32 %v3557, %v4824
    %v4826 = vpop.f32.mrf.mxu0
    %v4827 = vadd.f32 %v3557, %v4826
    %4828 = vmatmul.bf16.gmra.mxu0 %v3416
    %v4829 = vpop.f32.mrf.mxu0
    %v4830 = vadd.f32 %v3557, %v4829
    %v4831 = vpop.f32.mrf.mxu0
    %v4832 = vadd.f32 %v3557, %v4831
    %4833 = vmatmul.bf16.gmra.mxu0 %v3420
    %v4834 = vpop.f32.mrf.mxu0
    %v4835 = vadd.f32 %v3557, %v4834
    %v4836 = vpop.f32.mrf.mxu0
    %v4837 = vadd.f32 %v3557, %v4836
    %4838 = vdwg.mxu0
    %4839 = vmatpush.bf16.msra.mxu0 %v4009
    %4840 = vmatpush.bf16.msra.mxu0 %v4005
    %4841 = vmatpush.bf16.msra.mxu0 %v4001
    %4842 = vmatpush.bf16.msra.mxu0 %v3997
    %4843 = vmatpush.bf16.msra.mxu0 %v3993
    %4844 = vmatpush.bf16.msra.mxu0 %v3989
    %4845 = vmatpush.bf16.msra.mxu0 %v3985
    %4846 = vmatpush.bf16.msra.mxu0 %v3981
    %4847 = vmatmul.bf16.gmra.mxu0 %v3393
    %v4848 = vpop.f32.mrf.mxu0
    %v4849 = vadd.f32 %v4800, %v4848
    %v4850 = vpop.f32.mrf.mxu0
    %v4851 = vadd.f32 %v4802, %v4850
    %4852 = vmatmul.bf16.gmra.mxu0 %v3397
    %v4853 = vpop.f32.mrf.mxu0
    %v4854 = vadd.f32 %v4805, %v4853
    %v4855 = vpop.f32.mrf.mxu0
    %v4856 = vadd.f32 %v4807, %v4855
    %4857 = vmatmul.bf16.gmra.mxu0 %v3401
    %v4858 = vpop.f32.mrf.mxu0
    %v4859 = vadd.f32 %v4810, %v4858
    %v4860 = vpop.f32.mrf.mxu0
    %v4861 = vadd.f32 %v4812, %v4860
    %4862 = vmatmul.bf16.gmra.mxu0 %v3405
    %v4863 = vpop.f32.mrf.mxu0
    %v4864 = vadd.f32 %v4815, %v4863
    %v4865 = vpop.f32.mrf.mxu0
    %v4866 = vadd.f32 %v4817, %v4865
    %4867 = vmatmul.bf16.gmra.mxu0 %v3409
    %v4868 = vpop.f32.mrf.mxu0
    %v4869 = vadd.f32 %v4820, %v4868
    %v4870 = vpop.f32.mrf.mxu0
    %v4871 = vadd.f32 %v4822, %v4870
    %4872 = vmatmul.bf16.gmra.mxu0 %v3413
    %v4873 = vpop.f32.mrf.mxu0
    %v4874 = vadd.f32 %v4825, %v4873
    %v4875 = vpop.f32.mrf.mxu0
    %v4876 = vadd.f32 %v4827, %v4875
    %4877 = vmatmul.bf16.gmra.mxu0 %v3417
    %v4878 = vpop.f32.mrf.mxu0
    %v4879 = vadd.f32 %v4830, %v4878
    %v4880 = vpop.f32.mrf.mxu0
    %v4881 = vadd.f32 %v4832, %v4880
    %4882 = vmatmul.bf16.gmra.mxu0 %v3421
    %v4883 = vpop.f32.mrf.mxu0
    %v4884 = vadd.f32 %v4835, %v4883
    %v4885 = vpop.f32.mrf.mxu0
    %v4886 = vadd.f32 %v4837, %v4885
    %4887 = vdwg.mxu0
    %4888 = vmatpush.bf16.msra.mxu0 %v4041
    %4889 = vmatpush.bf16.msra.mxu0 %v4037
    %4890 = vmatpush.bf16.msra.mxu0 %v4033
    %4891 = vmatpush.bf16.msra.mxu0 %v4029
    %4892 = vmatpush.bf16.msra.mxu0 %v4025
    %4893 = vmatpush.bf16.msra.mxu0 %v4021
    %4894 = vmatpush.bf16.msra.mxu0 %v4017
    %4895 = vmatpush.bf16.msra.mxu0 %v4013
    %4896 = vmatmul.bf16.gmra.mxu0 %v3394
    %v4897 = vpop.f32.mrf.mxu0
    %v4898 = vadd.f32 %v4849, %v4897
    %v4899 = vpop.f32.mrf.mxu0
    %v4900 = vadd.f32 %v4851, %v4899
    %4901 = vmatmul.bf16.gmra.mxu0 %v3398
    %v4902 = vpop.f32.mrf.mxu0
    %v4903 = vadd.f32 %v4854, %v4902
    %v4904 = vpop.f32.mrf.mxu0
    %v4905 = vadd.f32 %v4856, %v4904
    %4906 = vmatmul.bf16.gmra.mxu0 %v3402
    %v4907 = vpop.f32.mrf.mxu0
    %v4908 = vadd.f32 %v4859, %v4907
    %v4909 = vpop.f32.mrf.mxu0
    %v4910 = vadd.f32 %v4861, %v4909
    %4911 = vmatmul.bf16.gmra.mxu0 %v3406
    %v4912 = vpop.f32.mrf.mxu0
    %v4913 = vadd.f32 %v4864, %v4912
    %v4914 = vpop.f32.mrf.mxu0
    %v4915 = vadd.f32 %v4866, %v4914
    %4916 = vmatmul.bf16.gmra.mxu0 %v3410
    %v4917 = vpop.f32.mrf.mxu0
    %v4918 = vadd.f32 %v4869, %v4917
    %v4919 = vpop.f32.mrf.mxu0
    %v4920 = vadd.f32 %v4871, %v4919
    %4921 = vmatmul.bf16.gmra.mxu0 %v3414
    %v4922 = vpop.f32.mrf.mxu0
    %v4923 = vadd.f32 %v4874, %v4922
    %v4924 = vpop.f32.mrf.mxu0
    %v4925 = vadd.f32 %v4876, %v4924
    %4926 = vmatmul.bf16.gmra.mxu0 %v3418
    %v4927 = vpop.f32.mrf.mxu0
    %v4928 = vadd.f32 %v4879, %v4927
    %v4929 = vpop.f32.mrf.mxu0
    %v4930 = vadd.f32 %v4881, %v4929
    %4931 = vmatmul.bf16.gmra.mxu0 %v3422
    %v4932 = vpop.f32.mrf.mxu0
    %v4933 = vadd.f32 %v4884, %v4932
    %v4934 = vpop.f32.mrf.mxu0
    %v4935 = vadd.f32 %v4886, %v4934
    %4936 = vdwg.mxu0
    %4937 = vmatpush.bf16.msra.mxu0 %v4073
    %4938 = vmatpush.bf16.msra.mxu0 %v4069
    %4939 = vmatpush.bf16.msra.mxu0 %v4065
    %4940 = vmatpush.bf16.msra.mxu0 %v4061
    %4941 = vmatpush.bf16.msra.mxu0 %v4057
    %4942 = vmatpush.bf16.msra.mxu0 %v4053
    %4943 = vmatpush.bf16.msra.mxu0 %v4049
    %4944 = vmatpush.bf16.msra.mxu0 %v4045
    %4945 = vmatmul.bf16.gmra.mxu0 %v3395
    %v4946 = vpop.f32.mrf.mxu0
    %v4947 = vadd.f32 %v4898, %v4946
    %v4948 = vpop.f32.mrf.mxu0
    %v4949 = vadd.f32 %v4900, %v4948
    %4950 = vmatmul.bf16.gmra.mxu0 %v3399
    %v4951 = vpop.f32.mrf.mxu0
    %v4952 = vadd.f32 %v4903, %v4951
    %v4953 = vpop.f32.mrf.mxu0
    %v4954 = vadd.f32 %v4905, %v4953
    %4955 = vmatmul.bf16.gmra.mxu0 %v3403
    %v4956 = vpop.f32.mrf.mxu0
    %v4957 = vadd.f32 %v4908, %v4956
    %v4958 = vpop.f32.mrf.mxu0
    %v4959 = vadd.f32 %v4910, %v4958
    %4960 = vmatmul.bf16.gmra.mxu0 %v3407
    %v4961 = vpop.f32.mrf.mxu0
    %v4962 = vadd.f32 %v4913, %v4961
    %v4963 = vpop.f32.mrf.mxu0
    %v4964 = vadd.f32 %v4915, %v4963
    %4965 = vmatmul.bf16.gmra.mxu0 %v3411
    %v4966 = vpop.f32.mrf.mxu0
    %v4967 = vadd.f32 %v4918, %v4966
    %v4968 = vpop.f32.mrf.mxu0
    %v4969 = vadd.f32 %v4920, %v4968
    %4970 = vmatmul.bf16.gmra.mxu0 %v3415
    %v4971 = vpop.f32.mrf.mxu0
    %v4972 = vadd.f32 %v4923, %v4971
    %v4973 = vpop.f32.mrf.mxu0
    %v4974 = vadd.f32 %v4925, %v4973
    %4975 = vmatmul.bf16.gmra.mxu0 %v3419
    %v4976 = vpop.f32.mrf.mxu0
    %v4977 = vadd.f32 %v4928, %v4976
    %v4978 = vpop.f32.mrf.mxu0
    %v4979 = vadd.f32 %v4930, %v4978
    %4980 = vmatmul.bf16.gmra.mxu0 %v3423
    %v4981 = vpop.f32.mrf.mxu0
    %v4982 = vadd.f32 %v4933, %v4981
    %v4983 = vpop.f32.mrf.mxu0
    %v4984 = vadd.f32 %v4935, %v4983
    %4985 = vdwg.mxu0
    %v4986 = vmax.f32 %v4359, 0.0
    %v4987 = vmax.f32 %v4555, 0.0
    %v4988 = vmax.f32 %v4751, 0.0
    %v4989 = vmax.f32 %v4947, 0.0
    %v4990 = vmax.f32 %v4361, 0.0
    %v4991 = vmax.f32 %v4557, 0.0
    %v4992 = vmax.f32 %v4753, 0.0
    %v4993 = vmax.f32 %v4949, 0.0
    %v4994 = vmax.f32 %v4364, 0.0
    %v4995 = vmax.f32 %v4560, 0.0
    %v4996 = vmax.f32 %v4756, 0.0
    %v4997 = vmax.f32 %v4952, 0.0
    %v4998 = vmax.f32 %v4366, 0.0
    %v4999 = vmax.f32 %v4562, 0.0
    %v5000 = vmax.f32 %v4758, 0.0
    %v5001 = vmax.f32 %v4954, 0.0
    %v5002 = vmax.f32 %v4369, 0.0
    %v5003 = vmax.f32 %v4565, 0.0
    %v5004 = vmax.f32 %v4761, 0.0
    %v5005 = vmax.f32 %v4957, 0.0
    %v5006 = vmax.f32 %v4371, 0.0
    %v5007 = vmax.f32 %v4567, 0.0
    %v5008 = vmax.f32 %v4763, 0.0
    %v5009 = vmax.f32 %v4959, 0.0
    %v5010 = vmax.f32 %v4374, 0.0
    %v5011 = vmax.f32 %v4570, 0.0
    %v5012 = vmax.f32 %v4766, 0.0
    %v5013 = vmax.f32 %v4962, 0.0
    %v5014 = vmax.f32 %v4376, 0.0
    %v5015 = vmax.f32 %v4572, 0.0
    %v5016 = vmax.f32 %v4768, 0.0
    %v5017 = vmax.f32 %v4964, 0.0
    %v5018 = vmax.f32 %v4379, 0.0
    %v5019 = vmax.f32 %v4575, 0.0
    %v5020 = vmax.f32 %v4771, 0.0
    %v5021 = vmax.f32 %v4967, 0.0
    %v5022 = vmax.f32 %v4381, 0.0
    %v5023 = vmax.f32 %v4577, 0.0
    %v5024 = vmax.f32 %v4773, 0.0
    %v5025 = vmax.f32 %v4969, 0.0
    %v5026 = vmax.f32 %v4384, 0.0
    %v5027 = vmax.f32 %v4580, 0.0
    %v5028 = vmax.f32 %v4776, 0.0
    %v5029 = vmax.f32 %v4972, 0.0
    %v5030 = vmax.f32 %v4386, 0.0
    %v5031 = vmax.f32 %v4582, 0.0
    %v5032 = vmax.f32 %v4778, 0.0
    %v5033 = vmax.f32 %v4974, 0.0
    %v5034 = vmax.f32 %v4389, 0.0
    %v5035 = vmax.f32 %v4585, 0.0
    %v5036 = vmax.f32 %v4781, 0.0
    %v5037 = vmax.f32 %v4977, 0.0
    %v5038 = vmax.f32 %v4391, 0.0
    %v5039 = vmax.f32 %v4587, 0.0
    %v5040 = vmax.f32 %v4783, 0.0
    %v5041 = vmax.f32 %v4979, 0.0
    %v5042 = vmax.f32 %v4394, 0.0
    %v5043 = vmax.f32 %v4590, 0.0
    %v5044 = vmax.f32 %v4786, 0.0
    %v5045 = vmax.f32 %v4982, 0.0
    %v5046 = vmax.f32 %v4396, 0.0
    %v5047 = vmax.f32 %v4592, 0.0
    %v5048 = vmax.f32 %v4788, 0.0
    %v5049 = vmax.f32 %v4984, 0.0
    %v5050 = vpack.c.bf16 %v4990, %v4986
    %v5051 = vpack.c.bf16 %v4991, %v4987
    %v5052 = vpack.c.bf16 %v4992, %v4988
    %v5053 = vpack.c.bf16 %v4993, %v4989
    %v5054 = vpack.c.bf16 %v4998, %v4994
    %v5055 = vpack.c.bf16 %v4999, %v4995
    %v5056 = vpack.c.bf16 %v5000, %v4996
    %v5057 = vpack.c.bf16 %v5001, %v4997
    %v5058 = vpack.c.bf16 %v5006, %v5002
    %v5059 = vpack.c.bf16 %v5007, %v5003
    %v5060 = vpack.c.bf16 %v5008, %v5004
    %v5061 = vpack.c.bf16 %v5009, %v5005
    %v5062 = vpack.c.bf16 %v5014, %v5010
    %v5063 = vpack.c.bf16 %v5015, %v5011
    %v5064 = vpack.c.bf16 %v5016, %v5012
    %v5065 = vpack.c.bf16 %v5017, %v5013
    %v5066 = vpack.c.bf16 %v5022, %v5018
    %v5067 = vpack.c.bf16 %v5023, %v5019
    %v5068 = vpack.c.bf16 %v5024, %v5020
    %v5069 = vpack.c.bf16 %v5025, %v5021
    %v5070 = vpack.c.bf16 %v5030, %v5026
    %v5071 = vpack.c.bf16 %v5031, %v5027
    %v5072 = vpack.c.bf16 %v5032, %v5028
    %v5073 = vpack.c.bf16 %v5033, %v5029
    %v5074 = vpack.c.bf16 %v5038, %v5034
    %v5075 = vpack.c.bf16 %v5039, %v5035
    %v5076 = vpack.c.bf16 %v5040, %v5036
    %v5077 = vpack.c.bf16 %v5041, %v5037
    %v5078 = vpack.c.bf16 %v5046, %v5042
    %v5079 = vpack.c.bf16 %v5047, %v5043
    %v5080 = vpack.c.bf16 %v5048, %v5044
    %v5081 = vpack.c.bf16 %v5049, %v5045
    %v5082 = vld [vmem:[#allocation6] sm:$0xf]
    %v5083 = vld [vmem:[#allocation6 + $0x4] sm:$0xf]
    %v5084 = vld [vmem:[#allocation6 + $0x8] sm:$0xf]
    %v5085 = vld [vmem:[#allocation6 + $0xc] sm:$0xf]
    %v5086 = vld [vmem:[#allocation6 + $0x10] sm:$0xf]
    %v5087 = vld [vmem:[#allocation6 + $0x14] sm:$0xf]
    %v5088 = vld [vmem:[#allocation6 + $0x18] sm:$0xf]
    %v5089 = vld [vmem:[#allocation6 + $0x1c] sm:$0xf]
    %v5090 = vld [vmem:[#allocation6 + $0x20] sm:$0xf]
    %v5091 = vld [vmem:[#allocation6 + $0x24] sm:$0xf]
    %v5092 = vld [vmem:[#allocation6 + $0x28] sm:$0xf]
    %v5093 = vld [vmem:[#allocation6 + $0x2c] sm:$0xf]
    %v5094 = vld [vmem:[#allocation6 + $0x30] sm:$0xf]
    %v5095 = vld [vmem:[#allocation6 + $0x34] sm:$0xf]
    %v5096 = vld [vmem:[#allocation6 + $0x38] sm:$0xf]
    %v5097 = vld [vmem:[#allocation6 + $0x3c] sm:$0xf]
    %v5098 = vld [vmem:[#allocation6 + $0x40] sm:$0xf]
    %v5099 = vld [vmem:[#allocation6 + $0x44] sm:$0xf]
    %v5100 = vld [vmem:[#allocation6 + $0x48] sm:$0xf]
    %v5101 = vld [vmem:[#allocation6 + $0x4c] sm:$0xf]
    %v5102 = vld [vmem:[#allocation6 + $0x50] sm:$0xf]
    %v5103 = vld [vmem:[#allocation6 + $0x54] sm:$0xf]
    %v5104 = vld [vmem:[#allocation6 + $0x58] sm:$0xf]
    %v5105 = vld [vmem:[#allocation6 + $0x5c] sm:$0xf]
    %v5106 = vld [vmem:[#allocation6 + $0x60] sm:$0xf]
    %v5107 = vld [vmem:[#allocation6 + $0x64] sm:$0xf]
    %v5108 = vld [vmem:[#allocation6 + $0x68] sm:$0xf]
    %v5109 = vld [vmem:[#allocation6 + $0x6c] sm:$0xf]
    %v5110 = vld [vmem:[#allocation6 + $0x70] sm:$0xf]
    %v5111 = vld [vmem:[#allocation6 + $0x74] sm:$0xf]
    %v5112 = vld [vmem:[#allocation6 + $0x78] sm:$0xf]
    %v5113 = vld [vmem:[#allocation6 + $0x7c] sm:$0xf]
    %v5114 = vld [vmem:[#allocation6 + $0x80] sm:$0xf]
    %v5115 = vld [vmem:[#allocation6 + $0x84] sm:$0xf]
    %v5116 = vld [vmem:[#allocation6 + $0x88] sm:$0xf]
    %v5117 = vld [vmem:[#allocation6 + $0x8c] sm:$0xf]
    %v5118 = vld [vmem:[#allocation6 + $0x90] sm:$0xf]
    %v5119 = vld [vmem:[#allocation6 + $0x94] sm:$0xf]
    %v5120 = vld [vmem:[#allocation6 + $0x98] sm:$0xf]
    %v5121 = vld [vmem:[#allocation6 + $0x9c] sm:$0xf]
    %v5122 = vld [vmem:[#allocation6 + $0xa0] sm:$0xf]
    %v5123 = vld [vmem:[#allocation6 + $0xa4] sm:$0xf]
    %v5124 = vld [vmem:[#allocation6 + $0xa8] sm:$0xf]
    %v5125 = vld [vmem:[#allocation6 + $0xac] sm:$0xf]
    %v5126 = vld [vmem:[#allocation6 + $0xb0] sm:$0xf]
    %v5127 = vld [vmem:[#allocation6 + $0xb4] sm:$0xf]
    %v5128 = vld [vmem:[#allocation6 + $0xb8] sm:$0xf]
    %v5129 = vld [vmem:[#allocation6 + $0xbc] sm:$0xf]
    %v5130 = vld [vmem:[#allocation6 + $0xc0] sm:$0xf]
    %v5131 = vld [vmem:[#allocation6 + $0xc4] sm:$0xf]
    %v5132 = vld [vmem:[#allocation6 + $0xc8] sm:$0xf]
    %v5133 = vld [vmem:[#allocation6 + $0xcc] sm:$0xf]
    %v5134 = vld [vmem:[#allocation6 + $0xd0] sm:$0xf]
    %v5135 = vld [vmem:[#allocation6 + $0xd4] sm:$0xf]
    %v5136 = vld [vmem:[#allocation6 + $0xd8] sm:$0xf]
    %v5137 = vld [vmem:[#allocation6 + $0xdc] sm:$0xf]
    %v5138 = vld [vmem:[#allocation6 + $0xe0] sm:$0xf]
    %v5139 = vld [vmem:[#allocation6 + $0xe4] sm:$0xf]
    %v5140 = vld [vmem:[#allocation6 + $0xe8] sm:$0xf]
    %v5141 = vld [vmem:[#allocation6 + $0xec] sm:$0xf]
    %v5142 = vld [vmem:[#allocation6 + $0xf0] sm:$0xf]
    %v5143 = vld [vmem:[#allocation6 + $0xf4] sm:$0xf]
    %v5144 = vld [vmem:[#allocation6 + $0xf8] sm:$0xf]
    %v5145 = vld [vmem:[#allocation6 + $0xfc] sm:$0xf]
    %v5146 = vld [vmem:[%s6] sm:$0x1]
    %v5148 = vperm.slane %v5146, 0
    %v5214 = vunpack.c.l.b16 %v5082
    %v5215 = vunpack.c.l.b16 %v5083
    %v5216 = vunpack.c.l.b16 %v5084
    %v5217 = vunpack.c.l.b16 %v5085
    %v5218 = vunpack.c.l.b16 %v5086
    %v5219 = vunpack.c.l.b16 %v5087
    %v5220 = vunpack.c.l.b16 %v5088
    %v5221 = vunpack.c.l.b16 %v5089
    %v5222 = vunpack.c.l.b16 %v5090
    %v5223 = vunpack.c.l.b16 %v5091
    %v5224 = vunpack.c.l.b16 %v5092
    %v5225 = vunpack.c.l.b16 %v5093
    %v5226 = vunpack.c.l.b16 %v5094
    %v5227 = vunpack.c.l.b16 %v5095
    %v5228 = vunpack.c.l.b16 %v5096
    %v5229 = vunpack.c.l.b16 %v5097
    %v5230 = vunpack.c.l.b16 %v5098
    %v5231 = vunpack.c.l.b16 %v5099
    %v5232 = vunpack.c.l.b16 %v5100
    %v5233 = vunpack.c.l.b16 %v5101
    %v5234 = vunpack.c.l.b16 %v5102
    %v5235 = vunpack.c.l.b16 %v5103
    %v5236 = vunpack.c.l.b16 %v5104
    %v5237 = vunpack.c.l.b16 %v5105
    %v5238 = vunpack.c.l.b16 %v5106
    %v5239 = vunpack.c.l.b16 %v5107
    %v5240 = vunpack.c.l.b16 %v5108
    %v5241 = vunpack.c.l.b16 %v5109
    %v5242 = vunpack.c.l.b16 %v5110
    %v5243 = vunpack.c.l.b16 %v5111
    %v5244 = vunpack.c.l.b16 %v5112
    %v5245 = vunpack.c.l.b16 %v5113
    %v5246 = vunpack.c.l.b16 %v5114
    %v5247 = vunpack.c.l.b16 %v5115
    %v5248 = vunpack.c.l.b16 %v5116
    %v5249 = vunpack.c.l.b16 %v5117
    %v5250 = vunpack.c.l.b16 %v5118
    %v5251 = vunpack.c.l.b16 %v5119
    %v5252 = vunpack.c.l.b16 %v5120
    %v5253 = vunpack.c.l.b16 %v5121
    %v5254 = vunpack.c.l.b16 %v5122
    %v5255 = vunpack.c.l.b16 %v5123
    %v5256 = vunpack.c.l.b16 %v5124
    %v5257 = vunpack.c.l.b16 %v5125
    %v5258 = vunpack.c.l.b16 %v5126
    %v5259 = vunpack.c.l.b16 %v5127
    %v5260 = vunpack.c.l.b16 %v5128
    %v5261 = vunpack.c.l.b16 %v5129
    %v5262 = vunpack.c.l.b16 %v5130
    %v5263 = vunpack.c.l.b16 %v5131
    %v5264 = vunpack.c.l.b16 %v5132
    %v5265 = vunpack.c.l.b16 %v5133
    %v5266 = vunpack.c.l.b16 %v5134
    %v5267 = vunpack.c.l.b16 %v5135
    %v5268 = vunpack.c.l.b16 %v5136
    %v5269 = vunpack.c.l.b16 %v5137
    %v5270 = vunpack.c.l.b16 %v5138
    %v5271 = vunpack.c.l.b16 %v5139
    %v5272 = vunpack.c.l.b16 %v5140
    %v5273 = vunpack.c.l.b16 %v5141
    %v5274 = vunpack.c.l.b16 %v5142
    %v5275 = vunpack.c.l.b16 %v5143
    %v5276 = vunpack.c.l.b16 %v5144
    %v5277 = vunpack.c.l.b16 %v5145
    %v5278 = vpack.c.b16 %v5215, %v5214
    %v5279 = vpack.c.b16 %v5217, %v5216
    %v5280 = vpack.c.b16 %v5219, %v5218
    %v5281 = vpack.c.b16 %v5221, %v5220
    %v5282 = vpack.c.b16 %v5223, %v5222
    %v5283 = vpack.c.b16 %v5225, %v5224
    %v5284 = vpack.c.b16 %v5227, %v5226
    %v5285 = vpack.c.b16 %v5229, %v5228
    %v5286 = vpack.c.b16 %v5231, %v5230
    %v5287 = vpack.c.b16 %v5233, %v5232
    %v5288 = vpack.c.b16 %v5235, %v5234
    %v5289 = vpack.c.b16 %v5237, %v5236
    %v5290 = vpack.c.b16 %v5239, %v5238
    %v5291 = vpack.c.b16 %v5241, %v5240
    %v5292 = vpack.c.b16 %v5243, %v5242
    %v5293 = vpack.c.b16 %v5245, %v5244
    %v5294 = vpack.c.b16 %v5247, %v5246
    %v5295 = vpack.c.b16 %v5249, %v5248
    %v5296 = vpack.c.b16 %v5251, %v5250
    %v5297 = vpack.c.b16 %v5253, %v5252
    %v5298 = vpack.c.b16 %v5255, %v5254
    %v5299 = vpack.c.b16 %v5257, %v5256
    %v5300 = vpack.c.b16 %v5259, %v5258
    %v5301 = vpack.c.b16 %v5261, %v5260
    %v5302 = vpack.c.b16 %v5263, %v5262
    %v5303 = vpack.c.b16 %v5265, %v5264
    %v5304 = vpack.c.b16 %v5267, %v5266
    %v5305 = vpack.c.b16 %v5269, %v5268
    %v5306 = vpack.c.b16 %v5271, %v5270
    %v5307 = vpack.c.b16 %v5273, %v5272
    %v5308 = vpack.c.b16 %v5275, %v5274
    %v5309 = vpack.c.b16 %v5277, %v5276
    %5342 = vmatpush.bf16.msra.mxu0 %v5285
    %5343 = vmatpush.bf16.msra.mxu0 %v5284
    %5344 = vmatpush.bf16.msra.mxu0 %v5283
    %5345 = vmatpush.bf16.msra.mxu0 %v5282
    %5346 = vmatpush.bf16.msra.mxu0 %v5281
    %5347 = vmatpush.bf16.msra.mxu0 %v5280
    %5348 = vmatpush.bf16.msra.mxu0 %v5279
    %5349 = vmatpush.bf16.msra.mxu0 %v5278
    %5350 = vmatmul.bf16.gmra.mxu0 %v5050
    %v5351 = vpop.f32.mrf.mxu0
    %v5352 = vadd.f32 %v5148, %v5351
    %v5353 = vpop.f32.mrf.mxu0
    %v5354 = vadd.f32 %v5148, %v5353
    %5355 = vmatmul.bf16.gmra.mxu0 %v5054
    %v5356 = vpop.f32.mrf.mxu0
    %v5357 = vadd.f32 %v5148, %v5356
    %v5358 = vpop.f32.mrf.mxu0
    %v5359 = vadd.f32 %v5148, %v5358
    %5360 = vmatmul.bf16.gmra.mxu0 %v5058
    %v5361 = vpop.f32.mrf.mxu0
    %v5362 = vadd.f32 %v5148, %v5361
    %v5363 = vpop.f32.mrf.mxu0
    %v5364 = vadd.f32 %v5148, %v5363
    %5365 = vmatmul.bf16.gmra.mxu0 %v5062
    %v5366 = vpop.f32.mrf.mxu0
    %v5367 = vadd.f32 %v5148, %v5366
    %v5368 = vpop.f32.mrf.mxu0
    %v5369 = vadd.f32 %v5148, %v5368
    %5370 = vmatmul.bf16.gmra.mxu0 %v5066
    %v5371 = vpop.f32.mrf.mxu0
    %v5372 = vadd.f32 %v5148, %v5371
    %v5373 = vpop.f32.mrf.mxu0
    %v5374 = vadd.f32 %v5148, %v5373
    %5375 = vmatmul.bf16.gmra.mxu0 %v5070
    %v5376 = vpop.f32.mrf.mxu0
    %v5377 = vadd.f32 %v5148, %v5376
    %v5378 = vpop.f32.mrf.mxu0
    %v5379 = vadd.f32 %v5148, %v5378
    %5380 = vmatmul.bf16.gmra.mxu0 %v5074
    %v5381 = vpop.f32.mrf.mxu0
    %v5382 = vadd.f32 %v5148, %v5381
    %v5383 = vpop.f32.mrf.mxu0
    %v5384 = vadd.f32 %v5148, %v5383
    %5385 = vmatmul.bf16.gmra.mxu0 %v5078
    %v5386 = vpop.f32.mrf.mxu0
    %v5387 = vadd.f32 %v5148, %v5386
    %v5388 = vpop.f32.mrf.mxu0
    %v5389 = vadd.f32 %v5148, %v5388
    %5390 = vdwg.mxu0
    %5391 = vmatpush.bf16.msra.mxu0 %v5293
    %5392 = vmatpush.bf16.msra.mxu0 %v5292
    %5393 = vmatpush.bf16.msra.mxu0 %v5291
    %5394 = vmatpush.bf16.msra.mxu0 %v5290
    %5395 = vmatpush.bf16.msra.mxu0 %v5289
    %5396 = vmatpush.bf16.msra.mxu0 %v5288
    %5397 = vmatpush.bf16.msra.mxu0 %v5287
    %5398 = vmatpush.bf16.msra.mxu0 %v5286
    %5399 = vmatmul.bf16.gmra.mxu0 %v5051
    %v5400 = vpop.f32.mrf.mxu0
    %v5401 = vadd.f32 %v5352, %v5400
    %v5402 = vpop.f32.mrf.mxu0
    %v5403 = vadd.f32 %v5354, %v5402
    %5404 = vmatmul.bf16.gmra.mxu0 %v5055
    %v5405 = vpop.f32.mrf.mxu0
    %v5406 = vadd.f32 %v5357, %v5405
    %v5407 = vpop.f32.mrf.mxu0
    %v5408 = vadd.f32 %v5359, %v5407
    %5409 = vmatmul.bf16.gmra.mxu0 %v5059
    %v5410 = vpop.f32.mrf.mxu0
    %v5411 = vadd.f32 %v5362, %v5410
    %v5412 = vpop.f32.mrf.mxu0
    %v5413 = vadd.f32 %v5364, %v5412
    %5414 = vmatmul.bf16.gmra.mxu0 %v5063
    %v5415 = vpop.f32.mrf.mxu0
    %v5416 = vadd.f32 %v5367, %v5415
    %v5417 = vpop.f32.mrf.mxu0
    %v5418 = vadd.f32 %v5369, %v5417
    %5419 = vmatmul.bf16.gmra.mxu0 %v5067
    %v5420 = vpop.f32.mrf.mxu0
    %v5421 = vadd.f32 %v5372, %v5420
    %v5422 = vpop.f32.mrf.mxu0
    %v5423 = vadd.f32 %v5374, %v5422
    %5424 = vmatmul.bf16.gmra.mxu0 %v5071
    %v5425 = vpop.f32.mrf.mxu0
    %v5426 = vadd.f32 %v5377, %v5425
    %v5427 = vpop.f32.mrf.mxu0
    %v5428 = vadd.f32 %v5379, %v5427
    %5429 = vmatmul.bf16.gmra.mxu0 %v5075
    %v5430 = vpop.f32.mrf.mxu0
    %v5431 = vadd.f32 %v5382, %v5430
    %v5432 = vpop.f32.mrf.mxu0
    %v5433 = vadd.f32 %v5384, %v5432
    %5434 = vmatmul.bf16.gmra.mxu0 %v5079
    %v5435 = vpop.f32.mrf.mxu0
    %v5436 = vadd.f32 %v5387, %v5435
    %v5437 = vpop.f32.mrf.mxu0
    %v5438 = vadd.f32 %v5389, %v5437
    %5439 = vdwg.mxu0
    %5440 = vmatpush.bf16.msra.mxu0 %v5301
    %5441 = vmatpush.bf16.msra.mxu0 %v5300
    %5442 = vmatpush.bf16.msra.mxu0 %v5299
    %5443 = vmatpush.bf16.msra.mxu0 %v5298
    %5444 = vmatpush.bf16.msra.mxu0 %v5297
    %5445 = vmatpush.bf16.msra.mxu0 %v5296
    %5446 = vmatpush.bf16.msra.mxu0 %v5295
    %5447 = vmatpush.bf16.msra.mxu0 %v5294
    %5448 = vmatmul.bf16.gmra.mxu0 %v5052
    %v5449 = vpop.f32.mrf.mxu0
    %v5450 = vadd.f32 %v5401, %v5449
    %v5451 = vpop.f32.mrf.mxu0
    %v5452 = vadd.f32 %v5403, %v5451
    %5453 = vmatmul.bf16.gmra.mxu0 %v5056
    %v5454 = vpop.f32.mrf.mxu0
    %v5455 = vadd.f32 %v5406, %v5454
    %v5456 = vpop.f32.mrf.mxu0
    %v5457 = vadd.f32 %v5408, %v5456
    %5458 = vmatmul.bf16.gmra.mxu0 %v5060
    %v5459 = vpop.f32.mrf.mxu0
    %v5460 = vadd.f32 %v5411, %v5459
    %v5461 = vpop.f32.mrf.mxu0
    %v5462 = vadd.f32 %v5413, %v5461
    %5463 = vmatmul.bf16.gmra.mxu0 %v5064
    %v5464 = vpop.f32.mrf.mxu0
    %v5465 = vadd.f32 %v5416, %v5464
    %v5466 = vpop.f32.mrf.mxu0
    %v5467 = vadd.f32 %v5418, %v5466
    %5468 = vmatmul.bf16.gmra.mxu0 %v5068
    %v5469 = vpop.f32.mrf.mxu0
    %v5470 = vadd.f32 %v5421, %v5469
    %v5471 = vpop.f32.mrf.mxu0
    %v5472 = vadd.f32 %v5423, %v5471
    %5473 = vmatmul.bf16.gmra.mxu0 %v5072
    %v5474 = vpop.f32.mrf.mxu0
    %v5475 = vadd.f32 %v5426, %v5474
    %v5476 = vpop.f32.mrf.mxu0
    %v5477 = vadd.f32 %v5428, %v5476
    %5478 = vmatmul.bf16.gmra.mxu0 %v5076
    %v5479 = vpop.f32.mrf.mxu0
    %v5480 = vadd.f32 %v5431, %v5479
    %v5481 = vpop.f32.mrf.mxu0
    %v5482 = vadd.f32 %v5433, %v5481
    %5483 = vmatmul.bf16.gmra.mxu0 %v5080
    %v5484 = vpop.f32.mrf.mxu0
    %v5485 = vadd.f32 %v5436, %v5484
    %v5486 = vpop.f32.mrf.mxu0
    %v5487 = vadd.f32 %v5438, %v5486
    %5488 = vdwg.mxu0
    %5489 = vmatpush.bf16.msra.mxu0 %v5309
    %5490 = vmatpush.bf16.msra.mxu0 %v5308
    %5491 = vmatpush.bf16.msra.mxu0 %v5307
    %5492 = vmatpush.bf16.msra.mxu0 %v5306
    %5493 = vmatpush.bf16.msra.mxu0 %v5305
    %5494 = vmatpush.bf16.msra.mxu0 %v5304
    %5495 = vmatpush.bf16.msra.mxu0 %v5303
    %5496 = vmatpush.bf16.msra.mxu0 %v5302
    %5497 = vmatmul.bf16.gmra.mxu0 %v5053
    %v5498 = vpop.f32.mrf.mxu0
    %v5499 = vadd.f32 %v5450, %v5498
    %v5500 = vpop.f32.mrf.mxu0
    %v5501 = vadd.f32 %v5452, %v5500
    %5502 = vmatmul.bf16.gmra.mxu0 %v5057
    %v5503 = vpop.f32.mrf.mxu0
    %v5504 = vadd.f32 %v5455, %v5503
    %v5505 = vpop.f32.mrf.mxu0
    %v5506 = vadd.f32 %v5457, %v5505
    %5507 = vmatmul.bf16.gmra.mxu0 %v5061
    %v5508 = vpop.f32.mrf.mxu0
    %v5509 = vadd.f32 %v5460, %v5508
    %v5510 = vpop.f32.mrf.mxu0
    %v5511 = vadd.f32 %v5462, %v5510
    %5512 = vmatmul.bf16.gmra.mxu0 %v5065
    %v5513 = vpop.f32.mrf.mxu0
    %v5514 = vadd.f32 %v5465, %v5513
    %v5515 = vpop.f32.mrf.mxu0
    %v5516 = vadd.f32 %v5467, %v5515
    %5517 = vmatmul.bf16.gmra.mxu0 %v5069
    %v5518 = vpop.f32.mrf.mxu0
    %v5519 = vadd.f32 %v5470, %v5518
    %v5520 = vpop.f32.mrf.mxu0
    %v5521 = vadd.f32 %v5472, %v5520
    %5522 = vmatmul.bf16.gmra.mxu0 %v5073
    %v5523 = vpop.f32.mrf.mxu0
    %v5524 = vadd.f32 %v5475, %v5523
    %v5525 = vpop.f32.mrf.mxu0
    %v5526 = vadd.f32 %v5477, %v5525
    %5527 = vmatmul.bf16.gmra.mxu0 %v5077
    %v5528 = vpop.f32.mrf.mxu0
    %v5529 = vadd.f32 %v5480, %v5528
    %v5530 = vpop.f32.mrf.mxu0
    %v5531 = vadd.f32 %v5482, %v5530
    %5532 = vmatmul.bf16.gmra.mxu0 %v5081
    %v5533 = vpop.f32.mrf.mxu0
    %v5534 = vadd.f32 %v5485, %v5533
    %v5535 = vpop.f32.mrf.mxu0
    %v5536 = vadd.f32 %v5487, %v5535
    %5537 = vdwg.mxu0
    %v5538 = vpack.c.bf16 %v5499, %v5499
    %v5539 = vpack.c.bf16 %v5501, %v5501
    %v5540 = vpack.c.bf16 %v5504, %v5504
    %v5541 = vpack.c.bf16 %v5506, %v5506
    %v5542 = vpack.c.bf16 %v5509, %v5509
    %v5543 = vpack.c.bf16 %v5511, %v5511
    %v5544 = vpack.c.bf16 %v5514, %v5514
    %v5545 = vpack.c.bf16 %v5516, %v5516
    %v5546 = vpack.c.bf16 %v5519, %v5519
    %v5547 = vpack.c.bf16 %v5521, %v5521
    %v5548 = vpack.c.bf16 %v5524, %v5524
    %v5549 = vpack.c.bf16 %v5526, %v5526
    %v5550 = vpack.c.bf16 %v5529, %v5529
    %v5551 = vpack.c.bf16 %v5531, %v5531
    %v5552 = vpack.c.bf16 %v5534, %v5534
    %v5553 = vpack.c.bf16 %v5536, %v5536
    %v5570 = vrot.slane %v5538, 3
    %v5571 = vrot.slane %v5539, 3
    %v5572 = vrot.slane %v5540, 3
    %v5573 = vrot.slane %v5541, 3
    %v5574 = vrot.slane %v5542, 3
    %v5575 = vrot.slane %v5543, 3
    %v5576 = vrot.slane %v5544, 3
    %v5577 = vrot.slane %v5545, 3
    %v5578 = vrot.slane %v5546, 3
    %v5579 = vrot.slane %v5547, 3
    %v5580 = vrot.slane %v5548, 3
    %v5581 = vrot.slane %v5549, 3
    %v5582 = vrot.slane %v5550, 3
    %v5583 = vrot.slane %v5551, 3
    %v5584 = vrot.slane %v5552, 3
    %v5585 = vrot.slane %v5553, 3
    %vm5586 = vcmask 1040384
    %v5589 = vsel %vm5586, %v5538, %v5570
    %vm5590 = vcmask 1041409
    %v5591 = vsel %vm5590, %v5538, %v5570
    %v5593 = vrot.slane %v5591, 1
    %vm5594 = vcmask 1042434
    %v5595 = vsel %vm5594, %v5538, %v5570
    %v5597 = vrot.slane %v5595, 2
    %vm5598 = vcmask 1043459
    %v5599 = vsel %vm5598, %v5538, %v5570
    %v5601 = vrot.slane %v5599, 3
    %v5604 = vsel %vm5586, %v5539, %v5571
    %v5605 = vsel %vm5590, %v5539, %v5571
    %v5607 = vrot.slane %v5605, 1
    %v5608 = vsel %vm5594, %v5539, %v5571
    %v5610 = vrot.slane %v5608, 2
    %v5611 = vsel %vm5598, %v5539, %v5571
    %v5613 = vrot.slane %v5611, 3
    %v5616 = vsel %vm5586, %v5540, %v5572
    %v5617 = vsel %vm5590, %v5540, %v5572
    %v5619 = vrot.slane %v5617, 1
    %v5620 = vsel %vm5594, %v5540, %v5572
    %v5622 = vrot.slane %v5620, 2
    %v5623 = vsel %vm5598, %v5540, %v5572
    %v5625 = vrot.slane %v5623, 3
    %v5628 = vsel %vm5586, %v5541, %v5573
    %v5629 = vsel %vm5590, %v5541, %v5573
    %v5631 = vrot.slane %v5629, 1
    %v5632 = vsel %vm5594, %v5541, %v5573
    %v5634 = vrot.slane %v5632, 2
    %v5635 = vsel %vm5598, %v5541, %v5573
    %v5637 = vrot.slane %v5635, 3
    %v5640 = vsel %vm5586, %v5542, %v5574
    %v5641 = vsel %vm5590, %v5542, %v5574
    %v5643 = vrot.slane %v5641, 1
    %v5644 = vsel %vm5594, %v5542, %v5574
    %v5646 = vrot.slane %v5644, 2
    %v5647 = vsel %vm5598, %v5542, %v5574
    %v5649 = vrot.slane %v5647, 3
    %v5652 = vsel %vm5586, %v5543, %v5575
    %v5653 = vsel %vm5590, %v5543, %v5575
    %v5655 = vrot.slane %v5653, 1
    %v5656 = vsel %vm5594, %v5543, %v5575
    %v5658 = vrot.slane %v5656, 2
    %v5659 = vsel %vm5598, %v5543, %v5575
    %v5661 = vrot.slane %v5659, 3
    %v5664 = vsel %vm5586, %v5544, %v5576
    %v5665 = vsel %vm5590, %v5544, %v5576
    %v5667 = vrot.slane %v5665, 1
    %v5668 = vsel %vm5594, %v5544, %v5576
    %v5670 = vrot.slane %v5668, 2
    %v5671 = vsel %vm5598, %v5544, %v5576
    %v5673 = vrot.slane %v5671, 3
    %v5676 = vsel %vm5586, %v5545, %v5577
    %v5677 = vsel %vm5590, %v5545, %v5577
    %v5679 = vrot.slane %v5677, 1
    %v5680 = vsel %vm5594, %v5545, %v5577
    %v5682 = vrot.slane %v5680, 2
    %v5683 = vsel %vm5598, %v5545, %v5577
    %v5685 = vrot.slane %v5683, 3
    %v5688 = vsel %vm5586, %v5546, %v5578
    %v5689 = vsel %vm5590, %v5546, %v5578
    %v5691 = vrot.slane %v5689, 1
    %v5692 = vsel %vm5594, %v5546, %v5578
    %v5694 = vrot.slane %v5692, 2
    %v5695 = vsel %vm5598, %v5546, %v5578
    %v5697 = vrot.slane %v5695, 3
    %v5700 = vsel %vm5586, %v5547, %v5579
    %v5701 = vsel %vm5590, %v5547, %v5579
    %v5703 = vrot.slane %v5701, 1
    %v5704 = vsel %vm5594, %v5547, %v5579
    %v5706 = vrot.slane %v5704, 2
    %v5707 = vsel %vm5598, %v5547, %v5579
    %v5709 = vrot.slane %v5707, 3
    %v5712 = vsel %vm5586, %v5548, %v5580
    %v5713 = vsel %vm5590, %v5548, %v5580
    %v5715 = vrot.slane %v5713, 1
    %v5716 = vsel %vm5594, %v5548, %v5580
    %v5718 = vrot.slane %v5716, 2
    %v5719 = vsel %vm5598, %v5548, %v5580
    %v5721 = vrot.slane %v5719, 3
    %v5724 = vsel %vm5586, %v5549, %v5581
    %v5725 = vsel %vm5590, %v5549, %v5581
    %v5727 = vrot.slane %v5725, 1
    %v5728 = vsel %vm5594, %v5549, %v5581
    %v5730 = vrot.slane %v5728, 2
    %v5731 = vsel %vm5598, %v5549, %v5581
    %v5733 = vrot.slane %v5731, 3
    %v5736 = vsel %vm5586, %v5550, %v5582
    %v5737 = vsel %vm5590, %v5550, %v5582
    %v5739 = vrot.slane %v5737, 1
    %v5740 = vsel %vm5594, %v5550, %v5582
    %v5742 = vrot.slane %v5740, 2
    %v5743 = vsel %vm5598, %v5550, %v5582
    %v5745 = vrot.slane %v5743, 3
    %v5748 = vsel %vm5586, %v5551, %v5583
    %v5749 = vsel %vm5590, %v5551, %v5583
    %v5751 = vrot.slane %v5749, 1
    %v5752 = vsel %vm5594, %v5551, %v5583
    %v5754 = vrot.slane %v5752, 2
    %v5755 = vsel %vm5598, %v5551, %v5583
    %v5757 = vrot.slane %v5755, 3
    %v5760 = vsel %vm5586, %v5552, %v5584
    %v5761 = vsel %vm5590, %v5552, %v5584
    %v5763 = vrot.slane %v5761, 1
    %v5764 = vsel %vm5594, %v5552, %v5584
    %v5766 = vrot.slane %v5764, 2
    %v5767 = vsel %vm5598, %v5552, %v5584
    %v5769 = vrot.slane %v5767, 3
    %v5772 = vsel %vm5586, %v5553, %v5585
    %v5773 = vsel %vm5590, %v5553, %v5585
    %v5775 = vrot.slane %v5773, 1
    %v5776 = vsel %vm5594, %v5553, %v5585
    %v5778 = vrot.slane %v5776, 2
    %v5779 = vsel %vm5598, %v5553, %v5585
    %v5781 = vrot.slane %v5779, 3
    %5846 = vst [vmem:[#allocation7] sm:$0x1] %v5589
    %5847 = vst [vmem:[#allocation7 + $0x1] sm:$0x1] %v5593
    %5848 = vst [vmem:[#allocation7 + $0x2] sm:$0x1] %v5597
    %5849 = vst [vmem:[#allocation7 + $0x3] sm:$0x1] %v5601
    %5850 = vst [vmem:[#allocation7 + $0x4] sm:$0x1] %v5604
    %5851 = vst [vmem:[#allocation7 + $0x5] sm:$0x1] %v5607
    %5852 = vst [vmem:[#allocation7 + $0x6] sm:$0x1] %v5610
    %5853 = vst [vmem:[#allocation7 + $0x7] sm:$0x1] %v5613
    %5854 = vst [vmem:[#allocation7 + $0x8] sm:$0x1] %v5616
    %5855 = vst [vmem:[#allocation7 + $0x9] sm:$0x1] %v5619
    %5856 = vst [vmem:[#allocation7 + $0xa] sm:$0x1] %v5622
    %5857 = vst [vmem:[#allocation7 + $0xb] sm:$0x1] %v5625
    %5858 = vst [vmem:[#allocation7 + $0xc] sm:$0x1] %v5628
    %5859 = vst [vmem:[#allocation7 + $0xd] sm:$0x1] %v5631
    %5860 = vst [vmem:[#allocation7 + $0xe] sm:$0x1] %v5634
    %5861 = vst [vmem:[#allocation7 + $0xf] sm:$0x1] %v5637
    %5862 = vst [vmem:[#allocation7 + $0x10] sm:$0x1] %v5640
    %5863 = vst [vmem:[#allocation7 + $0x11] sm:$0x1] %v5643
    %5864 = vst [vmem:[#allocation7 + $0x12] sm:$0x1] %v5646
    %5865 = vst [vmem:[#allocation7 + $0x13] sm:$0x1] %v5649
    %5866 = vst [vmem:[#allocation7 + $0x14] sm:$0x1] %v5652
    %5867 = vst [vmem:[#allocation7 + $0x15] sm:$0x1] %v5655
    %5868 = vst [vmem:[#allocation7 + $0x16] sm:$0x1] %v5658
    %5869 = vst [vmem:[#allocation7 + $0x17] sm:$0x1] %v5661
    %5870 = vst [vmem:[#allocation7 + $0x18] sm:$0x1] %v5664
    %5871 = vst [vmem:[#allocation7 + $0x19] sm:$0x1] %v5667
    %5872 = vst [vmem:[#allocation7 + $0x1a] sm:$0x1] %v5670
    %5873 = vst [vmem:[#allocation7 + $0x1b] sm:$0x1] %v5673
    %5874 = vst [vmem:[#allocation7 + $0x1c] sm:$0x1] %v5676
    %5875 = vst [vmem:[#allocation7 + $0x1d] sm:$0x1] %v5679
    %5876 = vst [vmem:[#allocation7 + $0x1e] sm:$0x1] %v5682
    %5877 = vst [vmem:[#allocation7 + $0x1f] sm:$0x1] %v5685
    %5878 = vst [vmem:[#allocation7 + $0x20] sm:$0x1] %v5688
    %5879 = vst [vmem:[#allocation7 + $0x21] sm:$0x1] %v5691
    %5880 = vst [vmem:[#allocation7 + $0x22] sm:$0x1] %v5694
    %5881 = vst [vmem:[#allocation7 + $0x23] sm:$0x1] %v5697
    %5882 = vst [vmem:[#allocation7 + $0x24] sm:$0x1] %v5700
    %5883 = vst [vmem:[#allocation7 + $0x25] sm:$0x1] %v5703
    %5884 = vst [vmem:[#allocation7 + $0x26] sm:$0x1] %v5706
    %5885 = vst [vmem:[#allocation7 + $0x27] sm:$0x1] %v5709
    %5886 = vst [vmem:[#allocation7 + $0x28] sm:$0x1] %v5712
    %5887 = vst [vmem:[#allocation7 + $0x29] sm:$0x1] %v5715
    %5888 = vst [vmem:[#allocation7 + $0x2a] sm:$0x1] %v5718
    %5889 = vst [vmem:[#allocation7 + $0x2b] sm:$0x1] %v5721
    %5890 = vst [vmem:[#allocation7 + $0x2c] sm:$0x1] %v5724
    %5891 = vst [vmem:[#allocation7 + $0x2d] sm:$0x1] %v5727
    %5892 = vst [vmem:[#allocation7 + $0x2e] sm:$0x1] %v5730
    %5893 = vst [vmem:[#allocation7 + $0x2f] sm:$0x1] %v5733
    %5894 = vst [vmem:[#allocation7 + $0x30] sm:$0x1] %v5736
    %5895 = vst [vmem:[#allocation7 + $0x31] sm:$0x1] %v5739
    %5896 = vst [vmem:[#allocation7 + $0x32] sm:$0x1] %v5742
    %5897 = vst [vmem:[#allocation7 + $0x33] sm:$0x1] %v5745
    %5898 = vst [vmem:[#allocation7 + $0x34] sm:$0x1] %v5748
    %5899 = vst [vmem:[#allocation7 + $0x35] sm:$0x1] %v5751
    %5900 = vst [vmem:[#allocation7 + $0x36] sm:$0x1] %v5754
    %5901 = vst [vmem:[#allocation7 + $0x37] sm:$0x1] %v5757
    %5902 = vst [vmem:[#allocation7 + $0x38] sm:$0x1] %v5760
    %5903 = vst [vmem:[#allocation7 + $0x39] sm:$0x1] %v5763
    %5904 = vst [vmem:[#allocation7 + $0x3a] sm:$0x1] %v5766
    %5905 = vst [vmem:[#allocation7 + $0x3b] sm:$0x1] %v5769
    %5906 = vst [vmem:[#allocation7 + $0x3c] sm:$0x1] %v5772
    %5907 = vst [vmem:[#allocation7 + $0x3d] sm:$0x1] %v5775
    %5908 = vst [vmem:[#allocation7 + $0x3e] sm:$0x1] %v5778
    %5909 = vst [vmem:[#allocation7 + $0x3f] sm:$0x1] %v5781
    // Predicated region
    $region42: #{mlp_forward.1} parent=1 // pred_check
      _
    $region43: #{mlp_forward.1} parent=1 // pred_check_branch
      %5911 = sbr.rel (0) target = $region45
    $region44: #{mlp_forward.1} parent=1 // pred_region
      // Predicated region
      $region46: #{mlp_forward.1} parent=44 // pred_check
        _
      $region47: #{mlp_forward.1} parent=44 // pred_check_branch
        %5913 = sbr.rel (0) target = $region49
      $region48: #{mlp_forward.1} parent=44 // pred_region
        // Predicated region
        $region50: #{mlp_forward.1} parent=48 // pred_check
          _
        $region51: #{mlp_forward.1} parent=48 // pred_check_branch
          %5915 = sbr.rel target = $region53
        $region52: #{mlp_forward.1} parent=48 // pred_region
          // Predicated region
          $region65: #{mlp_forward.1} parent=52 // pred_check
            _
          $region66: #{mlp_forward.1} parent=52 // pred_check_branch
            %5931 = sbr.rel (0) target = $region68
          $region67: #{mlp_forward.1} parent=52 // pred_region
            %s5933 = ssub.s32 2, 1
            loop: start=0, step=1, limit=1
            $region69: #{mlp_forward.1} parent=67 // loop_pre_header
              _
            $region70: #{mlp_forward.1} parent=67 // loop_header
              %s5935 = sphi 0, %s5939
              %p5936 = scmp.ge.s32.totalorder %s5935, 1
              %s5940 = sphi [#allocation7], [#allocation7]
              %s5941 = sphi %s7, %s7
            $region71: #{mlp_forward.1} parent=67 // loop_header_branch
              %5938 = sbr.rel (%p5936) target = $region75
            $region72: #{mlp_forward.1} parent=67 // loop_body
              %v5942 = vld [vmem:[%s5940] sm:%s5933]
              %5943 = vst [vmem:[%s5941] sm:%s5933] %v5942
            $region73: #{mlp_forward.1} parent=67 // loop_footer
              %s5939 = sadd.s32 1, %s5935
            $region74: #{mlp_forward.1} parent=67 // loop_footer_branch
              %5934 = sbr.rel target = $region70
            $region75: #{mlp_forward.1} parent=67 // loop_exit
              _
          $region68: #{mlp_forward.1} parent=52 // pred_fallthru
            _
        $region53: #{mlp_forward.1} parent=48 // pred_fallthru
          _
        // Predicated region
        $region54: #{mlp_forward.1} parent=48 // pred_check
          _
        $region55: #{mlp_forward.1} parent=48 // pred_check_branch
          %5917 = sbr.rel (0) target = $region57
        $region56: #{mlp_forward.1} parent=48 // pred_region
          %s5919 = ssub.s32 2, 1
          loop: start=0, step=1, limit=1
          $region58: #{mlp_forward.1} parent=56 // loop_pre_header
            _
          $region59: #{mlp_forward.1} parent=56 // loop_header
            %s5921 = sphi 0, %s5925
            %p5922 = scmp.ge.s32.totalorder %s5921, 1
            %s5926 = sphi [#allocation7], [#allocation7]
            %s5927 = sphi %s7, %s7
          $region60: #{mlp_forward.1} parent=56 // loop_header_branch
            %5924 = sbr.rel (%p5922) target = $region64
          $region61: #{mlp_forward.1} parent=56 // loop_body
            %v5928 = vld [vmem:[%s5926] sm:%s5919]
            %5929 = vst [vmem:[%s5927] sm:%s5919] %v5928
          $region62: #{mlp_forward.1} parent=56 // loop_footer
            %s5925 = sadd.s32 1, %s5921
          $region63: #{mlp_forward.1} parent=56 // loop_footer_branch
            %5920 = sbr.rel target = $region59
          $region64: #{mlp_forward.1} parent=56 // loop_exit
            _
        $region57: #{mlp_forward.1} parent=48 // pred_fallthru
          _
      $region49: #{mlp_forward.1} parent=44 // pred_fallthru
        _
      %5944 = vnop
    $region45: #{mlp_forward.1} parent=1 // pred_fallthru
      _
    // Predicated region
    $region76: #{mlp_forward.1} parent=1 // pred_check
      _
    $region77: #{mlp_forward.1} parent=1 // pred_check_branch
      %5946 = sbr.rel (0) target = $region79
    $region78: #{mlp_forward.1} parent=1 // pred_region
      _
    $region79: #{mlp_forward.1} parent=1 // pred_fallthru
      _
    %5947 = vsyncpa [#allocation3], 1
    %5948 = vsyncpa [#allocation5], 1

</llo_original>
